<compile_context>
chip_gen: v5e
topology: v5e:2x2
jax: 0.10.0
libtpu: 0.0.40
codegen_flags: <defaults>
</compile_context>

<pallas_src>
import jax
import jax.numpy as jnp
from jax.experimental import pallas as pl
from jax.experimental.pallas import tpu as pltpu


def _discrim_kernel(x_ref, w1_ref, b1_ref, w2_ref, b2_ref,
                    w3_ref, b3_ref, w4_ref, b4_ref, out_ref):
    def leaky_relu(v):
        return jnp.where(v > 0, v, 0.2 * v)

    # bf16 operands on the MXU, f32 accumulation.
    x = x_ref[...].astype(jnp.bfloat16)

    h = jnp.dot(x, w1_ref[...], preferred_element_type=jnp.float32) + b1_ref[...]
    h = leaky_relu(h).astype(jnp.bfloat16)

    h = jnp.dot(h, w2_ref[...], preferred_element_type=jnp.float32) + b2_ref[...]
    h = leaky_relu(h).astype(jnp.bfloat16)

    h = jnp.dot(h, w3_ref[...], preferred_element_type=jnp.float32) + b3_ref[...]
    h = leaky_relu(h)                                    # (TB, 2048) f32

    # Final Linear(2048, 1): VPU multiply + XLU lane reduction (no padded matmul).
    w4 = w4_ref[...].astype(jnp.float32)                 # (1, 2048)
    z = jnp.sum(h * w4, axis=-1, keepdims=True) + b4_ref[...]
    out_ref[...] = jax.nn.sigmoid(z).astype(out_ref.dtype)


def init_params(key, hsize, resolution):
    """Deterministic init mimicking torch.nn.Linear (uniform +-1/sqrt(fan_in)).

    Weights are stored in bf16 (kernel accumulates in f32); biases stay f32.
    W4 is stored as a (1, 2048) row vector for the in-kernel multiply+reduce.
    """
    d_in = hsize * resolution
    dims = [(d_in, 512), (512, 512), (512, 2048), (2048, 1)]
    params = {}
    for idx, (fi, fo) in enumerate(dims, start=1):
        key, kw, kb = jax.random.split(key, 3)
        bound = 1.0 / jnp.sqrt(jnp.float32(fi))
        w = jax.random.uniform(kw, (fi, fo), jnp.float32, minval=-bound, maxval=bound)
        b = jax.random.uniform(kb, (1, fo), jnp.float32, minval=-bound, maxval=bound)
        if idx == 4:
            w = w.T                                   # (1, 2048)
        params[f"w{idx}"] = w.astype(jnp.bfloat16)    # weights shipped in bf16
        params[f"b{idx}"] = b                         # biases are tiny, keep f32
    return params


@jax.jit
def discrim_net_forward(x, params):
    B = x.shape[0]
    d_in = params["w1"].shape[0]
    x2d = x.reshape(B, -1).astype(jnp.float32)        # torch .view(x.shape[0], -1)

    # Batch tile: multiple of 8 rows (sublane aligned), up to 256 per tile.
    TB = 256 if B >= 256 else ((B + 7) // 8) * 8
    padded_b = ((B + TB - 1) // TB) * TB
    if padded_b != B:
        x2d = jnp.pad(x2d, ((0, padded_b - B), (0, 0)))
    grid = (padded_b // TB,)

    row = lambda i: (i, 0)
    const = lambda i: (0, 0)

    in_specs = [
        pl.BlockSpec((TB, d_in), row),
        pl.BlockSpec(params["w1"].shape, const), pl.BlockSpec(params["b1"].shape, const),
        pl.BlockSpec(params["w2"].shape, const), pl.BlockSpec(params["b2"].shape, const),
        pl.BlockSpec(params["w3"].shape, const), pl.BlockSpec(params["b3"].shape, const),
        pl.BlockSpec(params["w4"].shape, const), pl.BlockSpec(params["b4"].shape, const),
    ]

    flops = 2 * B * (d_in * 512 + 512 * 512 + 512 * 2048 + 2048)
    bytes_accessed = (
        int(x2d.size) * 4
        + sum(int(v.size) * v.dtype.itemsize for v in params.values())
        + padded_b * 4)
    cost = pl.CostEstimate(flops=flops, transcendentals=B,
                           bytes_accessed=bytes_accessed)

    out = pl.pallas_call(
        _discrim_kernel,
        out_shape=jax.ShapeDtypeStruct((padded_b, 1), jnp.float32),
        grid=grid,
        in_specs=in_specs,
        out_specs=pl.BlockSpec((TB, 1), row),
        compiler_params=pltpu.CompilerParams(
            dimension_semantics=("parallel",),
            vmem_limit_bytes=32 << 20),
        cost_estimate=cost,
    )(x2d, params["w1"], params["b1"], params["w2"], params["b2"],
      params["w3"], params["b3"], params["w4"], params["b4"])

    return out[:B]                                    # final shape (B, 1)


def _reference_forward(x, params):
    """Pure-JAX reference mirroring the kernel's bf16/f32 dtype flow."""
    h = x.reshape(x.shape[0], -1).astype(jnp.bfloat16)
    for i in (1, 2, 3):
        h = jnp.dot(h, params[f"w{i}"], preferred_element_type=jnp.float32)
        h = h + params[f"b{i}"]
        h = jnp.where(h > 0, h, 0.2 * h)
        if i < 3:
            h = h.astype(jnp.bfloat16)
    z = jnp.sum(h * params["w4"].astype(jnp.float32), axis=-1, keepdims=True)
    z = z + params["b4"]
    return jax.nn.sigmoid(z)


if __name__ == "__main__":
    key = jax.random.PRNGKey(0)
    hsize, resolution, batch = 32, 16, 8              # D_in = 512

    kx, kp = jax.random.split(key)
    x = jax.random.normal(kx, (batch, hsize, resolution), jnp.float32)
    params = init_params(kp, hsize, resolution)

    out = discrim_net_forward(x, params)
    jax.block_until_ready(out)

    ref = _reference_forward(x, params)
    assert out.shape == (batch, 1), out.shape
    assert jnp.allclose(out, ref, atol=2e-3, rtol=2e-3), "mismatch vs reference"

    print("KERNEL_OK")
</pallas_src>

<mosaic_0001>
module attributes {stable_mosaic.version = 11 : i64} {
  func.func @_discrim_kernel(%arg0: i32, %arg1: memref<8x512xf32, #tpu.memory_space<vmem>>, %arg2: memref<512x512xbf16, #tpu.memory_space<vmem>>, %arg3: memref<1x512xf32, #tpu.memory_space<vmem>>, %arg4: memref<512x512xbf16, #tpu.memory_space<vmem>>, %arg5: memref<1x512xf32, #tpu.memory_space<vmem>>, %arg6: memref<512x2048xbf16, #tpu.memory_space<vmem>>, %arg7: memref<1x2048xf32, #tpu.memory_space<vmem>>, %arg8: memref<1x2048xbf16, #tpu.memory_space<vmem>>, %arg9: memref<1x1xf32, #tpu.memory_space<vmem>>, %arg10: memref<8x1xf32, #tpu.memory_space<vmem>>) attributes {dimension_semantics = [#tpu.dimension_semantics<parallel>], iteration_bounds = array<i64: 1>, scalar_prefetch = 0 : i64, scratch_operands = 0 : i64, tpu.core_type = #tpu.core_type<tc>, window_params = [{transform_indices = @transform_0, window_bounds = array<i64: 8, 512>}, {pipeline_mode = #tpu.pipeline_mode<synchronous>, transform_indices = @transform_1, window_bounds = array<i64: 512, 512>}, {pipeline_mode = #tpu.pipeline_mode<synchronous>, transform_indices = @transform_2, window_bounds = array<i64: 1, 512>}, {pipeline_mode = #tpu.pipeline_mode<synchronous>, transform_indices = @transform_3, window_bounds = array<i64: 512, 512>}, {pipeline_mode = #tpu.pipeline_mode<synchronous>, transform_indices = @transform_4, window_bounds = array<i64: 1, 512>}, {pipeline_mode = #tpu.pipeline_mode<synchronous>, transform_indices = @transform_5, window_bounds = array<i64: 512, 2048>}, {pipeline_mode = #tpu.pipeline_mode<synchronous>, transform_indices = @transform_6, window_bounds = array<i64: 1, 2048>}, {pipeline_mode = #tpu.pipeline_mode<synchronous>, transform_indices = @transform_7, window_bounds = array<i64: 1, 2048>}, {pipeline_mode = #tpu.pipeline_mode<synchronous>, transform_indices = @transform_8, window_bounds = array<i64: 1, 1>}, {transform_indices = @transform_9, window_bounds = array<i64: 8, 1>}]} {
    %c0 = arith.constant 0 : index
    %c0_0 = arith.constant 0 : index
    %0 = vector.load %arg1[%c0, %c0_0] : memref<8x512xf32, #tpu.memory_space<vmem>>, vector<8x512xf32>
    %1 = arith.truncf %0 : vector<8x512xf32> to vector<8x512xbf16>
    %c0_1 = arith.constant 0 : index
    %c0_2 = arith.constant 0 : index
    %2 = vector.load %arg2[%c0_1, %c0_2] : memref<512x512xbf16, #tpu.memory_space<vmem>>, vector<512x512xbf16>
    %cst = arith.constant dense<0.000000e+00> : vector<8x512xf32>
    %3 = tpu.matmul %1, %2, %cst {dimension_numbers = #tpu.dot_dimension_numbers<[1], [0], [0], [1], [0, 0, 1, 1], [], []>} : vector<8x512xbf16>, vector<512x512xbf16>, vector<8x512xf32> -> vector<8x512xf32>
    %c0_3 = arith.constant 0 : index
    %c0_4 = arith.constant 0 : index
    %4 = vector.load %arg3[%c0_3, %c0_4] : memref<1x512xf32, #tpu.memory_space<vmem>>, vector<1x512xf32>
    %5 = vector.broadcast %4 : vector<1x512xf32> to vector<8x512xf32>
    %6 = arith.addf %3, %5 : vector<8x512xf32>
    %cst_5 = arith.constant 0.000000e+00 : f32
    %7 = vector.broadcast %cst_5 : f32 to vector<8x512xf32>
    %8 = arith.cmpf ogt, %6, %7 : vector<8x512xf32>
    %cst_6 = arith.constant 2.000000e-01 : f32
    %9 = vector.broadcast %cst_6 : f32 to vector<8x512xf32>
    %10 = arith.mulf %9, %6 : vector<8x512xf32>
    %11 = arith.select %8, %6, %10 : vector<8x512xi1>, vector<8x512xf32>
    %12 = arith.truncf %11 : vector<8x512xf32> to vector<8x512xbf16>
    %c0_7 = arith.constant 0 : index
    %c0_8 = arith.constant 0 : index
    %13 = vector.load %arg4[%c0_7, %c0_8] : memref<512x512xbf16, #tpu.memory_space<vmem>>, vector<512x512xbf16>
    %cst_9 = arith.constant dense<0.000000e+00> : vector<8x512xf32>
    %14 = tpu.matmul %12, %13, %cst_9 {dimension_numbers = #tpu.dot_dimension_numbers<[1], [0], [0], [1], [0, 0, 1, 1], [], []>} : vector<8x512xbf16>, vector<512x512xbf16>, vector<8x512xf32> -> vector<8x512xf32>
    %c0_10 = arith.constant 0 : index
    %c0_11 = arith.constant 0 : index
    %15 = vector.load %arg5[%c0_10, %c0_11] : memref<1x512xf32, #tpu.memory_space<vmem>>, vector<1x512xf32>
    %16 = vector.broadcast %15 : vector<1x512xf32> to vector<8x512xf32>
    %17 = arith.addf %14, %16 : vector<8x512xf32>
    %cst_12 = arith.constant 0.000000e+00 : f32
    %18 = vector.broadcast %cst_12 : f32 to vector<8x512xf32>
    %19 = arith.cmpf ogt, %17, %18 : vector<8x512xf32>
    %cst_13 = arith.constant 2.000000e-01 : f32
    %20 = vector.broadcast %cst_13 : f32 to vector<8x512xf32>
    %21 = arith.mulf %20, %17 : vector<8x512xf32>
    %22 = arith.select %19, %17, %21 : vector<8x512xi1>, vector<8x512xf32>
    %23 = arith.truncf %22 : vector<8x512xf32> to vector<8x512xbf16>
    %c0_14 = arith.constant 0 : index
    %c0_15 = arith.constant 0 : index
    %24 = vector.load %arg6[%c0_14, %c0_15] : memref<512x2048xbf16, #tpu.memory_space<vmem>>, vector<512x2048xbf16>
    %cst_16 = arith.constant dense<0.000000e+00> : vector<8x2048xf32>
    %25 = tpu.matmul %23, %24, %cst_16 {dimension_numbers = #tpu.dot_dimension_numbers<[1], [0], [0], [1], [0, 0, 1, 1], [], []>} : vector<8x512xbf16>, vector<512x2048xbf16>, vector<8x2048xf32> -> vector<8x2048xf32>
    %c0_17 = arith.constant 0 : index
    %c0_18 = arith.constant 0 : index
    %26 = vector.load %arg7[%c0_17, %c0_18] : memref<1x2048xf32, #tpu.memory_space<vmem>>, vector<1x2048xf32>
    %27 = vector.broadcast %26 : vector<1x2048xf32> to vector<8x2048xf32>
    %28 = arith.addf %25, %27 : vector<8x2048xf32>
    %cst_19 = arith.constant 0.000000e+00 : f32
    %29 = vector.broadcast %cst_19 : f32 to vector<8x2048xf32>
    %30 = arith.cmpf ogt, %28, %29 : vector<8x2048xf32>
    %cst_20 = arith.constant 2.000000e-01 : f32
    %31 = vector.broadcast %cst_20 : f32 to vector<8x2048xf32>
    %32 = arith.mulf %31, %28 : vector<8x2048xf32>
    %33 = arith.select %30, %28, %32 : vector<8x2048xi1>, vector<8x2048xf32>
    %c0_21 = arith.constant 0 : index
    %c0_22 = arith.constant 0 : index
    %34 = vector.load %arg8[%c0_21, %c0_22] : memref<1x2048xbf16, #tpu.memory_space<vmem>>, vector<1x2048xbf16>
    %35 = arith.extf %34 : vector<1x2048xbf16> to vector<1x2048xf32>
    %36 = vector.broadcast %35 : vector<1x2048xf32> to vector<8x2048xf32>
    %37 = arith.mulf %33, %36 : vector<8x2048xf32>
    %cst_23 = arith.constant dense<0.000000e+00> : vector<8xf32>
    %38 = vector.multi_reduction <add>, %37, %cst_23 [1] : vector<8x2048xf32> to vector<8xf32>
    %39 = vector.shape_cast %38 : vector<8xf32> to vector<8x1xf32>
    %c0_24 = arith.constant 0 : index
    %c0_25 = arith.constant 0 : index
    %40 = vector.load %arg9[%c0_24, %c0_25] : memref<1x1xf32, #tpu.memory_space<vmem>>, vector<1x1xf32>
    %41 = vector.broadcast %40 : vector<1x1xf32> to vector<8x1xf32>
    %42 = arith.addf %39, %41 : vector<8x1xf32>
    %43 = arith.negf %42 : vector<8x1xf32>
    %44 = math.exp %43 : vector<8x1xf32>
    %cst_26 = arith.constant 1.000000e+00 : f32
    %45 = vector.broadcast %cst_26 : f32 to vector<8x1xf32>
    %46 = arith.addf %45, %44 : vector<8x1xf32>
    %47 = arith.divf %45, %46 : vector<8x1xf32>
    %c0_27 = arith.constant 0 : index
    %c0_28 = arith.constant 0 : index
    %48 = vector.load %arg10[%c0_27, %c0_28] : memref<8x1xf32, #tpu.memory_space<vmem>>, vector<8x1xf32>
    tpu.vector_store %arg10[%c0_27, %c0_28], %47 {strides = array<i32>} : memref<8x1xf32, #tpu.memory_space<vmem>>, vector<8x1xf32>,
    return
  }
  func.func @transform_0(%arg0: i32) -> (i32, i32) {
    %c0_i32 = arith.constant 0 : i32
    %c0_i32_0 = arith.constant 0 : i32
    return %arg0, %c0_i32 : i32, i32
  }
  func.func @transform_1(%arg0: i32) -> (i32, i32) {
    %c0_i32 = arith.constant 0 : i32
    %c0_i32_0 = arith.constant 0 : i32
    %c0_i32_1 = arith.constant 0 : i32
    return %c0_i32, %c0_i32_0 : i32, i32
  }
  func.func @transform_2(%arg0: i32) -> (i32, i32) {
    %c0_i32 = arith.constant 0 : i32
    %c0_i32_0 = arith.constant 0 : i32
    %c0_i32_1 = arith.constant 0 : i32
    return %c0_i32, %c0_i32_0 : i32, i32
  }
  func.func @transform_3(%arg0: i32) -> (i32, i32) {
    %c0_i32 = arith.constant 0 : i32
    %c0_i32_0 = arith.constant 0 : i32
    %c0_i32_1 = arith.constant 0 : i32
    return %c0_i32, %c0_i32_0 : i32, i32
  }
  func.func @transform_4(%arg0: i32) -> (i32, i32) {
    %c0_i32 = arith.constant 0 : i32
    %c0_i32_0 = arith.constant 0 : i32
    %c0_i32_1 = arith.constant 0 : i32
    return %c0_i32, %c0_i32_0 : i32, i32
  }
  func.func @transform_5(%arg0: i32) -> (i32, i32) {
    %c0_i32 = arith.constant 0 : i32
    %c0_i32_0 = arith.constant 0 : i32
    %c0_i32_1 = arith.constant 0 : i32
    return %c0_i32, %c0_i32_0 : i32, i32
  }
  func.func @transform_6(%arg0: i32) -> (i32, i32) {
    %c0_i32 = arith.constant 0 : i32
    %c0_i32_0 = arith.constant 0 : i32
    %c0_i32_1 = arith.constant 0 : i32
    return %c0_i32, %c0_i32_0 : i32, i32
  }
  func.func @transform_7(%arg0: i32) -> (i32, i32) {
    %c0_i32 = arith.constant 0 : i32
    %c0_i32_0 = arith.constant 0 : i32
    %c0_i32_1 = arith.constant 0 : i32
    return %c0_i32, %c0_i32_0 : i32, i32
  }
  func.func @transform_8(%arg0: i32) -> (i32, i32) {
    %c0_i32 = arith.constant 0 : i32
    %c0_i32_0 = arith.constant 0 : i32
    %c0_i32_1 = arith.constant 0 : i32
    return %c0_i32, %c0_i32_0 : i32, i32
  }
  func.func @transform_9(%arg0: i32) -> (i32, i32) {
    %c0_i32 = arith.constant 0 : i32
    %c0_i32_0 = arith.constant 0 : i32
    return %arg0, %c0_i32 : i32, i32
  }
}

</mosaic_0001>

<llo_original>
// kernel: discrim_net_forward.1
$region0: #{discrim_net_forward.1}
  #allocation0 [shape = 'u32[]', space=smem, size = 0x4, offset = 0x4, fixed_abs, tag = 'smem constant byte address 0x4 - core index']
  #allocation1 [shape = 'u32[72,128]{1,0:T(1,128)}', space=vmem, size = 0x9000, scoped, tag = 'internal scratch']
  #allocation2 [shape = 'f32[1,1]{1,0:T(1,128)S(1)}', space=vmem, size = 0x200, scoped, tag = 'scoped memory for discrim_net_forward.1']
  %s0 = inlined_call_operand.vmem [shape: f32[8,512], index: 0, kind: input, shape index: {}]
  %s1 = inlined_call_operand.hbm [shape: bf16[512,512], index: 1, kind: input, shape index: {}]
  %s2 = inlined_call_operand.hbm [shape: f32[1,512], index: 2, kind: input, shape index: {}]
  %s3 = inlined_call_operand.hbm [shape: bf16[512,512], index: 3, kind: input, shape index: {}]
  %s4 = inlined_call_operand.hbm [shape: f32[1,512], index: 4, kind: input, shape index: {}]
  %s5 = inlined_call_operand.hbm [shape: bf16[512,2048], index: 5, kind: input, shape index: {}]
  %s6 = inlined_call_operand.hbm [shape: f32[1,2048], index: 6, kind: input, shape index: {}]
  %s7 = inlined_call_operand.hbm [shape: bf16[1,2048], index: 7, kind: input, shape index: {}]
  %s8 = inlined_call_operand.<no memory space> [shape: f32[1,1], index: 8, kind: input, shape index: {}]
  %s9 = inlined_call_operand.vmem [shape: f32[8,1], index: 9, kind: output, shape index: {}]
  %s10 = sld [smem:[#allocation0]]
  $region74: #{discrim_net_forward.1} parent=0
    _
  %s12 = ssub.s32 1, %s10
  %s13 = scalar_select 0, %s12, %s10
  %v14 = vstv %s8
  %15 = vst [vmem:[#allocation2] sm:$0x1] %v14
  $region1: #{discrim_net_forward.1} parent=0
    #allocation3 [shape = 'u8[524288]{0}', space=vmem, size = 0x80000, scoped, tag = 'input window, operand 1, single buffered']
    #allocation4 [shape = 's32[1]{0}', space=sflag, size = 0x4, scoped, tag = 'scoped memory for discrim_net_forward.1']
    #allocation5 [shape = 'u8[2048]{0}', space=vmem, size = 0x800, scoped, tag = 'input window, operand 2, single buffered']
    #allocation6 [shape = 's32[1]{0}', space=sflag, size = 0x4, scoped, tag = 'scoped memory for discrim_net_forward.1']
    #allocation7 [shape = 'u8[524288]{0}', space=vmem, size = 0x80000, scoped, tag = 'input window, operand 3, single buffered']
    #allocation8 [shape = 'u8[2048]{0}', space=vmem, size = 0x800, scoped, tag = 'input window, operand 4, single buffered']
    #allocation9 [shape = 's32[1]{0}', space=sflag, size = 0x4, scoped, tag = 'scoped memory for discrim_net_forward.1']
    #allocation10 [shape = 'u8[2097152]{0}', space=vmem, size = 0x200000, scoped, tag = 'input window, operand 5, single buffered']
    #allocation11 [shape = 'u8[8192]{0}', space=vmem, size = 0x2000, scoped, tag = 'input window, operand 6, single buffered']
    #allocation12 [shape = 's32[1]{0}', space=sflag, size = 0x4, scoped, tag = 'scoped memory for discrim_net_forward.1']
    #allocation13 [shape = 'u8[8192]{0}', space=vmem, size = 0x2000, scoped, tag = 'input window, operand 7, single buffered']
    %16 = vsyncpa [#allocation4], 0
    %17 = vsyncpa [#allocation6], 0
    %18 = vsyncpa [#allocation9], 0
    %19 = vsyncpa [#allocation12], 0
    // Predicated region
    $region2: #{discrim_net_forward.1} parent=1 // pred_check
      _
    $region3: #{discrim_net_forward.1} parent=1 // pred_check_branch
      %21 = sbr.rel (0) target = $region5
    $region4: #{discrim_net_forward.1} parent=1 // pred_region
      _
    $region5: #{discrim_net_forward.1} parent=1 // pred_fallthru
      _
    // Predicated region
    $region6: #{discrim_net_forward.1} parent=1 // pred_check
      _
    $region7: #{discrim_net_forward.1} parent=1 // pred_check_branch
      %23 = sbr.rel (0) target = $region9
    $region8: #{discrim_net_forward.1} parent=1 // pred_region
      %25 = vsyncadd [#allocation4], 0
      %s26 = sshll.u32 %s1, 4
      %s27 = int_to_ptr.hbm [resolvable:$true] %s26
      %s28 = sshll.u32 [#allocation3], 4
      %s29 = int_to_ptr.vmem [resolvable:$true] %s28
      %34 = dma.hbm_to_vmem [thread:$0]  %s27, 16384, %s29, [#allocation4], 256, 256, 16
    $region9: #{discrim_net_forward.1} parent=1 // pred_fallthru
      _
    // Predicated region
    $region10: #{discrim_net_forward.1} parent=1 // pred_check
      _
    $region11: #{discrim_net_forward.1} parent=1 // pred_check_branch
      %36 = sbr.rel (0) target = $region13
    $region12: #{discrim_net_forward.1} parent=1 // pred_region
      %38 = vsyncadd [#allocation6], 0
      %s40 = sshll.u32 %s2, 4
      %s41 = int_to_ptr.hbm [resolvable:$true] %s40
      %s42 = sshll.u32 [#allocation5], 4
      %s43 = int_to_ptr.vmem [resolvable:$true] %s42
      %45 = dma.hbm_to_vmem [thread:$0]  %s41, 64, %s43, [#allocation6]
    $region13: #{discrim_net_forward.1} parent=1 // pred_fallthru
      _
    // Predicated region
    $region14: #{discrim_net_forward.1} parent=1 // pred_check
      _
    $region15: #{discrim_net_forward.1} parent=1 // pred_check_branch
      %47 = sbr.rel (0) target = $region17
    $region16: #{discrim_net_forward.1} parent=1 // pred_region
      %49 = vsyncadd [#allocation6], 0
      %s50 = sshll.u32 %s3, 4
      %s51 = int_to_ptr.hbm [resolvable:$true] %s50
      %s52 = sshll.u32 [#allocation7], 4
      %s53 = int_to_ptr.vmem [resolvable:$true] %s52
      %58 = dma.hbm_to_vmem [thread:$0]  %s51, 16384, %s53, [#allocation6], 256, 256, 16
    $region17: #{discrim_net_forward.1} parent=1 // pred_fallthru
      _
    // Predicated region
    $region18: #{discrim_net_forward.1} parent=1 // pred_check
      _
    $region19: #{discrim_net_forward.1} parent=1 // pred_check_branch
      %60 = sbr.rel (0) target = $region21
    $region20: #{discrim_net_forward.1} parent=1 // pred_region
      %62 = vsyncadd [#allocation9], 0
      %s64 = sshll.u32 %s4, 4
      %s65 = int_to_ptr.hbm [resolvable:$true] %s64
      %s66 = sshll.u32 [#allocation8], 4
      %s67 = int_to_ptr.vmem [resolvable:$true] %s66
      %69 = dma.hbm_to_vmem [thread:$0]  %s65, 64, %s67, [#allocation9]
    $region21: #{discrim_net_forward.1} parent=1 // pred_fallthru
      _
    // Predicated region
    $region22: #{discrim_net_forward.1} parent=1 // pred_check
      _
    $region23: #{discrim_net_forward.1} parent=1 // pred_check_branch
      %71 = sbr.rel (0) target = $region25
    $region24: #{discrim_net_forward.1} parent=1 // pred_region
      %73 = vsyncadd [#allocation9], 0
      %s74 = sshll.u32 %s5, 4
      %s75 = int_to_ptr.hbm [resolvable:$true] %s74
      %s76 = sshll.u32 [#allocation10], 4
      %s77 = int_to_ptr.vmem [resolvable:$true] %s76
      %82 = dma.hbm_to_vmem [thread:$0]  %s75, 65536, %s77, [#allocation9], 1024, 1024, 64
    $region25: #{discrim_net_forward.1} parent=1 // pred_fallthru
      _
    // Predicated region
    $region26: #{discrim_net_forward.1} parent=1 // pred_check
      _
    $region27: #{discrim_net_forward.1} parent=1 // pred_check_branch
      %84 = sbr.rel (0) target = $region29
    $region28: #{discrim_net_forward.1} parent=1 // pred_region
      %86 = vsyncadd [#allocation12], 0
      %s88 = sshll.u32 %s6, 4
      %s89 = int_to_ptr.hbm [resolvable:$true] %s88
      %s90 = sshll.u32 [#allocation11], 4
      %s91 = int_to_ptr.vmem [resolvable:$true] %s90
      %93 = dma.hbm_to_vmem [thread:$0]  %s89, 256, %s91, [#allocation12]
    $region29: #{discrim_net_forward.1} parent=1 // pred_fallthru
      _
    // Predicated region
    $region30: #{discrim_net_forward.1} parent=1 // pred_check
      _
    $region31: #{discrim_net_forward.1} parent=1 // pred_check_branch
      %95 = sbr.rel (0) target = $region33
    $region32: #{discrim_net_forward.1} parent=1 // pred_region
      %97 = vsyncadd [#allocation12], 0
      %s99 = sshll.u32 %s7, 4
      %s100 = int_to_ptr.hbm [resolvable:$true] %s99
      %s101 = sshll.u32 [#allocation13], 4
      %s102 = int_to_ptr.vmem [resolvable:$true] %s101
      %104 = dma.hbm_to_vmem [thread:$0]  %s100, 256, %s102, [#allocation12]
    $region33: #{discrim_net_forward.1} parent=1 // pred_fallthru
      _
    // Predicated region
    $region34: #{discrim_net_forward.1} parent=1 // pred_check
      _
    $region35: #{discrim_net_forward.1} parent=1 // pred_check_branch
      %106 = sbr.rel (0) target = $region37
    $region36: #{discrim_net_forward.1} parent=1 // pred_region
      _
    $region37: #{discrim_net_forward.1} parent=1 // pred_fallthru
      _
    // Predicated region
    $region38: #{discrim_net_forward.1} parent=1 // pred_check
      _
    $region39: #{discrim_net_forward.1} parent=1 // pred_check_branch
      %108 = sbr.rel (0) target = $region41
    $region40: #{discrim_net_forward.1} parent=1 // pred_region
      %110 = dma.done [#allocation4], 16384
    $region41: #{discrim_net_forward.1} parent=1 // pred_fallthru
      _
    // Predicated region
    $region42: #{discrim_net_forward.1} parent=1 // pred_check
      _
    $region43: #{discrim_net_forward.1} parent=1 // pred_check_branch
      %112 = sbr.rel (0) target = $region45
    $region44: #{discrim_net_forward.1} parent=1 // pred_region
      %114 = dma.done [#allocation6], 64
    $region45: #{discrim_net_forward.1} parent=1 // pred_fallthru
      _
    // Predicated region
    $region46: #{discrim_net_forward.1} parent=1 // pred_check
      _
    $region47: #{discrim_net_forward.1} parent=1 // pred_check_branch
      %116 = sbr.rel (0) target = $region49
    $region48: #{discrim_net_forward.1} parent=1 // pred_region
      %118 = dma.done [#allocation6], 16384
    $region49: #{discrim_net_forward.1} parent=1 // pred_fallthru
      _
    // Predicated region
    $region50: #{discrim_net_forward.1} parent=1 // pred_check
      _
    $region51: #{discrim_net_forward.1} parent=1 // pred_check_branch
      %120 = sbr.rel (0) target = $region53
    $region52: #{discrim_net_forward.1} parent=1 // pred_region
      %122 = dma.done [#allocation9], 64
    $region53: #{discrim_net_forward.1} parent=1 // pred_fallthru
      _
    // Predicated region
    $region54: #{discrim_net_forward.1} parent=1 // pred_check
      _
    $region55: #{discrim_net_forward.1} parent=1 // pred_check_branch
      %124 = sbr.rel (0) target = $region57
    $region56: #{discrim_net_forward.1} parent=1 // pred_region
      %126 = dma.done [#allocation9], 65536
    $region57: #{discrim_net_forward.1} parent=1 // pred_fallthru
      _
    // Predicated region
    $region58: #{discrim_net_forward.1} parent=1 // pred_check
      _
    $region59: #{discrim_net_forward.1} parent=1 // pred_check_branch
      %128 = sbr.rel (0) target = $region61
    $region60: #{discrim_net_forward.1} parent=1 // pred_region
      %130 = dma.done [#allocation12], 256
    $region61: #{discrim_net_forward.1} parent=1 // pred_fallthru
      _
    // Predicated region
    $region62: #{discrim_net_forward.1} parent=1 // pred_check
      _
    $region63: #{discrim_net_forward.1} parent=1 // pred_check_branch
      %132 = sbr.rel (0) target = $region65
    $region64: #{discrim_net_forward.1} parent=1 // pred_region
      %134 = dma.done [#allocation12], 256
    $region65: #{discrim_net_forward.1} parent=1 // pred_fallthru
      _
    %v135 = vld [vmem:[%s0] sm:$0xff]
    %v136 = vld [vmem:[%s0 + $0x8] sm:$0xff]
    %v137 = vld [vmem:[%s0 + $0x10] sm:$0xff]
    %v138 = vld [vmem:[%s0 + $0x18] sm:$0xff]
    %v139 = vpack.c.bf16 %v135, %v135
    %v140 = vpack.c.bf16 %v136, %v136
    %v141 = vpack.c.bf16 %v137, %v137
    %v142 = vpack.c.bf16 %v138, %v138
    %v143 = vld [vmem:[#allocation3] sm:$0xff]
    %v144 = vld [vmem:[#allocation3 + $0x8] sm:$0xff]
    %v145 = vld [vmem:[#allocation3 + $0x10] sm:$0xff]
    %v146 = vld [vmem:[#allocation3 + $0x18] sm:$0xff]
    %v147 = vld [vmem:[#allocation3 + $0x20] sm:$0xff]
    %v148 = vld [vmem:[#allocation3 + $0x28] sm:$0xff]
    %v149 = vld [vmem:[#allocation3 + $0x30] sm:$0xff]
    %v150 = vld [vmem:[#allocation3 + $0x38] sm:$0xff]
    %v151 = vld [vmem:[#allocation3 + $0x40] sm:$0xff]
    %v152 = vld [vmem:[#allocation3 + $0x48] sm:$0xff]
    %v153 = vld [vmem:[#allocation3 + $0x50] sm:$0xff]
    %v154 = vld [vmem:[#allocation3 + $0x58] sm:$0xff]
    %v155 = vld [vmem:[#allocation3 + $0x60] sm:$0xff]
    %v156 = vld [vmem:[#allocation3 + $0x68] sm:$0xff]
    %v157 = vld [vmem:[#allocation3 + $0x70] sm:$0xff]
    %v158 = vld [vmem:[#allocation3 + $0x78] sm:$0xff]
    %v159 = vld [vmem:[#allocation3 + $0x80] sm:$0xff]
    %v160 = vld [vmem:[#allocation3 + $0x88] sm:$0xff]
    %v161 = vld [vmem:[#allocation3 + $0x90] sm:$0xff]
    %v162 = vld [vmem:[#allocation3 + $0x98] sm:$0xff]
    %v163 = vld [vmem:[#allocation3 + $0xa0] sm:$0xff]
    %v164 = vld [vmem:[#allocation3 + $0xa8] sm:$0xff]
    %v165 = vld [vmem:[#allocation3 + $0xb0] sm:$0xff]
    %v166 = vld [vmem:[#allocation3 + $0xb8] sm:$0xff]
    %v167 = vld [vmem:[#allocation3 + $0xc0] sm:$0xff]
    %v168 = vld [vmem:[#allocation3 + $0xc8] sm:$0xff]
    %v169 = vld [vmem:[#allocation3 + $0xd0] sm:$0xff]
    %v170 = vld [vmem:[#allocation3 + $0xd8] sm:$0xff]
    %v171 = vld [vmem:[#allocation3 + $0xe0] sm:$0xff]
    %v172 = vld [vmem:[#allocation3 + $0xe8] sm:$0xff]
    %v173 = vld [vmem:[#allocation3 + $0xf0] sm:$0xff]
    %v174 = vld [vmem:[#allocation3 + $0xf8] sm:$0xff]
    %v175 = vld [vmem:[#allocation3 + $0x100] sm:$0xff]
    %v176 = vld [vmem:[#allocation3 + $0x108] sm:$0xff]
    %v177 = vld [vmem:[#allocation3 + $0x110] sm:$0xff]
    %v178 = vld [vmem:[#allocation3 + $0x118] sm:$0xff]
    %v179 = vld [vmem:[#allocation3 + $0x120] sm:$0xff]
    %v180 = vld [vmem:[#allocation3 + $0x128] sm:$0xff]
    %v181 = vld [vmem:[#allocation3 + $0x130] sm:$0xff]
    %v182 = vld [vmem:[#allocation3 + $0x138] sm:$0xff]
    %v183 = vld [vmem:[#allocation3 + $0x140] sm:$0xff]
    %v184 = vld [vmem:[#allocation3 + $0x148] sm:$0xff]
    %v185 = vld [vmem:[#allocation3 + $0x150] sm:$0xff]
    %v186 = vld [vmem:[#allocation3 + $0x158] sm:$0xff]
    %v187 = vld [vmem:[#allocation3 + $0x160] sm:$0xff]
    %v188 = vld [vmem:[#allocation3 + $0x168] sm:$0xff]
    %v189 = vld [vmem:[#allocation3 + $0x170] sm:$0xff]
    %v190 = vld [vmem:[#allocation3 + $0x178] sm:$0xff]
    %v191 = vld [vmem:[#allocation3 + $0x180] sm:$0xff]
    %v192 = vld [vmem:[#allocation3 + $0x188] sm:$0xff]
    %v193 = vld [vmem:[#allocation3 + $0x190] sm:$0xff]
    %v194 = vld [vmem:[#allocation3 + $0x198] sm:$0xff]
    %v195 = vld [vmem:[#allocation3 + $0x1a0] sm:$0xff]
    %v196 = vld [vmem:[#allocation3 + $0x1a8] sm:$0xff]
    %v197 = vld [vmem:[#allocation3 + $0x1b0] sm:$0xff]
    %v198 = vld [vmem:[#allocation3 + $0x1b8] sm:$0xff]
    %v199 = vld [vmem:[#allocation3 + $0x1c0] sm:$0xff]
    %v200 = vld [vmem:[#allocation3 + $0x1c8] sm:$0xff]
    %v201 = vld [vmem:[#allocation3 + $0x1d0] sm:$0xff]
    %v202 = vld [vmem:[#allocation3 + $0x1d8] sm:$0xff]
    %v203 = vld [vmem:[#allocation3 + $0x1e0] sm:$0xff]
    %v204 = vld [vmem:[#allocation3 + $0x1e8] sm:$0xff]
    %v205 = vld [vmem:[#allocation3 + $0x1f0] sm:$0xff]
    %v206 = vld [vmem:[#allocation3 + $0x1f8] sm:$0xff]
    %v207 = vld [vmem:[#allocation3 + $0x200] sm:$0xff]
    %v208 = vld [vmem:[#allocation3 + $0x208] sm:$0xff]
    %v209 = vld [vmem:[#allocation3 + $0x210] sm:$0xff]
    %v210 = vld [vmem:[#allocation3 + $0x218] sm:$0xff]
    %v211 = vld [vmem:[#allocation3 + $0x220] sm:$0xff]
    %v212 = vld [vmem:[#allocation3 + $0x228] sm:$0xff]
    %v213 = vld [vmem:[#allocation3 + $0x230] sm:$0xff]
    %v214 = vld [vmem:[#allocation3 + $0x238] sm:$0xff]
    %v215 = vld [vmem:[#allocation3 + $0x240] sm:$0xff]
    %v216 = vld [vmem:[#allocation3 + $0x248] sm:$0xff]
    %v217 = vld [vmem:[#allocation3 + $0x250] sm:$0xff]
    %v218 = vld [vmem:[#allocation3 + $0x258] sm:$0xff]
    %v219 = vld [vmem:[#allocation3 + $0x260] sm:$0xff]
    %v220 = vld [vmem:[#allocation3 + $0x268] sm:$0xff]
    %v221 = vld [vmem:[#allocation3 + $0x270] sm:$0xff]
    %v222 = vld [vmem:[#allocation3 + $0x278] sm:$0xff]
    %v223 = vld [vmem:[#allocation3 + $0x280] sm:$0xff]
    %v224 = vld [vmem:[#allocation3 + $0x288] sm:$0xff]
    %v225 = vld [vmem:[#allocation3 + $0x290] sm:$0xff]
    %v226 = vld [vmem:[#allocation3 + $0x298] sm:$0xff]
    %v227 = vld [vmem:[#allocation3 + $0x2a0] sm:$0xff]
    %v228 = vld [vmem:[#allocation3 + $0x2a8] sm:$0xff]
    %v229 = vld [vmem:[#allocation3 + $0x2b0] sm:$0xff]
    %v230 = vld [vmem:[#allocation3 + $0x2b8] sm:$0xff]
    %v231 = vld [vmem:[#allocation3 + $0x2c0] sm:$0xff]
    %v232 = vld [vmem:[#allocation3 + $0x2c8] sm:$0xff]
    %v233 = vld [vmem:[#allocation3 + $0x2d0] sm:$0xff]
    %v234 = vld [vmem:[#allocation3 + $0x2d8] sm:$0xff]
    %v235 = vld [vmem:[#allocation3 + $0x2e0] sm:$0xff]
    %v236 = vld [vmem:[#allocation3 + $0x2e8] sm:$0xff]
    %v237 = vld [vmem:[#allocation3 + $0x2f0] sm:$0xff]
    %v238 = vld [vmem:[#allocation3 + $0x2f8] sm:$0xff]
    %v239 = vld [vmem:[#allocation3 + $0x300] sm:$0xff]
    %v240 = vld [vmem:[#allocation3 + $0x308] sm:$0xff]
    %v241 = vld [vmem:[#allocation3 + $0x310] sm:$0xff]
    %v242 = vld [vmem:[#allocation3 + $0x318] sm:$0xff]
    %v243 = vld [vmem:[#allocation3 + $0x320] sm:$0xff]
    %v244 = vld [vmem:[#allocation3 + $0x328] sm:$0xff]
    %v245 = vld [vmem:[#allocation3 + $0x330] sm:$0xff]
    %v246 = vld [vmem:[#allocation3 + $0x338] sm:$0xff]
    %v247 = vld [vmem:[#allocation3 + $0x340] sm:$0xff]
    %v248 = vld [vmem:[#allocation3 + $0x348] sm:$0xff]
    %v249 = vld [vmem:[#allocation3 + $0x350] sm:$0xff]
    %v250 = vld [vmem:[#allocation3 + $0x358] sm:$0xff]
    %v251 = vld [vmem:[#allocation3 + $0x360] sm:$0xff]
    %v252 = vld [vmem:[#allocation3 + $0x368] sm:$0xff]
    %v253 = vld [vmem:[#allocation3 + $0x370] sm:$0xff]
    %v254 = vld [vmem:[#allocation3 + $0x378] sm:$0xff]
    %v255 = vld [vmem:[#allocation3 + $0x380] sm:$0xff]
    %v256 = vld [vmem:[#allocation3 + $0x388] sm:$0xff]
    %v257 = vld [vmem:[#allocation3 + $0x390] sm:$0xff]
    %v258 = vld [vmem:[#allocation3 + $0x398] sm:$0xff]
    %v259 = vld [vmem:[#allocation3 + $0x3a0] sm:$0xff]
    %v260 = vld [vmem:[#allocation3 + $0x3a8] sm:$0xff]
    %v261 = vld [vmem:[#allocation3 + $0x3b0] sm:$0xff]
    %v262 = vld [vmem:[#allocation3 + $0x3b8] sm:$0xff]
    %v263 = vld [vmem:[#allocation3 + $0x3c0] sm:$0xff]
    %v264 = vld [vmem:[#allocation3 + $0x3c8] sm:$0xff]
    %v265 = vld [vmem:[#allocation3 + $0x3d0] sm:$0xff]
    %v266 = vld [vmem:[#allocation3 + $0x3d8] sm:$0xff]
    %v267 = vld [vmem:[#allocation3 + $0x3e0] sm:$0xff]
    %v268 = vld [vmem:[#allocation3 + $0x3e8] sm:$0xff]
    %v269 = vld [vmem:[#allocation3 + $0x3f0] sm:$0xff]
    %v270 = vld [vmem:[#allocation3 + $0x3f8] sm:$0xff]
    %v271 = vld [vmem:[#allocation5] sm:$0xf]
    %v273 = vperm.slane %v271, 0
    %v274 = vperm.slane %v271, 1
    %v275 = vperm.slane %v271, 2
    %v276 = vperm.slane %v271, 3
    %v409 = vunpack.c.l.b16 %v143
    %v410 = vunpack.c.h.b16 %v143
    %v411 = vunpack.c.l.b16 %v144
    %v412 = vunpack.c.h.b16 %v144
    %v413 = vunpack.c.l.b16 %v145
    %v414 = vunpack.c.h.b16 %v145
    %v415 = vunpack.c.l.b16 %v146
    %v416 = vunpack.c.h.b16 %v146
    %v417 = vunpack.c.l.b16 %v147
    %v418 = vunpack.c.h.b16 %v147
    %v419 = vunpack.c.l.b16 %v148
    %v420 = vunpack.c.h.b16 %v148
    %v421 = vunpack.c.l.b16 %v149
    %v422 = vunpack.c.h.b16 %v149
    %v423 = vunpack.c.l.b16 %v150
    %v424 = vunpack.c.h.b16 %v150
    %v425 = vunpack.c.l.b16 %v151
    %v426 = vunpack.c.h.b16 %v151
    %v427 = vunpack.c.l.b16 %v152
    %v428 = vunpack.c.h.b16 %v152
    %v429 = vunpack.c.l.b16 %v153
    %v430 = vunpack.c.h.b16 %v153
    %v431 = vunpack.c.l.b16 %v154
    %v432 = vunpack.c.h.b16 %v154
    %v433 = vunpack.c.l.b16 %v155
    %v434 = vunpack.c.h.b16 %v155
    %v435 = vunpack.c.l.b16 %v156
    %v436 = vunpack.c.h.b16 %v156
    %v437 = vunpack.c.l.b16 %v157
    %v438 = vunpack.c.h.b16 %v157
    %v439 = vunpack.c.l.b16 %v158
    %v440 = vunpack.c.h.b16 %v158
    %v441 = vunpack.c.l.b16 %v159
    %v442 = vunpack.c.h.b16 %v159
    %v443 = vunpack.c.l.b16 %v160
    %v444 = vunpack.c.h.b16 %v160
    %v445 = vunpack.c.l.b16 %v161
    %v446 = vunpack.c.h.b16 %v161
    %v447 = vunpack.c.l.b16 %v162
    %v448 = vunpack.c.h.b16 %v162
    %v449 = vunpack.c.l.b16 %v163
    %v450 = vunpack.c.h.b16 %v163
    %v451 = vunpack.c.l.b16 %v164
    %v452 = vunpack.c.h.b16 %v164
    %v453 = vunpack.c.l.b16 %v165
    %v454 = vunpack.c.h.b16 %v165
    %v455 = vunpack.c.l.b16 %v166
    %v456 = vunpack.c.h.b16 %v166
    %v457 = vunpack.c.l.b16 %v167
    %v458 = vunpack.c.h.b16 %v167
    %v459 = vunpack.c.l.b16 %v168
    %v460 = vunpack.c.h.b16 %v168
    %v461 = vunpack.c.l.b16 %v169
    %v462 = vunpack.c.h.b16 %v169
    %v463 = vunpack.c.l.b16 %v170
    %v464 = vunpack.c.h.b16 %v170
    %v465 = vunpack.c.l.b16 %v171
    %v466 = vunpack.c.h.b16 %v171
    %v467 = vunpack.c.l.b16 %v172
    %v468 = vunpack.c.h.b16 %v172
    %v469 = vunpack.c.l.b16 %v173
    %v470 = vunpack.c.h.b16 %v173
    %v471 = vunpack.c.l.b16 %v174
    %v472 = vunpack.c.h.b16 %v174
    %v473 = vunpack.c.l.b16 %v175
    %v474 = vunpack.c.h.b16 %v175
    %v475 = vunpack.c.l.b16 %v176
    %v476 = vunpack.c.h.b16 %v176
    %v477 = vunpack.c.l.b16 %v177
    %v478 = vunpack.c.h.b16 %v177
    %v479 = vunpack.c.l.b16 %v178
    %v480 = vunpack.c.h.b16 %v178
    %v481 = vunpack.c.l.b16 %v179
    %v482 = vunpack.c.h.b16 %v179
    %v483 = vunpack.c.l.b16 %v180
    %v484 = vunpack.c.h.b16 %v180
    %v485 = vunpack.c.l.b16 %v181
    %v486 = vunpack.c.h.b16 %v181
    %v487 = vunpack.c.l.b16 %v182
    %v488 = vunpack.c.h.b16 %v182
    %v489 = vunpack.c.l.b16 %v183
    %v490 = vunpack.c.h.b16 %v183
    %v491 = vunpack.c.l.b16 %v184
    %v492 = vunpack.c.h.b16 %v184
    %v493 = vunpack.c.l.b16 %v185
    %v494 = vunpack.c.h.b16 %v185
    %v495 = vunpack.c.l.b16 %v186
    %v496 = vunpack.c.h.b16 %v186
    %v497 = vunpack.c.l.b16 %v187
    %v498 = vunpack.c.h.b16 %v187
    %v499 = vunpack.c.l.b16 %v188
    %v500 = vunpack.c.h.b16 %v188
    %v501 = vunpack.c.l.b16 %v189
    %v502 = vunpack.c.h.b16 %v189
    %v503 = vunpack.c.l.b16 %v190
    %v504 = vunpack.c.h.b16 %v190
    %v505 = vunpack.c.l.b16 %v191
    %v506 = vunpack.c.h.b16 %v191
    %v507 = vunpack.c.l.b16 %v192
    %v508 = vunpack.c.h.b16 %v192
    %v509 = vunpack.c.l.b16 %v193
    %v510 = vunpack.c.h.b16 %v193
    %v511 = vunpack.c.l.b16 %v194
    %v512 = vunpack.c.h.b16 %v194
    %v513 = vunpack.c.l.b16 %v195
    %v514 = vunpack.c.h.b16 %v195
    %v515 = vunpack.c.l.b16 %v196
    %v516 = vunpack.c.h.b16 %v196
    %v517 = vunpack.c.l.b16 %v197
    %v518 = vunpack.c.h.b16 %v197
    %v519 = vunpack.c.l.b16 %v198
    %v520 = vunpack.c.h.b16 %v198
    %v521 = vunpack.c.l.b16 %v199
    %v522 = vunpack.c.h.b16 %v199
    %v523 = vunpack.c.l.b16 %v200
    %v524 = vunpack.c.h.b16 %v200
    %v525 = vunpack.c.l.b16 %v201
    %v526 = vunpack.c.h.b16 %v201
    %v527 = vunpack.c.l.b16 %v202
    %v528 = vunpack.c.h.b16 %v202
    %v529 = vunpack.c.l.b16 %v203
    %v530 = vunpack.c.h.b16 %v203
    %v531 = vunpack.c.l.b16 %v204
    %v532 = vunpack.c.h.b16 %v204
    %v533 = vunpack.c.l.b16 %v205
    %v534 = vunpack.c.h.b16 %v205
    %v535 = vunpack.c.l.b16 %v206
    %v536 = vunpack.c.h.b16 %v206
    %v537 = vunpack.c.l.b16 %v207
    %v538 = vunpack.c.h.b16 %v207
    %v539 = vunpack.c.l.b16 %v208
    %v540 = vunpack.c.h.b16 %v208
    %v541 = vunpack.c.l.b16 %v209
    %v542 = vunpack.c.h.b16 %v209
    %v543 = vunpack.c.l.b16 %v210
    %v544 = vunpack.c.h.b16 %v210
    %v545 = vunpack.c.l.b16 %v211
    %v546 = vunpack.c.h.b16 %v211
    %v547 = vunpack.c.l.b16 %v212
    %v548 = vunpack.c.h.b16 %v212
    %v549 = vunpack.c.l.b16 %v213
    %v550 = vunpack.c.h.b16 %v213
    %v551 = vunpack.c.l.b16 %v214
    %v552 = vunpack.c.h.b16 %v214
    %v553 = vunpack.c.l.b16 %v215
    %v554 = vunpack.c.h.b16 %v215
    %v555 = vunpack.c.l.b16 %v216
    %v556 = vunpack.c.h.b16 %v216
    %v557 = vunpack.c.l.b16 %v217
    %v558 = vunpack.c.h.b16 %v217
    %v559 = vunpack.c.l.b16 %v218
    %v560 = vunpack.c.h.b16 %v218
    %v561 = vunpack.c.l.b16 %v219
    %v562 = vunpack.c.h.b16 %v219
    %v563 = vunpack.c.l.b16 %v220
    %v564 = vunpack.c.h.b16 %v220
    %v565 = vunpack.c.l.b16 %v221
    %v566 = vunpack.c.h.b16 %v221
    %v567 = vunpack.c.l.b16 %v222
    %v568 = vunpack.c.h.b16 %v222
    %v569 = vunpack.c.l.b16 %v223
    %v570 = vunpack.c.h.b16 %v223
    %v571 = vunpack.c.l.b16 %v224
    %v572 = vunpack.c.h.b16 %v224
    %v573 = vunpack.c.l.b16 %v225
    %v574 = vunpack.c.h.b16 %v225
    %v575 = vunpack.c.l.b16 %v226
    %v576 = vunpack.c.h.b16 %v226
    %v577 = vunpack.c.l.b16 %v227
    %v578 = vunpack.c.h.b16 %v227
    %v579 = vunpack.c.l.b16 %v228
    %v580 = vunpack.c.h.b16 %v228
    %v581 = vunpack.c.l.b16 %v229
    %v582 = vunpack.c.h.b16 %v229
    %v583 = vunpack.c.l.b16 %v230
    %v584 = vunpack.c.h.b16 %v230
    %v585 = vunpack.c.l.b16 %v231
    %v586 = vunpack.c.h.b16 %v231
    %v587 = vunpack.c.l.b16 %v232
    %v588 = vunpack.c.h.b16 %v232
    %v589 = vunpack.c.l.b16 %v233
    %v590 = vunpack.c.h.b16 %v233
    %v591 = vunpack.c.l.b16 %v234
    %v592 = vunpack.c.h.b16 %v234
    %v593 = vunpack.c.l.b16 %v235
    %v594 = vunpack.c.h.b16 %v235
    %v595 = vunpack.c.l.b16 %v236
    %v596 = vunpack.c.h.b16 %v236
    %v597 = vunpack.c.l.b16 %v237
    %v598 = vunpack.c.h.b16 %v237
    %v599 = vunpack.c.l.b16 %v238
    %v600 = vunpack.c.h.b16 %v238
    %v601 = vunpack.c.l.b16 %v239
    %v602 = vunpack.c.h.b16 %v239
    %v603 = vunpack.c.l.b16 %v240
    %v604 = vunpack.c.h.b16 %v240
    %v605 = vunpack.c.l.b16 %v241
    %v606 = vunpack.c.h.b16 %v241
    %v607 = vunpack.c.l.b16 %v242
    %v608 = vunpack.c.h.b16 %v242
    %v609 = vunpack.c.l.b16 %v243
    %v610 = vunpack.c.h.b16 %v243
    %v611 = vunpack.c.l.b16 %v244
    %v612 = vunpack.c.h.b16 %v244
    %v613 = vunpack.c.l.b16 %v245
    %v614 = vunpack.c.h.b16 %v245
    %v615 = vunpack.c.l.b16 %v246
    %v616 = vunpack.c.h.b16 %v246
    %v617 = vunpack.c.l.b16 %v247
    %v618 = vunpack.c.h.b16 %v247
    %v619 = vunpack.c.l.b16 %v248
    %v620 = vunpack.c.h.b16 %v248
    %v621 = vunpack.c.l.b16 %v249
    %v622 = vunpack.c.h.b16 %v249
    %v623 = vunpack.c.l.b16 %v250
    %v624 = vunpack.c.h.b16 %v250
    %v625 = vunpack.c.l.b16 %v251
    %v626 = vunpack.c.h.b16 %v251
    %v627 = vunpack.c.l.b16 %v252
    %v628 = vunpack.c.h.b16 %v252
    %v629 = vunpack.c.l.b16 %v253
    %v630 = vunpack.c.h.b16 %v253
    %v631 = vunpack.c.l.b16 %v254
    %v632 = vunpack.c.h.b16 %v254
    %v633 = vunpack.c.l.b16 %v255
    %v634 = vunpack.c.h.b16 %v255
    %v635 = vunpack.c.l.b16 %v256
    %v636 = vunpack.c.h.b16 %v256
    %v637 = vunpack.c.l.b16 %v257
    %v638 = vunpack.c.h.b16 %v257
    %v639 = vunpack.c.l.b16 %v258
    %v640 = vunpack.c.h.b16 %v258
    %v641 = vunpack.c.l.b16 %v259
    %v642 = vunpack.c.h.b16 %v259
    %v643 = vunpack.c.l.b16 %v260
    %v644 = vunpack.c.h.b16 %v260
    %v645 = vunpack.c.l.b16 %v261
    %v646 = vunpack.c.h.b16 %v261
    %v647 = vunpack.c.l.b16 %v262
    %v648 = vunpack.c.h.b16 %v262
    %v649 = vunpack.c.l.b16 %v263
    %v650 = vunpack.c.h.b16 %v263
    %v651 = vunpack.c.l.b16 %v264
    %v652 = vunpack.c.h.b16 %v264
    %v653 = vunpack.c.l.b16 %v265
    %v654 = vunpack.c.h.b16 %v265
    %v655 = vunpack.c.l.b16 %v266
    %v656 = vunpack.c.h.b16 %v266
    %v657 = vunpack.c.l.b16 %v267
    %v658 = vunpack.c.h.b16 %v267
    %v659 = vunpack.c.l.b16 %v268
    %v660 = vunpack.c.h.b16 %v268
    %v661 = vunpack.c.l.b16 %v269
    %v662 = vunpack.c.h.b16 %v269
    %v663 = vunpack.c.l.b16 %v270
    %v664 = vunpack.c.h.b16 %v270
    %v665 = vpack.c.b16 %v413, %v409
    %v666 = vpack.c.b16 %v414, %v410
    %v667 = vpack.c.b16 %v415, %v411
    %v668 = vpack.c.b16 %v416, %v412
    %v669 = vpack.c.b16 %v421, %v417
    %v670 = vpack.c.b16 %v422, %v418
    %v671 = vpack.c.b16 %v423, %v419
    %v672 = vpack.c.b16 %v424, %v420
    %v673 = vpack.c.b16 %v429, %v425
    %v674 = vpack.c.b16 %v430, %v426
    %v675 = vpack.c.b16 %v431, %v427
    %v676 = vpack.c.b16 %v432, %v428
    %v677 = vpack.c.b16 %v437, %v433
    %v678 = vpack.c.b16 %v438, %v434
    %v679 = vpack.c.b16 %v439, %v435
    %v680 = vpack.c.b16 %v440, %v436
    %v681 = vpack.c.b16 %v445, %v441
    %v682 = vpack.c.b16 %v446, %v442
    %v683 = vpack.c.b16 %v447, %v443
    %v684 = vpack.c.b16 %v448, %v444
    %v685 = vpack.c.b16 %v453, %v449
    %v686 = vpack.c.b16 %v454, %v450
    %v687 = vpack.c.b16 %v455, %v451
    %v688 = vpack.c.b16 %v456, %v452
    %v689 = vpack.c.b16 %v461, %v457
    %v690 = vpack.c.b16 %v462, %v458
    %v691 = vpack.c.b16 %v463, %v459
    %v692 = vpack.c.b16 %v464, %v460
    %v693 = vpack.c.b16 %v469, %v465
    %v694 = vpack.c.b16 %v470, %v466
    %v695 = vpack.c.b16 %v471, %v467
    %v696 = vpack.c.b16 %v472, %v468
    %v697 = vpack.c.b16 %v477, %v473
    %v698 = vpack.c.b16 %v478, %v474
    %v699 = vpack.c.b16 %v479, %v475
    %v700 = vpack.c.b16 %v480, %v476
    %v701 = vpack.c.b16 %v485, %v481
    %v702 = vpack.c.b16 %v486, %v482
    %v703 = vpack.c.b16 %v487, %v483
    %v704 = vpack.c.b16 %v488, %v484
    %v705 = vpack.c.b16 %v493, %v489
    %v706 = vpack.c.b16 %v494, %v490
    %v707 = vpack.c.b16 %v495, %v491
    %v708 = vpack.c.b16 %v496, %v492
    %v709 = vpack.c.b16 %v501, %v497
    %v710 = vpack.c.b16 %v502, %v498
    %v711 = vpack.c.b16 %v503, %v499
    %v712 = vpack.c.b16 %v504, %v500
    %v713 = vpack.c.b16 %v509, %v505
    %v714 = vpack.c.b16 %v510, %v506
    %v715 = vpack.c.b16 %v511, %v507
    %v716 = vpack.c.b16 %v512, %v508
    %v717 = vpack.c.b16 %v517, %v513
    %v718 = vpack.c.b16 %v518, %v514
    %v719 = vpack.c.b16 %v519, %v515
    %v720 = vpack.c.b16 %v520, %v516
    %v721 = vpack.c.b16 %v525, %v521
    %v722 = vpack.c.b16 %v526, %v522
    %v723 = vpack.c.b16 %v527, %v523
    %v724 = vpack.c.b16 %v528, %v524
    %v725 = vpack.c.b16 %v533, %v529
    %v726 = vpack.c.b16 %v534, %v530
    %v727 = vpack.c.b16 %v535, %v531
    %v728 = vpack.c.b16 %v536, %v532
    %v729 = vpack.c.b16 %v541, %v537
    %v730 = vpack.c.b16 %v542, %v538
    %v731 = vpack.c.b16 %v543, %v539
    %v732 = vpack.c.b16 %v544, %v540
    %v733 = vpack.c.b16 %v549, %v545
    %v734 = vpack.c.b16 %v550, %v546
    %v735 = vpack.c.b16 %v551, %v547
    %v736 = vpack.c.b16 %v552, %v548
    %v737 = vpack.c.b16 %v557, %v553
    %v738 = vpack.c.b16 %v558, %v554
    %v739 = vpack.c.b16 %v559, %v555
    %v740 = vpack.c.b16 %v560, %v556
    %v741 = vpack.c.b16 %v565, %v561
    %v742 = vpack.c.b16 %v566, %v562
    %v743 = vpack.c.b16 %v567, %v563
    %v744 = vpack.c.b16 %v568, %v564
    %v745 = vpack.c.b16 %v573, %v569
    %v746 = vpack.c.b16 %v574, %v570
    %v747 = vpack.c.b16 %v575, %v571
    %v748 = vpack.c.b16 %v576, %v572
    %v749 = vpack.c.b16 %v581, %v577
    %v750 = vpack.c.b16 %v582, %v578
    %v751 = vpack.c.b16 %v583, %v579
    %v752 = vpack.c.b16 %v584, %v580
    %v753 = vpack.c.b16 %v589, %v585
    %v754 = vpack.c.b16 %v590, %v586
    %v755 = vpack.c.b16 %v591, %v587
    %v756 = vpack.c.b16 %v592, %v588
    %v757 = vpack.c.b16 %v597, %v593
    %v758 = vpack.c.b16 %v598, %v594
    %v759 = vpack.c.b16 %v599, %v595
    %v760 = vpack.c.b16 %v600, %v596
    %v761 = vpack.c.b16 %v605, %v601
    %v762 = vpack.c.b16 %v606, %v602
    %v763 = vpack.c.b16 %v607, %v603
    %v764 = vpack.c.b16 %v608, %v604
    %v765 = vpack.c.b16 %v613, %v609
    %v766 = vpack.c.b16 %v614, %v610
    %v767 = vpack.c.b16 %v615, %v611
    %v768 = vpack.c.b16 %v616, %v612
    %v769 = vpack.c.b16 %v621, %v617
    %v770 = vpack.c.b16 %v622, %v618
    %v771 = vpack.c.b16 %v623, %v619
    %v772 = vpack.c.b16 %v624, %v620
    %v773 = vpack.c.b16 %v629, %v625
    %v774 = vpack.c.b16 %v630, %v626
    %v775 = vpack.c.b16 %v631, %v627
    %v776 = vpack.c.b16 %v632, %v628
    %v777 = vpack.c.b16 %v637, %v633
    %v778 = vpack.c.b16 %v638, %v634
    %v779 = vpack.c.b16 %v639, %v635
    %v780 = vpack.c.b16 %v640, %v636
    %v781 = vpack.c.b16 %v645, %v641
    %v782 = vpack.c.b16 %v646, %v642
    %v783 = vpack.c.b16 %v647, %v643
    %v784 = vpack.c.b16 %v648, %v644
    %v785 = vpack.c.b16 %v653, %v649
    %v786 = vpack.c.b16 %v654, %v650
    %v787 = vpack.c.b16 %v655, %v651
    %v788 = vpack.c.b16 %v656, %v652
    %v789 = vpack.c.b16 %v661, %v657
    %v790 = vpack.c.b16 %v662, %v658
    %v791 = vpack.c.b16 %v663, %v659
    %v792 = vpack.c.b16 %v664, %v660
    %921 = vmatpush.bf16.msra.mxu0 %v693
    %922 = vmatpush.bf16.msra.mxu0 %v689
    %923 = vmatpush.bf16.msra.mxu0 %v685
    %924 = vmatpush.bf16.msra.mxu0 %v681
    %925 = vmatpush.bf16.msra.mxu0 %v677
    %926 = vmatpush.bf16.msra.mxu0 %v673
    %927 = vmatpush.bf16.msra.mxu0 %v669
    %928 = vmatpush.bf16.msra.mxu0 %v665
    %929 = vmatmul.bf16.gmra.mxu0 %v139
    %v930 = vpop.f32.mrf.mxu0
    %v931 = vadd.f32 %v273, %v930
    %v932 = vpop.f32.mrf.mxu0
    %933 = vdwg.mxu0
    %934 = vmatpush.bf16.msra.mxu0 %v725
    %935 = vmatpush.bf16.msra.mxu0 %v721
    %936 = vmatpush.bf16.msra.mxu0 %v717
    %937 = vmatpush.bf16.msra.mxu0 %v713
    %938 = vmatpush.bf16.msra.mxu0 %v709
    %939 = vmatpush.bf16.msra.mxu0 %v705
    %940 = vmatpush.bf16.msra.mxu0 %v701
    %941 = vmatpush.bf16.msra.mxu0 %v697
    %942 = vmatmul.bf16.gmra.mxu0 %v140
    %v943 = vpop.f32.mrf.mxu0
    %v944 = vadd.f32 %v931, %v943
    %v945 = vpop.f32.mrf.mxu0
    %946 = vdwg.mxu0
    %947 = vmatpush.bf16.msra.mxu0 %v757
    %948 = vmatpush.bf16.msra.mxu0 %v753
    %949 = vmatpush.bf16.msra.mxu0 %v749
    %950 = vmatpush.bf16.msra.mxu0 %v745
    %951 = vmatpush.bf16.msra.mxu0 %v741
    %952 = vmatpush.bf16.msra.mxu0 %v737
    %953 = vmatpush.bf16.msra.mxu0 %v733
    %954 = vmatpush.bf16.msra.mxu0 %v729
    %955 = vmatmul.bf16.gmra.mxu0 %v141
    %v956 = vpop.f32.mrf.mxu0
    %v957 = vadd.f32 %v944, %v956
    %v958 = vpop.f32.mrf.mxu0
    %959 = vdwg.mxu0
    %960 = vmatpush.bf16.msra.mxu0 %v789
    %961 = vmatpush.bf16.msra.mxu0 %v785
    %962 = vmatpush.bf16.msra.mxu0 %v781
    %963 = vmatpush.bf16.msra.mxu0 %v777
    %964 = vmatpush.bf16.msra.mxu0 %v773
    %965 = vmatpush.bf16.msra.mxu0 %v769
    %966 = vmatpush.bf16.msra.mxu0 %v765
    %967 = vmatpush.bf16.msra.mxu0 %v761
    %968 = vmatmul.bf16.gmra.mxu0 %v142
    %v969 = vpop.f32.mrf.mxu0
    %v970 = vadd.f32 %v957, %v969
    %v971 = vpop.f32.mrf.mxu0
    %972 = vdwg.mxu0
    %973 = vmatpush.bf16.msra.mxu0 %v694
    %974 = vmatpush.bf16.msra.mxu0 %v690
    %975 = vmatpush.bf16.msra.mxu0 %v686
    %976 = vmatpush.bf16.msra.mxu0 %v682
    %977 = vmatpush.bf16.msra.mxu0 %v678
    %978 = vmatpush.bf16.msra.mxu0 %v674
    %979 = vmatpush.bf16.msra.mxu0 %v670
    %980 = vmatpush.bf16.msra.mxu0 %v666
    %981 = vmatmul.bf16.gmra.mxu0 %v139
    %v982 = vpop.f32.mrf.mxu0
    %v983 = vadd.f32 %v274, %v982
    %v984 = vpop.f32.mrf.mxu0
    %985 = vdwg.mxu0
    %986 = vmatpush.bf16.msra.mxu0 %v726
    %987 = vmatpush.bf16.msra.mxu0 %v722
    %988 = vmatpush.bf16.msra.mxu0 %v718
    %989 = vmatpush.bf16.msra.mxu0 %v714
    %990 = vmatpush.bf16.msra.mxu0 %v710
    %991 = vmatpush.bf16.msra.mxu0 %v706
    %992 = vmatpush.bf16.msra.mxu0 %v702
    %993 = vmatpush.bf16.msra.mxu0 %v698
    %994 = vmatmul.bf16.gmra.mxu0 %v140
    %v995 = vpop.f32.mrf.mxu0
    %v996 = vadd.f32 %v983, %v995
    %v997 = vpop.f32.mrf.mxu0
    %998 = vdwg.mxu0
    %999 = vmatpush.bf16.msra.mxu0 %v758
    %1000 = vmatpush.bf16.msra.mxu0 %v754
    %1001 = vmatpush.bf16.msra.mxu0 %v750
    %1002 = vmatpush.bf16.msra.mxu0 %v746
    %1003 = vmatpush.bf16.msra.mxu0 %v742
    %1004 = vmatpush.bf16.msra.mxu0 %v738
    %1005 = vmatpush.bf16.msra.mxu0 %v734
    %1006 = vmatpush.bf16.msra.mxu0 %v730
    %1007 = vmatmul.bf16.gmra.mxu0 %v141
    %v1008 = vpop.f32.mrf.mxu0
    %v1009 = vadd.f32 %v996, %v1008
    %v1010 = vpop.f32.mrf.mxu0
    %1011 = vdwg.mxu0
    %1012 = vmatpush.bf16.msra.mxu0 %v790
    %1013 = vmatpush.bf16.msra.mxu0 %v786
    %1014 = vmatpush.bf16.msra.mxu0 %v782
    %1015 = vmatpush.bf16.msra.mxu0 %v778
    %1016 = vmatpush.bf16.msra.mxu0 %v774
    %1017 = vmatpush.bf16.msra.mxu0 %v770
    %1018 = vmatpush.bf16.msra.mxu0 %v766
    %1019 = vmatpush.bf16.msra.mxu0 %v762
    %1020 = vmatmul.bf16.gmra.mxu0 %v142
    %v1021 = vpop.f32.mrf.mxu0
    %v1022 = vadd.f32 %v1009, %v1021
    %v1023 = vpop.f32.mrf.mxu0
    %1024 = vdwg.mxu0
    %1025 = vmatpush.bf16.msra.mxu0 %v695
    %1026 = vmatpush.bf16.msra.mxu0 %v691
    %1027 = vmatpush.bf16.msra.mxu0 %v687
    %1028 = vmatpush.bf16.msra.mxu0 %v683
    %1029 = vmatpush.bf16.msra.mxu0 %v679
    %1030 = vmatpush.bf16.msra.mxu0 %v675
    %1031 = vmatpush.bf16.msra.mxu0 %v671
    %1032 = vmatpush.bf16.msra.mxu0 %v667
    %1033 = vmatmul.bf16.gmra.mxu0 %v139
    %v1034 = vpop.f32.mrf.mxu0
    %v1035 = vadd.f32 %v275, %v1034
    %v1036 = vpop.f32.mrf.mxu0
    %1037 = vdwg.mxu0
    %1038 = vmatpush.bf16.msra.mxu0 %v727
    %1039 = vmatpush.bf16.msra.mxu0 %v723
    %1040 = vmatpush.bf16.msra.mxu0 %v719
    %1041 = vmatpush.bf16.msra.mxu0 %v715
    %1042 = vmatpush.bf16.msra.mxu0 %v711
    %1043 = vmatpush.bf16.msra.mxu0 %v707
    %1044 = vmatpush.bf16.msra.mxu0 %v703
    %1045 = vmatpush.bf16.msra.mxu0 %v699
    %1046 = vmatmul.bf16.gmra.mxu0 %v140
    %v1047 = vpop.f32.mrf.mxu0
    %v1048 = vadd.f32 %v1035, %v1047
    %v1049 = vpop.f32.mrf.mxu0
    %1050 = vdwg.mxu0
    %1051 = vmatpush.bf16.msra.mxu0 %v759
    %1052 = vmatpush.bf16.msra.mxu0 %v755
    %1053 = vmatpush.bf16.msra.mxu0 %v751
    %1054 = vmatpush.bf16.msra.mxu0 %v747
    %1055 = vmatpush.bf16.msra.mxu0 %v743
    %1056 = vmatpush.bf16.msra.mxu0 %v739
    %1057 = vmatpush.bf16.msra.mxu0 %v735
    %1058 = vmatpush.bf16.msra.mxu0 %v731
    %1059 = vmatmul.bf16.gmra.mxu0 %v141
    %v1060 = vpop.f32.mrf.mxu0
    %v1061 = vadd.f32 %v1048, %v1060
    %v1062 = vpop.f32.mrf.mxu0
    %1063 = vdwg.mxu0
    %1064 = vmatpush.bf16.msra.mxu0 %v791
    %1065 = vmatpush.bf16.msra.mxu0 %v787
    %1066 = vmatpush.bf16.msra.mxu0 %v783
    %1067 = vmatpush.bf16.msra.mxu0 %v779
    %1068 = vmatpush.bf16.msra.mxu0 %v775
    %1069 = vmatpush.bf16.msra.mxu0 %v771
    %1070 = vmatpush.bf16.msra.mxu0 %v767
    %1071 = vmatpush.bf16.msra.mxu0 %v763
    %1072 = vmatmul.bf16.gmra.mxu0 %v142
    %v1073 = vpop.f32.mrf.mxu0
    %v1074 = vadd.f32 %v1061, %v1073
    %v1075 = vpop.f32.mrf.mxu0
    %1076 = vdwg.mxu0
    %1077 = vmatpush.bf16.msra.mxu0 %v696
    %1078 = vmatpush.bf16.msra.mxu0 %v692
    %1079 = vmatpush.bf16.msra.mxu0 %v688
    %1080 = vmatpush.bf16.msra.mxu0 %v684
    %1081 = vmatpush.bf16.msra.mxu0 %v680
    %1082 = vmatpush.bf16.msra.mxu0 %v676
    %1083 = vmatpush.bf16.msra.mxu0 %v672
    %1084 = vmatpush.bf16.msra.mxu0 %v668
    %1085 = vmatmul.bf16.gmra.mxu0 %v139
    %v1086 = vpop.f32.mrf.mxu0
    %v1087 = vadd.f32 %v276, %v1086
    %v1088 = vpop.f32.mrf.mxu0
    %1089 = vdwg.mxu0
    %1090 = vmatpush.bf16.msra.mxu0 %v728
    %1091 = vmatpush.bf16.msra.mxu0 %v724
    %1092 = vmatpush.bf16.msra.mxu0 %v720
    %1093 = vmatpush.bf16.msra.mxu0 %v716
    %1094 = vmatpush.bf16.msra.mxu0 %v712
    %1095 = vmatpush.bf16.msra.mxu0 %v708
    %1096 = vmatpush.bf16.msra.mxu0 %v704
    %1097 = vmatpush.bf16.msra.mxu0 %v700
    %1098 = vmatmul.bf16.gmra.mxu0 %v140
    %v1099 = vpop.f32.mrf.mxu0
    %v1100 = vadd.f32 %v1087, %v1099
    %v1101 = vpop.f32.mrf.mxu0
    %1102 = vdwg.mxu0
    %1103 = vmatpush.bf16.msra.mxu0 %v760
    %1104 = vmatpush.bf16.msra.mxu0 %v756
    %1105 = vmatpush.bf16.msra.mxu0 %v752
    %1106 = vmatpush.bf16.msra.mxu0 %v748
    %1107 = vmatpush.bf16.msra.mxu0 %v744
    %1108 = vmatpush.bf16.msra.mxu0 %v740
    %1109 = vmatpush.bf16.msra.mxu0 %v736
    %1110 = vmatpush.bf16.msra.mxu0 %v732
    %1111 = vmatmul.bf16.gmra.mxu0 %v141
    %v1112 = vpop.f32.mrf.mxu0
    %v1113 = vadd.f32 %v1100, %v1112
    %v1114 = vpop.f32.mrf.mxu0
    %1115 = vdwg.mxu0
    %1116 = vmatpush.bf16.msra.mxu0 %v792
    %1117 = vmatpush.bf16.msra.mxu0 %v788
    %1118 = vmatpush.bf16.msra.mxu0 %v784
    %1119 = vmatpush.bf16.msra.mxu0 %v780
    %1120 = vmatpush.bf16.msra.mxu0 %v776
    %1121 = vmatpush.bf16.msra.mxu0 %v772
    %1122 = vmatpush.bf16.msra.mxu0 %v768
    %1123 = vmatpush.bf16.msra.mxu0 %v764
    %1124 = vmatmul.bf16.gmra.mxu0 %v142
    %v1125 = vpop.f32.mrf.mxu0
    %v1126 = vadd.f32 %v1113, %v1125
    %v1127 = vpop.f32.mrf.mxu0
    %1128 = vdwg.mxu0
    %vm1129 = vcmp.gt.f32.partialorder %v970, 0.0
    %vm1130 = vcmp.gt.f32.partialorder %v1022, 0.0
    %vm1131 = vcmp.gt.f32.partialorder %v1074, 0.0
    %vm1132 = vcmp.gt.f32.partialorder %v1126, 0.0
    %v1133 = vmul.f32 %v970, 0.2
    %v1134 = vmul.f32 %v1022, 0.2
    %v1135 = vmul.f32 %v1074, 0.2
    %v1136 = vmul.f32 %v1126, 0.2
    %v1137 = vsel %vm1129, %v970, %v1133
    %v1138 = vsel %vm1130, %v1022, %v1134
    %v1139 = vsel %vm1131, %v1074, %v1135
    %v1140 = vsel %vm1132, %v1126, %v1136
    %v1141 = vpack.c.bf16 %v1137, %v1137
    %v1142 = vpack.c.bf16 %v1138, %v1138
    %v1143 = vpack.c.bf16 %v1139, %v1139
    %v1144 = vpack.c.bf16 %v1140, %v1140
    %v1145 = vld [vmem:[#allocation7] sm:$0xff]
    %v1146 = vld [vmem:[#allocation7 + $0x8] sm:$0xff]
    %v1147 = vld [vmem:[#allocation7 + $0x10] sm:$0xff]
    %v1148 = vld [vmem:[#allocation7 + $0x18] sm:$0xff]
    %v1149 = vld [vmem:[#allocation7 + $0x20] sm:$0xff]
    %v1150 = vld [vmem:[#allocation7 + $0x28] sm:$0xff]
    %v1151 = vld [vmem:[#allocation7 + $0x30] sm:$0xff]
    %v1152 = vld [vmem:[#allocation7 + $0x38] sm:$0xff]
    %v1153 = vld [vmem:[#allocation7 + $0x40] sm:$0xff]
    %v1154 = vld [vmem:[#allocation7 + $0x48] sm:$0xff]
    %v1155 = vld [vmem:[#allocation7 + $0x50] sm:$0xff]
    %v1156 = vld [vmem:[#allocation7 + $0x58] sm:$0xff]
    %v1157 = vld [vmem:[#allocation7 + $0x60] sm:$0xff]
    %v1158 = vld [vmem:[#allocation7 + $0x68] sm:$0xff]
    %v1159 = vld [vmem:[#allocation7 + $0x70] sm:$0xff]
    %v1160 = vld [vmem:[#allocation7 + $0x78] sm:$0xff]
    %v1161 = vld [vmem:[#allocation7 + $0x80] sm:$0xff]
    %v1162 = vld [vmem:[#allocation7 + $0x88] sm:$0xff]
    %v1163 = vld [vmem:[#allocation7 + $0x90] sm:$0xff]
    %v1164 = vld [vmem:[#allocation7 + $0x98] sm:$0xff]
    %v1165 = vld [vmem:[#allocation7 + $0xa0] sm:$0xff]
    %v1166 = vld [vmem:[#allocation7 + $0xa8] sm:$0xff]
    %v1167 = vld [vmem:[#allocation7 + $0xb0] sm:$0xff]
    %v1168 = vld [vmem:[#allocation7 + $0xb8] sm:$0xff]
    %v1169 = vld [vmem:[#allocation7 + $0xc0] sm:$0xff]
    %v1170 = vld [vmem:[#allocation7 + $0xc8] sm:$0xff]
    %v1171 = vld [vmem:[#allocation7 + $0xd0] sm:$0xff]
    %v1172 = vld [vmem:[#allocation7 + $0xd8] sm:$0xff]
    %v1173 = vld [vmem:[#allocation7 + $0xe0] sm:$0xff]
    %v1174 = vld [vmem:[#allocation7 + $0xe8] sm:$0xff]
    %v1175 = vld [vmem:[#allocation7 + $0xf0] sm:$0xff]
    %v1176 = vld [vmem:[#allocation7 + $0xf8] sm:$0xff]
    %v1177 = vld [vmem:[#allocation7 + $0x100] sm:$0xff]
    %v1178 = vld [vmem:[#allocation7 + $0x108] sm:$0xff]
    %v1179 = vld [vmem:[#allocation7 + $0x110] sm:$0xff]
    %v1180 = vld [vmem:[#allocation7 + $0x118] sm:$0xff]
    %v1181 = vld [vmem:[#allocation7 + $0x120] sm:$0xff]
    %v1182 = vld [vmem:[#allocation7 + $0x128] sm:$0xff]
    %v1183 = vld [vmem:[#allocation7 + $0x130] sm:$0xff]
    %v1184 = vld [vmem:[#allocation7 + $0x138] sm:$0xff]
    %v1185 = vld [vmem:[#allocation7 + $0x140] sm:$0xff]
    %v1186 = vld [vmem:[#allocation7 + $0x148] sm:$0xff]
    %v1187 = vld [vmem:[#allocation7 + $0x150] sm:$0xff]
    %v1188 = vld [vmem:[#allocation7 + $0x158] sm:$0xff]
    %v1189 = vld [vmem:[#allocation7 + $0x160] sm:$0xff]
    %v1190 = vld [vmem:[#allocation7 + $0x168] sm:$0xff]
    %v1191 = vld [vmem:[#allocation7 + $0x170] sm:$0xff]
    %v1192 = vld [vmem:[#allocation7 + $0x178] sm:$0xff]
    %v1193 = vld [vmem:[#allocation7 + $0x180] sm:$0xff]
    %v1194 = vld [vmem:[#allocation7 + $0x188] sm:$0xff]
    %v1195 = vld [vmem:[#allocation7 + $0x190] sm:$0xff]
    %v1196 = vld [vmem:[#allocation7 + $0x198] sm:$0xff]
    %v1197 = vld [vmem:[#allocation7 + $0x1a0] sm:$0xff]
    %v1198 = vld [vmem:[#allocation7 + $0x1a8] sm:$0xff]
    %v1199 = vld [vmem:[#allocation7 + $0x1b0] sm:$0xff]
    %v1200 = vld [vmem:[#allocation7 + $0x1b8] sm:$0xff]
    %v1201 = vld [vmem:[#allocation7 + $0x1c0] sm:$0xff]
    %v1202 = vld [vmem:[#allocation7 + $0x1c8] sm:$0xff]
    %v1203 = vld [vmem:[#allocation7 + $0x1d0] sm:$0xff]
    %v1204 = vld [vmem:[#allocation7 + $0x1d8] sm:$0xff]
    %v1205 = vld [vmem:[#allocation7 + $0x1e0] sm:$0xff]
    %v1206 = vld [vmem:[#allocation7 + $0x1e8] sm:$0xff]
    %v1207 = vld [vmem:[#allocation7 + $0x1f0] sm:$0xff]
    %v1208 = vld [vmem:[#allocation7 + $0x1f8] sm:$0xff]
    %v1209 = vld [vmem:[#allocation7 + $0x200] sm:$0xff]
    %v1210 = vld [vmem:[#allocation7 + $0x208] sm:$0xff]
    %v1211 = vld [vmem:[#allocation7 + $0x210] sm:$0xff]
    %v1212 = vld [vmem:[#allocation7 + $0x218] sm:$0xff]
    %v1213 = vld [vmem:[#allocation7 + $0x220] sm:$0xff]
    %v1214 = vld [vmem:[#allocation7 + $0x228] sm:$0xff]
    %v1215 = vld [vmem:[#allocation7 + $0x230] sm:$0xff]
    %v1216 = vld [vmem:[#allocation7 + $0x238] sm:$0xff]
    %v1217 = vld [vmem:[#allocation7 + $0x240] sm:$0xff]
    %v1218 = vld [vmem:[#allocation7 + $0x248] sm:$0xff]
    %v1219 = vld [vmem:[#allocation7 + $0x250] sm:$0xff]
    %v1220 = vld [vmem:[#allocation7 + $0x258] sm:$0xff]
    %v1221 = vld [vmem:[#allocation7 + $0x260] sm:$0xff]
    %v1222 = vld [vmem:[#allocation7 + $0x268] sm:$0xff]
    %v1223 = vld [vmem:[#allocation7 + $0x270] sm:$0xff]
    %v1224 = vld [vmem:[#allocation7 + $0x278] sm:$0xff]
    %v1225 = vld [vmem:[#allocation7 + $0x280] sm:$0xff]
    %v1226 = vld [vmem:[#allocation7 + $0x288] sm:$0xff]
    %v1227 = vld [vmem:[#allocation7 + $0x290] sm:$0xff]
    %v1228 = vld [vmem:[#allocation7 + $0x298] sm:$0xff]
    %v1229 = vld [vmem:[#allocation7 + $0x2a0] sm:$0xff]
    %v1230 = vld [vmem:[#allocation7 + $0x2a8] sm:$0xff]
    %v1231 = vld [vmem:[#allocation7 + $0x2b0] sm:$0xff]
    %v1232 = vld [vmem:[#allocation7 + $0x2b8] sm:$0xff]
    %v1233 = vld [vmem:[#allocation7 + $0x2c0] sm:$0xff]
    %v1234 = vld [vmem:[#allocation7 + $0x2c8] sm:$0xff]
    %v1235 = vld [vmem:[#allocation7 + $0x2d0] sm:$0xff]
    %v1236 = vld [vmem:[#allocation7 + $0x2d8] sm:$0xff]
    %v1237 = vld [vmem:[#allocation7 + $0x2e0] sm:$0xff]
    %v1238 = vld [vmem:[#allocation7 + $0x2e8] sm:$0xff]
    %v1239 = vld [vmem:[#allocation7 + $0x2f0] sm:$0xff]
    %v1240 = vld [vmem:[#allocation7 + $0x2f8] sm:$0xff]
    %v1241 = vld [vmem:[#allocation7 + $0x300] sm:$0xff]
    %v1242 = vld [vmem:[#allocation7 + $0x308] sm:$0xff]
    %v1243 = vld [vmem:[#allocation7 + $0x310] sm:$0xff]
    %v1244 = vld [vmem:[#allocation7 + $0x318] sm:$0xff]
    %v1245 = vld [vmem:[#allocation7 + $0x320] sm:$0xff]
    %v1246 = vld [vmem:[#allocation7 + $0x328] sm:$0xff]
    %v1247 = vld [vmem:[#allocation7 + $0x330] sm:$0xff]
    %v1248 = vld [vmem:[#allocation7 + $0x338] sm:$0xff]
    %v1249 = vld [vmem:[#allocation7 + $0x340] sm:$0xff]
    %v1250 = vld [vmem:[#allocation7 + $0x348] sm:$0xff]
    %v1251 = vld [vmem:[#allocation7 + $0x350] sm:$0xff]
    %v1252 = vld [vmem:[#allocation7 + $0x358] sm:$0xff]
    %v1253 = vld [vmem:[#allocation7 + $0x360] sm:$0xff]
    %v1254 = vld [vmem:[#allocation7 + $0x368] sm:$0xff]
    %v1255 = vld [vmem:[#allocation7 + $0x370] sm:$0xff]
    %v1256 = vld [vmem:[#allocation7 + $0x378] sm:$0xff]
    %v1257 = vld [vmem:[#allocation7 + $0x380] sm:$0xff]
    %v1258 = vld [vmem:[#allocation7 + $0x388] sm:$0xff]
    %v1259 = vld [vmem:[#allocation7 + $0x390] sm:$0xff]
    %v1260 = vld [vmem:[#allocation7 + $0x398] sm:$0xff]
    %v1261 = vld [vmem:[#allocation7 + $0x3a0] sm:$0xff]
    %v1262 = vld [vmem:[#allocation7 + $0x3a8] sm:$0xff]
    %v1263 = vld [vmem:[#allocation7 + $0x3b0] sm:$0xff]
    %v1264 = vld [vmem:[#allocation7 + $0x3b8] sm:$0xff]
    %v1265 = vld [vmem:[#allocation7 + $0x3c0] sm:$0xff]
    %v1266 = vld [vmem:[#allocation7 + $0x3c8] sm:$0xff]
    %v1267 = vld [vmem:[#allocation7 + $0x3d0] sm:$0xff]
    %v1268 = vld [vmem:[#allocation7 + $0x3d8] sm:$0xff]
    %v1269 = vld [vmem:[#allocation7 + $0x3e0] sm:$0xff]
    %v1270 = vld [vmem:[#allocation7 + $0x3e8] sm:$0xff]
    %v1271 = vld [vmem:[#allocation7 + $0x3f0] sm:$0xff]
    %v1272 = vld [vmem:[#allocation7 + $0x3f8] sm:$0xff]
    %v1273 = vld [vmem:[#allocation8] sm:$0xf]
    %v1275 = vperm.slane %v1273, 0
    %v1276 = vperm.slane %v1273, 1
    %v1277 = vperm.slane %v1273, 2
    %v1278 = vperm.slane %v1273, 3
    %v1411 = vunpack.c.l.b16 %v1145
    %v1412 = vunpack.c.h.b16 %v1145
    %v1413 = vunpack.c.l.b16 %v1146
    %v1414 = vunpack.c.h.b16 %v1146
    %v1415 = vunpack.c.l.b16 %v1147
    %v1416 = vunpack.c.h.b16 %v1147
    %v1417 = vunpack.c.l.b16 %v1148
    %v1418 = vunpack.c.h.b16 %v1148
    %v1419 = vunpack.c.l.b16 %v1149
    %v1420 = vunpack.c.h.b16 %v1149
    %v1421 = vunpack.c.l.b16 %v1150
    %v1422 = vunpack.c.h.b16 %v1150
    %v1423 = vunpack.c.l.b16 %v1151
    %v1424 = vunpack.c.h.b16 %v1151
    %v1425 = vunpack.c.l.b16 %v1152
    %v1426 = vunpack.c.h.b16 %v1152
    %v1427 = vunpack.c.l.b16 %v1153
    %v1428 = vunpack.c.h.b16 %v1153
    %v1429 = vunpack.c.l.b16 %v1154
    %v1430 = vunpack.c.h.b16 %v1154
    %v1431 = vunpack.c.l.b16 %v1155
    %v1432 = vunpack.c.h.b16 %v1155
    %v1433 = vunpack.c.l.b16 %v1156
    %v1434 = vunpack.c.h.b16 %v1156
    %v1435 = vunpack.c.l.b16 %v1157
    %v1436 = vunpack.c.h.b16 %v1157
    %v1437 = vunpack.c.l.b16 %v1158
    %v1438 = vunpack.c.h.b16 %v1158
    %v1439 = vunpack.c.l.b16 %v1159
    %v1440 = vunpack.c.h.b16 %v1159
    %v1441 = vunpack.c.l.b16 %v1160
    %v1442 = vunpack.c.h.b16 %v1160
    %v1443 = vunpack.c.l.b16 %v1161
    %v1444 = vunpack.c.h.b16 %v1161
    %v1445 = vunpack.c.l.b16 %v1162
    %v1446 = vunpack.c.h.b16 %v1162
    %v1447 = vunpack.c.l.b16 %v1163
    %v1448 = vunpack.c.h.b16 %v1163
    %v1449 = vunpack.c.l.b16 %v1164
    %v1450 = vunpack.c.h.b16 %v1164
    %v1451 = vunpack.c.l.b16 %v1165
    %v1452 = vunpack.c.h.b16 %v1165
    %v1453 = vunpack.c.l.b16 %v1166
    %v1454 = vunpack.c.h.b16 %v1166
    %v1455 = vunpack.c.l.b16 %v1167
    %v1456 = vunpack.c.h.b16 %v1167
    %v1457 = vunpack.c.l.b16 %v1168
    %v1458 = vunpack.c.h.b16 %v1168
    %v1459 = vunpack.c.l.b16 %v1169
    %v1460 = vunpack.c.h.b16 %v1169
    %v1461 = vunpack.c.l.b16 %v1170
    %v1462 = vunpack.c.h.b16 %v1170
    %v1463 = vunpack.c.l.b16 %v1171
    %v1464 = vunpack.c.h.b16 %v1171
    %v1465 = vunpack.c.l.b16 %v1172
    %v1466 = vunpack.c.h.b16 %v1172
    %v1467 = vunpack.c.l.b16 %v1173
    %v1468 = vunpack.c.h.b16 %v1173
    %v1469 = vunpack.c.l.b16 %v1174
    %v1470 = vunpack.c.h.b16 %v1174
    %v1471 = vunpack.c.l.b16 %v1175
    %v1472 = vunpack.c.h.b16 %v1175
    %v1473 = vunpack.c.l.b16 %v1176
    %v1474 = vunpack.c.h.b16 %v1176
    %v1475 = vunpack.c.l.b16 %v1177
    %v1476 = vunpack.c.h.b16 %v1177
    %v1477 = vunpack.c.l.b16 %v1178
    %v1478 = vunpack.c.h.b16 %v1178
    %v1479 = vunpack.c.l.b16 %v1179
    %v1480 = vunpack.c.h.b16 %v1179
    %v1481 = vunpack.c.l.b16 %v1180
    %v1482 = vunpack.c.h.b16 %v1180
    %v1483 = vunpack.c.l.b16 %v1181
    %v1484 = vunpack.c.h.b16 %v1181
    %v1485 = vunpack.c.l.b16 %v1182
    %v1486 = vunpack.c.h.b16 %v1182
    %v1487 = vunpack.c.l.b16 %v1183
    %v1488 = vunpack.c.h.b16 %v1183
    %v1489 = vunpack.c.l.b16 %v1184
    %v1490 = vunpack.c.h.b16 %v1184
    %v1491 = vunpack.c.l.b16 %v1185
    %v1492 = vunpack.c.h.b16 %v1185
    %v1493 = vunpack.c.l.b16 %v1186
    %v1494 = vunpack.c.h.b16 %v1186
    %v1495 = vunpack.c.l.b16 %v1187
    %v1496 = vunpack.c.h.b16 %v1187
    %v1497 = vunpack.c.l.b16 %v1188
    %v1498 = vunpack.c.h.b16 %v1188
    %v1499 = vunpack.c.l.b16 %v1189
    %v1500 = vunpack.c.h.b16 %v1189
    %v1501 = vunpack.c.l.b16 %v1190
    %v1502 = vunpack.c.h.b16 %v1190
    %v1503 = vunpack.c.l.b16 %v1191
    %v1504 = vunpack.c.h.b16 %v1191
    %v1505 = vunpack.c.l.b16 %v1192
    %v1506 = vunpack.c.h.b16 %v1192
    %v1507 = vunpack.c.l.b16 %v1193
    %v1508 = vunpack.c.h.b16 %v1193
    %v1509 = vunpack.c.l.b16 %v1194
    %v1510 = vunpack.c.h.b16 %v1194
    %v1511 = vunpack.c.l.b16 %v1195
    %v1512 = vunpack.c.h.b16 %v1195
    %v1513 = vunpack.c.l.b16 %v1196
    %v1514 = vunpack.c.h.b16 %v1196
    %v1515 = vunpack.c.l.b16 %v1197
    %v1516 = vunpack.c.h.b16 %v1197
    %v1517 = vunpack.c.l.b16 %v1198
    %v1518 = vunpack.c.h.b16 %v1198
    %v1519 = vunpack.c.l.b16 %v1199
    %v1520 = vunpack.c.h.b16 %v1199
    %v1521 = vunpack.c.l.b16 %v1200
    %v1522 = vunpack.c.h.b16 %v1200
    %v1523 = vunpack.c.l.b16 %v1201
    %v1524 = vunpack.c.h.b16 %v1201
    %v1525 = vunpack.c.l.b16 %v1202
    %v1526 = vunpack.c.h.b16 %v1202
    %v1527 = vunpack.c.l.b16 %v1203
    %v1528 = vunpack.c.h.b16 %v1203
    %v1529 = vunpack.c.l.b16 %v1204
    %v1530 = vunpack.c.h.b16 %v1204
    %v1531 = vunpack.c.l.b16 %v1205
    %v1532 = vunpack.c.h.b16 %v1205
    %v1533 = vunpack.c.l.b16 %v1206
    %v1534 = vunpack.c.h.b16 %v1206
    %v1535 = vunpack.c.l.b16 %v1207
    %v1536 = vunpack.c.h.b16 %v1207
    %v1537 = vunpack.c.l.b16 %v1208
    %v1538 = vunpack.c.h.b16 %v1208
    %v1539 = vunpack.c.l.b16 %v1209
    %v1540 = vunpack.c.h.b16 %v1209
    %v1541 = vunpack.c.l.b16 %v1210
    %v1542 = vunpack.c.h.b16 %v1210
    %v1543 = vunpack.c.l.b16 %v1211
    %v1544 = vunpack.c.h.b16 %v1211
    %v1545 = vunpack.c.l.b16 %v1212
    %v1546 = vunpack.c.h.b16 %v1212
    %v1547 = vunpack.c.l.b16 %v1213
    %v1548 = vunpack.c.h.b16 %v1213
    %v1549 = vunpack.c.l.b16 %v1214
    %v1550 = vunpack.c.h.b16 %v1214
    %v1551 = vunpack.c.l.b16 %v1215
    %v1552 = vunpack.c.h.b16 %v1215
    %v1553 = vunpack.c.l.b16 %v1216
    %v1554 = vunpack.c.h.b16 %v1216
    %v1555 = vunpack.c.l.b16 %v1217
    %v1556 = vunpack.c.h.b16 %v1217
    %v1557 = vunpack.c.l.b16 %v1218
    %v1558 = vunpack.c.h.b16 %v1218
    %v1559 = vunpack.c.l.b16 %v1219
    %v1560 = vunpack.c.h.b16 %v1219
    %v1561 = vunpack.c.l.b16 %v1220
    %v1562 = vunpack.c.h.b16 %v1220
    %v1563 = vunpack.c.l.b16 %v1221
    %v1564 = vunpack.c.h.b16 %v1221
    %v1565 = vunpack.c.l.b16 %v1222
    %v1566 = vunpack.c.h.b16 %v1222
    %v1567 = vunpack.c.l.b16 %v1223
    %v1568 = vunpack.c.h.b16 %v1223
    %v1569 = vunpack.c.l.b16 %v1224
    %v1570 = vunpack.c.h.b16 %v1224
    %v1571 = vunpack.c.l.b16 %v1225
    %v1572 = vunpack.c.h.b16 %v1225
    %v1573 = vunpack.c.l.b16 %v1226
    %v1574 = vunpack.c.h.b16 %v1226
    %v1575 = vunpack.c.l.b16 %v1227
    %v1576 = vunpack.c.h.b16 %v1227
    %v1577 = vunpack.c.l.b16 %v1228
    %v1578 = vunpack.c.h.b16 %v1228
    %v1579 = vunpack.c.l.b16 %v1229
    %v1580 = vunpack.c.h.b16 %v1229
    %v1581 = vunpack.c.l.b16 %v1230
    %v1582 = vunpack.c.h.b16 %v1230
    %v1583 = vunpack.c.l.b16 %v1231
    %v1584 = vunpack.c.h.b16 %v1231
    %v1585 = vunpack.c.l.b16 %v1232
    %v1586 = vunpack.c.h.b16 %v1232
    %v1587 = vunpack.c.l.b16 %v1233
    %v1588 = vunpack.c.h.b16 %v1233
    %v1589 = vunpack.c.l.b16 %v1234
    %v1590 = vunpack.c.h.b16 %v1234
    %v1591 = vunpack.c.l.b16 %v1235
    %v1592 = vunpack.c.h.b16 %v1235
    %v1593 = vunpack.c.l.b16 %v1236
    %v1594 = vunpack.c.h.b16 %v1236
    %v1595 = vunpack.c.l.b16 %v1237
    %v1596 = vunpack.c.h.b16 %v1237
    %v1597 = vunpack.c.l.b16 %v1238
    %v1598 = vunpack.c.h.b16 %v1238
    %v1599 = vunpack.c.l.b16 %v1239
    %v1600 = vunpack.c.h.b16 %v1239
    %v1601 = vunpack.c.l.b16 %v1240
    %v1602 = vunpack.c.h.b16 %v1240
    %v1603 = vunpack.c.l.b16 %v1241
    %v1604 = vunpack.c.h.b16 %v1241
    %v1605 = vunpack.c.l.b16 %v1242
    %v1606 = vunpack.c.h.b16 %v1242
    %v1607 = vunpack.c.l.b16 %v1243
    %v1608 = vunpack.c.h.b16 %v1243
    %v1609 = vunpack.c.l.b16 %v1244
    %v1610 = vunpack.c.h.b16 %v1244
    %v1611 = vunpack.c.l.b16 %v1245
    %v1612 = vunpack.c.h.b16 %v1245
    %v1613 = vunpack.c.l.b16 %v1246
    %v1614 = vunpack.c.h.b16 %v1246
    %v1615 = vunpack.c.l.b16 %v1247
    %v1616 = vunpack.c.h.b16 %v1247
    %v1617 = vunpack.c.l.b16 %v1248
    %v1618 = vunpack.c.h.b16 %v1248
    %v1619 = vunpack.c.l.b16 %v1249
    %v1620 = vunpack.c.h.b16 %v1249
    %v1621 = vunpack.c.l.b16 %v1250
    %v1622 = vunpack.c.h.b16 %v1250
    %v1623 = vunpack.c.l.b16 %v1251
    %v1624 = vunpack.c.h.b16 %v1251
    %v1625 = vunpack.c.l.b16 %v1252
    %v1626 = vunpack.c.h.b16 %v1252
    %v1627 = vunpack.c.l.b16 %v1253
    %v1628 = vunpack.c.h.b16 %v1253
    %v1629 = vunpack.c.l.b16 %v1254
    %v1630 = vunpack.c.h.b16 %v1254
    %v1631 = vunpack.c.l.b16 %v1255
    %v1632 = vunpack.c.h.b16 %v1255
    %v1633 = vunpack.c.l.b16 %v1256
    %v1634 = vunpack.c.h.b16 %v1256
    %v1635 = vunpack.c.l.b16 %v1257
    %v1636 = vunpack.c.h.b16 %v1257
    %v1637 = vunpack.c.l.b16 %v1258
    %v1638 = vunpack.c.h.b16 %v1258
    %v1639 = vunpack.c.l.b16 %v1259
    %v1640 = vunpack.c.h.b16 %v1259
    %v1641 = vunpack.c.l.b16 %v1260
    %v1642 = vunpack.c.h.b16 %v1260
    %v1643 = vunpack.c.l.b16 %v1261
    %v1644 = vunpack.c.h.b16 %v1261
    %v1645 = vunpack.c.l.b16 %v1262
    %v1646 = vunpack.c.h.b16 %v1262
    %v1647 = vunpack.c.l.b16 %v1263
    %v1648 = vunpack.c.h.b16 %v1263
    %v1649 = vunpack.c.l.b16 %v1264
    %v1650 = vunpack.c.h.b16 %v1264
    %v1651 = vunpack.c.l.b16 %v1265
    %v1652 = vunpack.c.h.b16 %v1265
    %v1653 = vunpack.c.l.b16 %v1266
    %v1654 = vunpack.c.h.b16 %v1266
    %v1655 = vunpack.c.l.b16 %v1267
    %v1656 = vunpack.c.h.b16 %v1267
    %v1657 = vunpack.c.l.b16 %v1268
    %v1658 = vunpack.c.h.b16 %v1268
    %v1659 = vunpack.c.l.b16 %v1269
    %v1660 = vunpack.c.h.b16 %v1269
    %v1661 = vunpack.c.l.b16 %v1270
    %v1662 = vunpack.c.h.b16 %v1270
    %v1663 = vunpack.c.l.b16 %v1271
    %v1664 = vunpack.c.h.b16 %v1271
    %v1665 = vunpack.c.l.b16 %v1272
    %v1666 = vunpack.c.h.b16 %v1272
    %v1667 = vpack.c.b16 %v1415, %v1411
    %v1668 = vpack.c.b16 %v1416, %v1412
    %v1669 = vpack.c.b16 %v1417, %v1413
    %v1670 = vpack.c.b16 %v1418, %v1414
    %v1671 = vpack.c.b16 %v1423, %v1419
    %v1672 = vpack.c.b16 %v1424, %v1420
    %v1673 = vpack.c.b16 %v1425, %v1421
    %v1674 = vpack.c.b16 %v1426, %v1422
    %v1675 = vpack.c.b16 %v1431, %v1427
    %v1676 = vpack.c.b16 %v1432, %v1428
    %v1677 = vpack.c.b16 %v1433, %v1429
    %v1678 = vpack.c.b16 %v1434, %v1430
    %v1679 = vpack.c.b16 %v1439, %v1435
    %v1680 = vpack.c.b16 %v1440, %v1436
    %v1681 = vpack.c.b16 %v1441, %v1437
    %v1682 = vpack.c.b16 %v1442, %v1438
    %v1683 = vpack.c.b16 %v1447, %v1443
    %v1684 = vpack.c.b16 %v1448, %v1444
    %v1685 = vpack.c.b16 %v1449, %v1445
    %v1686 = vpack.c.b16 %v1450, %v1446
    %v1687 = vpack.c.b16 %v1455, %v1451
    %v1688 = vpack.c.b16 %v1456, %v1452
    %v1689 = vpack.c.b16 %v1457, %v1453
    %v1690 = vpack.c.b16 %v1458, %v1454
    %v1691 = vpack.c.b16 %v1463, %v1459
    %v1692 = vpack.c.b16 %v1464, %v1460
    %v1693 = vpack.c.b16 %v1465, %v1461
    %v1694 = vpack.c.b16 %v1466, %v1462
    %v1695 = vpack.c.b16 %v1471, %v1467
    %v1696 = vpack.c.b16 %v1472, %v1468
    %v1697 = vpack.c.b16 %v1473, %v1469
    %v1698 = vpack.c.b16 %v1474, %v1470
    %v1699 = vpack.c.b16 %v1479, %v1475
    %v1700 = vpack.c.b16 %v1480, %v1476
    %v1701 = vpack.c.b16 %v1481, %v1477
    %v1702 = vpack.c.b16 %v1482, %v1478
    %v1703 = vpack.c.b16 %v1487, %v1483
    %v1704 = vpack.c.b16 %v1488, %v1484
    %v1705 = vpack.c.b16 %v1489, %v1485
    %v1706 = vpack.c.b16 %v1490, %v1486
    %v1707 = vpack.c.b16 %v1495, %v1491
    %v1708 = vpack.c.b16 %v1496, %v1492
    %v1709 = vpack.c.b16 %v1497, %v1493
    %v1710 = vpack.c.b16 %v1498, %v1494
    %v1711 = vpack.c.b16 %v1503, %v1499
    %v1712 = vpack.c.b16 %v1504, %v1500
    %v1713 = vpack.c.b16 %v1505, %v1501
    %v1714 = vpack.c.b16 %v1506, %v1502
    %v1715 = vpack.c.b16 %v1511, %v1507
    %v1716 = vpack.c.b16 %v1512, %v1508
    %v1717 = vpack.c.b16 %v1513, %v1509
    %v1718 = vpack.c.b16 %v1514, %v1510
    %v1719 = vpack.c.b16 %v1519, %v1515
    %v1720 = vpack.c.b16 %v1520, %v1516
    %v1721 = vpack.c.b16 %v1521, %v1517
    %v1722 = vpack.c.b16 %v1522, %v1518
    %v1723 = vpack.c.b16 %v1527, %v1523
    %v1724 = vpack.c.b16 %v1528, %v1524
    %v1725 = vpack.c.b16 %v1529, %v1525
    %v1726 = vpack.c.b16 %v1530, %v1526
    %v1727 = vpack.c.b16 %v1535, %v1531
    %v1728 = vpack.c.b16 %v1536, %v1532
    %v1729 = vpack.c.b16 %v1537, %v1533
    %v1730 = vpack.c.b16 %v1538, %v1534
    %v1731 = vpack.c.b16 %v1543, %v1539
    %v1732 = vpack.c.b16 %v1544, %v1540
    %v1733 = vpack.c.b16 %v1545, %v1541
    %v1734 = vpack.c.b16 %v1546, %v1542
    %v1735 = vpack.c.b16 %v1551, %v1547
    %v1736 = vpack.c.b16 %v1552, %v1548
    %v1737 = vpack.c.b16 %v1553, %v1549
    %v1738 = vpack.c.b16 %v1554, %v1550
    %v1739 = vpack.c.b16 %v1559, %v1555
    %v1740 = vpack.c.b16 %v1560, %v1556
    %v1741 = vpack.c.b16 %v1561, %v1557
    %v1742 = vpack.c.b16 %v1562, %v1558
    %v1743 = vpack.c.b16 %v1567, %v1563
    %v1744 = vpack.c.b16 %v1568, %v1564
    %v1745 = vpack.c.b16 %v1569, %v1565
    %v1746 = vpack.c.b16 %v1570, %v1566
    %v1747 = vpack.c.b16 %v1575, %v1571
    %v1748 = vpack.c.b16 %v1576, %v1572
    %v1749 = vpack.c.b16 %v1577, %v1573
    %v1750 = vpack.c.b16 %v1578, %v1574
    %v1751 = vpack.c.b16 %v1583, %v1579
    %v1752 = vpack.c.b16 %v1584, %v1580
    %v1753 = vpack.c.b16 %v1585, %v1581
    %v1754 = vpack.c.b16 %v1586, %v1582
    %v1755 = vpack.c.b16 %v1591, %v1587
    %v1756 = vpack.c.b16 %v1592, %v1588
    %v1757 = vpack.c.b16 %v1593, %v1589
    %v1758 = vpack.c.b16 %v1594, %v1590
    %v1759 = vpack.c.b16 %v1599, %v1595
    %v1760 = vpack.c.b16 %v1600, %v1596
    %v1761 = vpack.c.b16 %v1601, %v1597
    %v1762 = vpack.c.b16 %v1602, %v1598
    %v1763 = vpack.c.b16 %v1607, %v1603
    %v1764 = vpack.c.b16 %v1608, %v1604
    %v1765 = vpack.c.b16 %v1609, %v1605
    %v1766 = vpack.c.b16 %v1610, %v1606
    %v1767 = vpack.c.b16 %v1615, %v1611
    %v1768 = vpack.c.b16 %v1616, %v1612
    %v1769 = vpack.c.b16 %v1617, %v1613
    %v1770 = vpack.c.b16 %v1618, %v1614
    %v1771 = vpack.c.b16 %v1623, %v1619
    %v1772 = vpack.c.b16 %v1624, %v1620
    %v1773 = vpack.c.b16 %v1625, %v1621
    %v1774 = vpack.c.b16 %v1626, %v1622
    %v1775 = vpack.c.b16 %v1631, %v1627
    %v1776 = vpack.c.b16 %v1632, %v1628
    %v1777 = vpack.c.b16 %v1633, %v1629
    %v1778 = vpack.c.b16 %v1634, %v1630
    %v1779 = vpack.c.b16 %v1639, %v1635
    %v1780 = vpack.c.b16 %v1640, %v1636
    %v1781 = vpack.c.b16 %v1641, %v1637
    %v1782 = vpack.c.b16 %v1642, %v1638
    %v1783 = vpack.c.b16 %v1647, %v1643
    %v1784 = vpack.c.b16 %v1648, %v1644
    %v1785 = vpack.c.b16 %v1649, %v1645
    %v1786 = vpack.c.b16 %v1650, %v1646
    %v1787 = vpack.c.b16 %v1655, %v1651
    %v1788 = vpack.c.b16 %v1656, %v1652
    %v1789 = vpack.c.b16 %v1657, %v1653
    %v1790 = vpack.c.b16 %v1658, %v1654
    %v1791 = vpack.c.b16 %v1663, %v1659
    %v1792 = vpack.c.b16 %v1664, %v1660
    %v1793 = vpack.c.b16 %v1665, %v1661
    %v1794 = vpack.c.b16 %v1666, %v1662
    %1923 = vmatpush.bf16.msra.mxu0 %v1695
    %1924 = vmatpush.bf16.msra.mxu0 %v1691
    %1925 = vmatpush.bf16.msra.mxu0 %v1687
    %1926 = vmatpush.bf16.msra.mxu0 %v1683
    %1927 = vmatpush.bf16.msra.mxu0 %v1679
    %1928 = vmatpush.bf16.msra.mxu0 %v1675
    %1929 = vmatpush.bf16.msra.mxu0 %v1671
    %1930 = vmatpush.bf16.msra.mxu0 %v1667
    %1931 = vmatmul.bf16.gmra.mxu0 %v1141
    %v1932 = vpop.f32.mrf.mxu0
    %v1933 = vadd.f32 %v1275, %v1932
    %v1934 = vpop.f32.mrf.mxu0
    %1935 = vdwg.mxu0
    %1936 = vmatpush.bf16.msra.mxu0 %v1727
    %1937 = vmatpush.bf16.msra.mxu0 %v1723
    %1938 = vmatpush.bf16.msra.mxu0 %v1719
    %1939 = vmatpush.bf16.msra.mxu0 %v1715
    %1940 = vmatpush.bf16.msra.mxu0 %v1711
    %1941 = vmatpush.bf16.msra.mxu0 %v1707
    %1942 = vmatpush.bf16.msra.mxu0 %v1703
    %1943 = vmatpush.bf16.msra.mxu0 %v1699
    %1944 = vmatmul.bf16.gmra.mxu0 %v1142
    %v1945 = vpop.f32.mrf.mxu0
    %v1946 = vadd.f32 %v1933, %v1945
    %v1947 = vpop.f32.mrf.mxu0
    %1948 = vdwg.mxu0
    %1949 = vmatpush.bf16.msra.mxu0 %v1759
    %1950 = vmatpush.bf16.msra.mxu0 %v1755
    %1951 = vmatpush.bf16.msra.mxu0 %v1751
    %1952 = vmatpush.bf16.msra.mxu0 %v1747
    %1953 = vmatpush.bf16.msra.mxu0 %v1743
    %1954 = vmatpush.bf16.msra.mxu0 %v1739
    %1955 = vmatpush.bf16.msra.mxu0 %v1735
    %1956 = vmatpush.bf16.msra.mxu0 %v1731
    %1957 = vmatmul.bf16.gmra.mxu0 %v1143
    %v1958 = vpop.f32.mrf.mxu0
    %v1959 = vadd.f32 %v1946, %v1958
    %v1960 = vpop.f32.mrf.mxu0
    %1961 = vdwg.mxu0
    %1962 = vmatpush.bf16.msra.mxu0 %v1791
    %1963 = vmatpush.bf16.msra.mxu0 %v1787
    %1964 = vmatpush.bf16.msra.mxu0 %v1783
    %1965 = vmatpush.bf16.msra.mxu0 %v1779
    %1966 = vmatpush.bf16.msra.mxu0 %v1775
    %1967 = vmatpush.bf16.msra.mxu0 %v1771
    %1968 = vmatpush.bf16.msra.mxu0 %v1767
    %1969 = vmatpush.bf16.msra.mxu0 %v1763
    %1970 = vmatmul.bf16.gmra.mxu0 %v1144
    %v1971 = vpop.f32.mrf.mxu0
    %v1972 = vadd.f32 %v1959, %v1971
    %v1973 = vpop.f32.mrf.mxu0
    %1974 = vdwg.mxu0
    %1975 = vmatpush.bf16.msra.mxu0 %v1696
    %1976 = vmatpush.bf16.msra.mxu0 %v1692
    %1977 = vmatpush.bf16.msra.mxu0 %v1688
    %1978 = vmatpush.bf16.msra.mxu0 %v1684
    %1979 = vmatpush.bf16.msra.mxu0 %v1680
    %1980 = vmatpush.bf16.msra.mxu0 %v1676
    %1981 = vmatpush.bf16.msra.mxu0 %v1672
    %1982 = vmatpush.bf16.msra.mxu0 %v1668
    %1983 = vmatmul.bf16.gmra.mxu0 %v1141
    %v1984 = vpop.f32.mrf.mxu0
    %v1985 = vadd.f32 %v1276, %v1984
    %v1986 = vpop.f32.mrf.mxu0
    %1987 = vdwg.mxu0
    %1988 = vmatpush.bf16.msra.mxu0 %v1728
    %1989 = vmatpush.bf16.msra.mxu0 %v1724
    %1990 = vmatpush.bf16.msra.mxu0 %v1720
    %1991 = vmatpush.bf16.msra.mxu0 %v1716
    %1992 = vmatpush.bf16.msra.mxu0 %v1712
    %1993 = vmatpush.bf16.msra.mxu0 %v1708
    %1994 = vmatpush.bf16.msra.mxu0 %v1704
    %1995 = vmatpush.bf16.msra.mxu0 %v1700
    %1996 = vmatmul.bf16.gmra.mxu0 %v1142
    %v1997 = vpop.f32.mrf.mxu0
    %v1998 = vadd.f32 %v1985, %v1997
    %v1999 = vpop.f32.mrf.mxu0
    %2000 = vdwg.mxu0
    %2001 = vmatpush.bf16.msra.mxu0 %v1760
    %2002 = vmatpush.bf16.msra.mxu0 %v1756
    %2003 = vmatpush.bf16.msra.mxu0 %v1752
    %2004 = vmatpush.bf16.msra.mxu0 %v1748
    %2005 = vmatpush.bf16.msra.mxu0 %v1744
    %2006 = vmatpush.bf16.msra.mxu0 %v1740
    %2007 = vmatpush.bf16.msra.mxu0 %v1736
    %2008 = vmatpush.bf16.msra.mxu0 %v1732
    %2009 = vmatmul.bf16.gmra.mxu0 %v1143
    %v2010 = vpop.f32.mrf.mxu0
    %v2011 = vadd.f32 %v1998, %v2010
    %v2012 = vpop.f32.mrf.mxu0
    %2013 = vdwg.mxu0
    %2014 = vmatpush.bf16.msra.mxu0 %v1792
    %2015 = vmatpush.bf16.msra.mxu0 %v1788
    %2016 = vmatpush.bf16.msra.mxu0 %v1784
    %2017 = vmatpush.bf16.msra.mxu0 %v1780
    %2018 = vmatpush.bf16.msra.mxu0 %v1776
    %2019 = vmatpush.bf16.msra.mxu0 %v1772
    %2020 = vmatpush.bf16.msra.mxu0 %v1768
    %2021 = vmatpush.bf16.msra.mxu0 %v1764
    %2022 = vmatmul.bf16.gmra.mxu0 %v1144
    %v2023 = vpop.f32.mrf.mxu0
    %v2024 = vadd.f32 %v2011, %v2023
    %v2025 = vpop.f32.mrf.mxu0
    %2026 = vdwg.mxu0
    %2027 = vmatpush.bf16.msra.mxu0 %v1697
    %2028 = vmatpush.bf16.msra.mxu0 %v1693
    %2029 = vmatpush.bf16.msra.mxu0 %v1689
    %2030 = vmatpush.bf16.msra.mxu0 %v1685
    %2031 = vmatpush.bf16.msra.mxu0 %v1681
    %2032 = vmatpush.bf16.msra.mxu0 %v1677
    %2033 = vmatpush.bf16.msra.mxu0 %v1673
    %2034 = vmatpush.bf16.msra.mxu0 %v1669
    %2035 = vmatmul.bf16.gmra.mxu0 %v1141
    %v2036 = vpop.f32.mrf.mxu0
    %v2037 = vadd.f32 %v1277, %v2036
    %v2038 = vpop.f32.mrf.mxu0
    %2039 = vdwg.mxu0
    %2040 = vmatpush.bf16.msra.mxu0 %v1729
    %2041 = vmatpush.bf16.msra.mxu0 %v1725
    %2042 = vmatpush.bf16.msra.mxu0 %v1721
    %2043 = vmatpush.bf16.msra.mxu0 %v1717
    %2044 = vmatpush.bf16.msra.mxu0 %v1713
    %2045 = vmatpush.bf16.msra.mxu0 %v1709
    %2046 = vmatpush.bf16.msra.mxu0 %v1705
    %2047 = vmatpush.bf16.msra.mxu0 %v1701
    %2048 = vmatmul.bf16.gmra.mxu0 %v1142
    %v2049 = vpop.f32.mrf.mxu0
    %v2050 = vadd.f32 %v2037, %v2049
    %v2051 = vpop.f32.mrf.mxu0
    %2052 = vdwg.mxu0
    %2053 = vmatpush.bf16.msra.mxu0 %v1761
    %2054 = vmatpush.bf16.msra.mxu0 %v1757
    %2055 = vmatpush.bf16.msra.mxu0 %v1753
    %2056 = vmatpush.bf16.msra.mxu0 %v1749
    %2057 = vmatpush.bf16.msra.mxu0 %v1745
    %2058 = vmatpush.bf16.msra.mxu0 %v1741
    %2059 = vmatpush.bf16.msra.mxu0 %v1737
    %2060 = vmatpush.bf16.msra.mxu0 %v1733
    %2061 = vmatmul.bf16.gmra.mxu0 %v1143
    %v2062 = vpop.f32.mrf.mxu0
    %v2063 = vadd.f32 %v2050, %v2062
    %v2064 = vpop.f32.mrf.mxu0
    %2065 = vdwg.mxu0
    %2066 = vmatpush.bf16.msra.mxu0 %v1793
    %2067 = vmatpush.bf16.msra.mxu0 %v1789
    %2068 = vmatpush.bf16.msra.mxu0 %v1785
    %2069 = vmatpush.bf16.msra.mxu0 %v1781
    %2070 = vmatpush.bf16.msra.mxu0 %v1777
    %2071 = vmatpush.bf16.msra.mxu0 %v1773
    %2072 = vmatpush.bf16.msra.mxu0 %v1769
    %2073 = vmatpush.bf16.msra.mxu0 %v1765
    %2074 = vmatmul.bf16.gmra.mxu0 %v1144
    %v2075 = vpop.f32.mrf.mxu0
    %v2076 = vadd.f32 %v2063, %v2075
    %v2077 = vpop.f32.mrf.mxu0
    %2078 = vdwg.mxu0
    %2079 = vmatpush.bf16.msra.mxu0 %v1698
    %2080 = vmatpush.bf16.msra.mxu0 %v1694
    %2081 = vmatpush.bf16.msra.mxu0 %v1690
    %2082 = vmatpush.bf16.msra.mxu0 %v1686
    %2083 = vmatpush.bf16.msra.mxu0 %v1682
    %2084 = vmatpush.bf16.msra.mxu0 %v1678
    %2085 = vmatpush.bf16.msra.mxu0 %v1674
    %2086 = vmatpush.bf16.msra.mxu0 %v1670
    %2087 = vmatmul.bf16.gmra.mxu0 %v1141
    %v2088 = vpop.f32.mrf.mxu0
    %v2089 = vadd.f32 %v1278, %v2088
    %v2090 = vpop.f32.mrf.mxu0
    %2091 = vdwg.mxu0
    %2092 = vmatpush.bf16.msra.mxu0 %v1730
    %2093 = vmatpush.bf16.msra.mxu0 %v1726
    %2094 = vmatpush.bf16.msra.mxu0 %v1722
    %2095 = vmatpush.bf16.msra.mxu0 %v1718
    %2096 = vmatpush.bf16.msra.mxu0 %v1714
    %2097 = vmatpush.bf16.msra.mxu0 %v1710
    %2098 = vmatpush.bf16.msra.mxu0 %v1706
    %2099 = vmatpush.bf16.msra.mxu0 %v1702
    %2100 = vmatmul.bf16.gmra.mxu0 %v1142
    %v2101 = vpop.f32.mrf.mxu0
    %v2102 = vadd.f32 %v2089, %v2101
    %v2103 = vpop.f32.mrf.mxu0
    %2104 = vdwg.mxu0
    %2105 = vmatpush.bf16.msra.mxu0 %v1762
    %2106 = vmatpush.bf16.msra.mxu0 %v1758
    %2107 = vmatpush.bf16.msra.mxu0 %v1754
    %2108 = vmatpush.bf16.msra.mxu0 %v1750
    %2109 = vmatpush.bf16.msra.mxu0 %v1746
    %2110 = vmatpush.bf16.msra.mxu0 %v1742
    %2111 = vmatpush.bf16.msra.mxu0 %v1738
    %2112 = vmatpush.bf16.msra.mxu0 %v1734
    %2113 = vmatmul.bf16.gmra.mxu0 %v1143
    %v2114 = vpop.f32.mrf.mxu0
    %v2115 = vadd.f32 %v2102, %v2114
    %v2116 = vpop.f32.mrf.mxu0
    %2117 = vdwg.mxu0
    %2118 = vmatpush.bf16.msra.mxu0 %v1794
    %2119 = vmatpush.bf16.msra.mxu0 %v1790
    %2120 = vmatpush.bf16.msra.mxu0 %v1786
    %2121 = vmatpush.bf16.msra.mxu0 %v1782
    %2122 = vmatpush.bf16.msra.mxu0 %v1778
    %2123 = vmatpush.bf16.msra.mxu0 %v1774
    %2124 = vmatpush.bf16.msra.mxu0 %v1770
    %2125 = vmatpush.bf16.msra.mxu0 %v1766
    %2126 = vmatmul.bf16.gmra.mxu0 %v1144
    %v2127 = vpop.f32.mrf.mxu0
    %v2128 = vadd.f32 %v2115, %v2127
    %v2129 = vpop.f32.mrf.mxu0
    %2130 = vdwg.mxu0
    %vm2131 = vcmp.gt.f32.partialorder %v1972, 0.0
    %vm2132 = vcmp.gt.f32.partialorder %v2024, 0.0
    %vm2133 = vcmp.gt.f32.partialorder %v2076, 0.0
    %vm2134 = vcmp.gt.f32.partialorder %v2128, 0.0
    %v2135 = vmul.f32 %v1972, 0.2
    %v2136 = vmul.f32 %v2024, 0.2
    %v2137 = vmul.f32 %v2076, 0.2
    %v2138 = vmul.f32 %v2128, 0.2
    %v2139 = vsel %vm2131, %v1972, %v2135
    %v2140 = vsel %vm2132, %v2024, %v2136
    %v2141 = vsel %vm2133, %v2076, %v2137
    %v2142 = vsel %vm2134, %v2128, %v2138
    %v2143 = vpack.c.bf16 %v2139, %v2139
    %v2144 = vpack.c.bf16 %v2140, %v2140
    %v2145 = vpack.c.bf16 %v2141, %v2141
    %v2146 = vpack.c.bf16 %v2142, %v2142
    %v2147 = vld [vmem:[#allocation10] sm:$0xff]
    %v2148 = vld [vmem:[#allocation10 + $0x8] sm:$0xff]
    %v2149 = vld [vmem:[#allocation10 + $0x10] sm:$0xff]
    %v2150 = vld [vmem:[#allocation10 + $0x18] sm:$0xff]
    %v2151 = vld [vmem:[#allocation10 + $0x20] sm:$0xff]
    %v2152 = vld [vmem:[#allocation10 + $0x28] sm:$0xff]
    %v2153 = vld [vmem:[#allocation10 + $0x30] sm:$0xff]
    %v2154 = vld [vmem:[#allocation10 + $0x38] sm:$0xff]
    %v2155 = vld [vmem:[#allocation10 + $0x40] sm:$0xff]
    %v2156 = vld [vmem:[#allocation10 + $0x48] sm:$0xff]
    %v2157 = vld [vmem:[#allocation10 + $0x50] sm:$0xff]
    %v2158 = vld [vmem:[#allocation10 + $0x58] sm:$0xff]
    %v2159 = vld [vmem:[#allocation10 + $0x60] sm:$0xff]
    %v2160 = vld [vmem:[#allocation10 + $0x68] sm:$0xff]
    %v2161 = vld [vmem:[#allocation10 + $0x70] sm:$0xff]
    %v2162 = vld [vmem:[#allocation10 + $0x78] sm:$0xff]
    %v2163 = vld [vmem:[#allocation10 + $0x80] sm:$0xff]
    %v2164 = vld [vmem:[#allocation10 + $0x88] sm:$0xff]
    %v2165 = vld [vmem:[#allocation10 + $0x90] sm:$0xff]
    %v2166 = vld [vmem:[#allocation10 + $0x98] sm:$0xff]
    %v2167 = vld [vmem:[#allocation10 + $0xa0] sm:$0xff]
    %v2168 = vld [vmem:[#allocation10 + $0xa8] sm:$0xff]
    %v2169 = vld [vmem:[#allocation10 + $0xb0] sm:$0xff]
    %v2170 = vld [vmem:[#allocation10 + $0xb8] sm:$0xff]
    %v2171 = vld [vmem:[#allocation10 + $0xc0] sm:$0xff]
    %v2172 = vld [vmem:[#allocation10 + $0xc8] sm:$0xff]
    %v2173 = vld [vmem:[#allocation10 + $0xd0] sm:$0xff]
    %v2174 = vld [vmem:[#allocation10 + $0xd8] sm:$0xff]
    %v2175 = vld [vmem:[#allocation10 + $0xe0] sm:$0xff]
    %v2176 = vld [vmem:[#allocation10 + $0xe8] sm:$0xff]
    %v2177 = vld [vmem:[#allocation10 + $0xf0] sm:$0xff]
    %v2178 = vld [vmem:[#allocation10 + $0xf8] sm:$0xff]
    %v2179 = vld [vmem:[#allocation10 + $0x100] sm:$0xff]
    %v2180 = vld [vmem:[#allocation10 + $0x108] sm:$0xff]
    %v2181 = vld [vmem:[#allocation10 + $0x110] sm:$0xff]
    %v2182 = vld [vmem:[#allocation10 + $0x118] sm:$0xff]
    %v2183 = vld [vmem:[#allocation10 + $0x120] sm:$0xff]
    %v2184 = vld [vmem:[#allocation10 + $0x128] sm:$0xff]
    %v2185 = vld [vmem:[#allocation10 + $0x130] sm:$0xff]
    %v2186 = vld [vmem:[#allocation10 + $0x138] sm:$0xff]
    %v2187 = vld [vmem:[#allocation10 + $0x140] sm:$0xff]
    %v2188 = vld [vmem:[#allocation10 + $0x148] sm:$0xff]
    %v2189 = vld [vmem:[#allocation10 + $0x150] sm:$0xff]
    %v2190 = vld [vmem:[#allocation10 + $0x158] sm:$0xff]
    %v2191 = vld [vmem:[#allocation10 + $0x160] sm:$0xff]
    %v2192 = vld [vmem:[#allocation10 + $0x168] sm:$0xff]
    %v2193 = vld [vmem:[#allocation10 + $0x170] sm:$0xff]
    %v2194 = vld [vmem:[#allocation10 + $0x178] sm:$0xff]
    %v2195 = vld [vmem:[#allocation10 + $0x180] sm:$0xff]
    %v2196 = vld [vmem:[#allocation10 + $0x188] sm:$0xff]
    %v2197 = vld [vmem:[#allocation10 + $0x190] sm:$0xff]
    %v2198 = vld [vmem:[#allocation10 + $0x198] sm:$0xff]
    %v2199 = vld [vmem:[#allocation10 + $0x1a0] sm:$0xff]
    %v2200 = vld [vmem:[#allocation10 + $0x1a8] sm:$0xff]
    %v2201 = vld [vmem:[#allocation10 + $0x1b0] sm:$0xff]
    %v2202 = vld [vmem:[#allocation10 + $0x1b8] sm:$0xff]
    %v2203 = vld [vmem:[#allocation10 + $0x1c0] sm:$0xff]
    %v2204 = vld [vmem:[#allocation10 + $0x1c8] sm:$0xff]
    %v2205 = vld [vmem:[#allocation10 + $0x1d0] sm:$0xff]
    %v2206 = vld [vmem:[#allocation10 + $0x1d8] sm:$0xff]
    %v2207 = vld [vmem:[#allocation10 + $0x1e0] sm:$0xff]
    %v2208 = vld [vmem:[#allocation10 + $0x1e8] sm:$0xff]
    %v2209 = vld [vmem:[#allocation10 + $0x1f0] sm:$0xff]
    %v2210 = vld [vmem:[#allocation10 + $0x1f8] sm:$0xff]
    %v2211 = vld [vmem:[#allocation10 + $0x200] sm:$0xff]
    %v2212 = vld [vmem:[#allocation10 + $0x208] sm:$0xff]
    %v2213 = vld [vmem:[#allocation10 + $0x210] sm:$0xff]
    %v2214 = vld [vmem:[#allocation10 + $0x218] sm:$0xff]
    %v2215 = vld [vmem:[#allocation10 + $0x220] sm:$0xff]
    %v2216 = vld [vmem:[#allocation10 + $0x228] sm:$0xff]
    %v2217 = vld [vmem:[#allocation10 + $0x230] sm:$0xff]
    %v2218 = vld [vmem:[#allocation10 + $0x238] sm:$0xff]
    %v2219 = vld [vmem:[#allocation10 + $0x240] sm:$0xff]
    %v2220 = vld [vmem:[#allocation10 + $0x248] sm:$0xff]
    %v2221 = vld [vmem:[#allocation10 + $0x250] sm:$0xff]
    %v2222 = vld [vmem:[#allocation10 + $0x258] sm:$0xff]
    %v2223 = vld [vmem:[#allocation10 + $0x260] sm:$0xff]
    %v2224 = vld [vmem:[#allocation10 + $0x268] sm:$0xff]
    %v2225 = vld [vmem:[#allocation10 + $0x270] sm:$0xff]
    %v2226 = vld [vmem:[#allocation10 + $0x278] sm:$0xff]
    %v2227 = vld [vmem:[#allocation10 + $0x280] sm:$0xff]
    %v2228 = vld [vmem:[#allocation10 + $0x288] sm:$0xff]
    %v2229 = vld [vmem:[#allocation10 + $0x290] sm:$0xff]
    %v2230 = vld [vmem:[#allocation10 + $0x298] sm:$0xff]
    %v2231 = vld [vmem:[#allocation10 + $0x2a0] sm:$0xff]
    %v2232 = vld [vmem:[#allocation10 + $0x2a8] sm:$0xff]
    %v2233 = vld [vmem:[#allocation10 + $0x2b0] sm:$0xff]
    %v2234 = vld [vmem:[#allocation10 + $0x2b8] sm:$0xff]
    %v2235 = vld [vmem:[#allocation10 + $0x2c0] sm:$0xff]
    %v2236 = vld [vmem:[#allocation10 + $0x2c8] sm:$0xff]
    %v2237 = vld [vmem:[#allocation10 + $0x2d0] sm:$0xff]
    %v2238 = vld [vmem:[#allocation10 + $0x2d8] sm:$0xff]
    %v2239 = vld [vmem:[#allocation10 + $0x2e0] sm:$0xff]
    %v2240 = vld [vmem:[#allocation10 + $0x2e8] sm:$0xff]
    %v2241 = vld [vmem:[#allocation10 + $0x2f0] sm:$0xff]
    %v2242 = vld [vmem:[#allocation10 + $0x2f8] sm:$0xff]
    %v2243 = vld [vmem:[#allocation10 + $0x300] sm:$0xff]
    %v2244 = vld [vmem:[#allocation10 + $0x308] sm:$0xff]
    %v2245 = vld [vmem:[#allocation10 + $0x310] sm:$0xff]
    %v2246 = vld [vmem:[#allocation10 + $0x318] sm:$0xff]
    %v2247 = vld [vmem:[#allocation10 + $0x320] sm:$0xff]
    %v2248 = vld [vmem:[#allocation10 + $0x328] sm:$0xff]
    %v2249 = vld [vmem:[#allocation10 + $0x330] sm:$0xff]
    %v2250 = vld [vmem:[#allocation10 + $0x338] sm:$0xff]
    %v2251 = vld [vmem:[#allocation10 + $0x340] sm:$0xff]
    %v2252 = vld [vmem:[#allocation10 + $0x348] sm:$0xff]
    %v2253 = vld [vmem:[#allocation10 + $0x350] sm:$0xff]
    %v2254 = vld [vmem:[#allocation10 + $0x358] sm:$0xff]
    %v2255 = vld [vmem:[#allocation10 + $0x360] sm:$0xff]
    %v2256 = vld [vmem:[#allocation10 + $0x368] sm:$0xff]
    %v2257 = vld [vmem:[#allocation10 + $0x370] sm:$0xff]
    %v2258 = vld [vmem:[#allocation10 + $0x378] sm:$0xff]
    %v2259 = vld [vmem:[#allocation10 + $0x380] sm:$0xff]
    %v2260 = vld [vmem:[#allocation10 + $0x388] sm:$0xff]
    %v2261 = vld [vmem:[#allocation10 + $0x390] sm:$0xff]
    %v2262 = vld [vmem:[#allocation10 + $0x398] sm:$0xff]
    %v2263 = vld [vmem:[#allocation10 + $0x3a0] sm:$0xff]
    %v2264 = vld [vmem:[#allocation10 + $0x3a8] sm:$0xff]
    %v2265 = vld [vmem:[#allocation10 + $0x3b0] sm:$0xff]
    %v2266 = vld [vmem:[#allocation10 + $0x3b8] sm:$0xff]
    %v2267 = vld [vmem:[#allocation10 + $0x3c0] sm:$0xff]
    %v2268 = vld [vmem:[#allocation10 + $0x3c8] sm:$0xff]
    %v2269 = vld [vmem:[#allocation10 + $0x3d0] sm:$0xff]
    %v2270 = vld [vmem:[#allocation10 + $0x3d8] sm:$0xff]
    %v2271 = vld [vmem:[#allocation10 + $0x3e0] sm:$0xff]
    %v2272 = vld [vmem:[#allocation10 + $0x3e8] sm:$0xff]
    %v2273 = vld [vmem:[#allocation10 + $0x3f0] sm:$0xff]
    %v2274 = vld [vmem:[#allocation10 + $0x3f8] sm:$0xff]
    %v2275 = vld [vmem:[#allocation10 + $0x400] sm:$0xff]
    %v2276 = vld [vmem:[#allocation10 + $0x408] sm:$0xff]
    %v2277 = vld [vmem:[#allocation10 + $0x410] sm:$0xff]
    %v2278 = vld [vmem:[#allocation10 + $0x418] sm:$0xff]
    %v2279 = vld [vmem:[#allocation10 + $0x420] sm:$0xff]
    %v2280 = vld [vmem:[#allocation10 + $0x428] sm:$0xff]
    %v2281 = vld [vmem:[#allocation10 + $0x430] sm:$0xff]
    %v2282 = vld [vmem:[#allocation10 + $0x438] sm:$0xff]
    %v2283 = vld [vmem:[#allocation10 + $0x440] sm:$0xff]
    %v2284 = vld [vmem:[#allocation10 + $0x448] sm:$0xff]
    %v2285 = vld [vmem:[#allocation10 + $0x450] sm:$0xff]
    %v2286 = vld [vmem:[#allocation10 + $0x458] sm:$0xff]
    %v2287 = vld [vmem:[#allocation10 + $0x460] sm:$0xff]
    %v2288 = vld [vmem:[#allocation10 + $0x468] sm:$0xff]
    %v2289 = vld [vmem:[#allocation10 + $0x470] sm:$0xff]
    %v2290 = vld [vmem:[#allocation10 + $0x478] sm:$0xff]
    %v2291 = vld [vmem:[#allocation10 + $0x480] sm:$0xff]
    %v2292 = vld [vmem:[#allocation10 + $0x488] sm:$0xff]
    %v2293 = vld [vmem:[#allocation10 + $0x490] sm:$0xff]
    %v2294 = vld [vmem:[#allocation10 + $0x498] sm:$0xff]
    %v2295 = vld [vmem:[#allocation10 + $0x4a0] sm:$0xff]
    %v2296 = vld [vmem:[#allocation10 + $0x4a8] sm:$0xff]
    %v2297 = vld [vmem:[#allocation10 + $0x4b0] sm:$0xff]
    %v2298 = vld [vmem:[#allocation10 + $0x4b8] sm:$0xff]
    %v2299 = vld [vmem:[#allocation10 + $0x4c0] sm:$0xff]
    %v2300 = vld [vmem:[#allocation10 + $0x4c8] sm:$0xff]
    %v2301 = vld [vmem:[#allocation10 + $0x4d0] sm:$0xff]
    %v2302 = vld [vmem:[#allocation10 + $0x4d8] sm:$0xff]
    %v2303 = vld [vmem:[#allocation10 + $0x4e0] sm:$0xff]
    %v2304 = vld [vmem:[#allocation10 + $0x4e8] sm:$0xff]
    %v2305 = vld [vmem:[#allocation10 + $0x4f0] sm:$0xff]
    %v2306 = vld [vmem:[#allocation10 + $0x4f8] sm:$0xff]
    %v2307 = vld [vmem:[#allocation10 + $0x500] sm:$0xff]
    %v2308 = vld [vmem:[#allocation10 + $0x508] sm:$0xff]
    %v2309 = vld [vmem:[#allocation10 + $0x510] sm:$0xff]
    %v2310 = vld [vmem:[#allocation10 + $0x518] sm:$0xff]
    %v2311 = vld [vmem:[#allocation10 + $0x520] sm:$0xff]
    %v2312 = vld [vmem:[#allocation10 + $0x528] sm:$0xff]
    %v2313 = vld [vmem:[#allocation10 + $0x530] sm:$0xff]
    %v2314 = vld [vmem:[#allocation10 + $0x538] sm:$0xff]
    %v2315 = vld [vmem:[#allocation10 + $0x540] sm:$0xff]
    %v2316 = vld [vmem:[#allocation10 + $0x548] sm:$0xff]
    %v2317 = vld [vmem:[#allocation10 + $0x550] sm:$0xff]
    %v2318 = vld [vmem:[#allocation10 + $0x558] sm:$0xff]
    %v2319 = vld [vmem:[#allocation10 + $0x560] sm:$0xff]
    %v2320 = vld [vmem:[#allocation10 + $0x568] sm:$0xff]
    %v2321 = vld [vmem:[#allocation10 + $0x570] sm:$0xff]
    %v2322 = vld [vmem:[#allocation10 + $0x578] sm:$0xff]
    %v2323 = vld [vmem:[#allocation10 + $0x580] sm:$0xff]
    %v2324 = vld [vmem:[#allocation10 + $0x588] sm:$0xff]
    %v2325 = vld [vmem:[#allocation10 + $0x590] sm:$0xff]
    %v2326 = vld [vmem:[#allocation10 + $0x598] sm:$0xff]
    %v2327 = vld [vmem:[#allocation10 + $0x5a0] sm:$0xff]
    %v2328 = vld [vmem:[#allocation10 + $0x5a8] sm:$0xff]
    %v2329 = vld [vmem:[#allocation10 + $0x5b0] sm:$0xff]
    %v2330 = vld [vmem:[#allocation10 + $0x5b8] sm:$0xff]
    %v2331 = vld [vmem:[#allocation10 + $0x5c0] sm:$0xff]
    %v2332 = vld [vmem:[#allocation10 + $0x5c8] sm:$0xff]
    %v2333 = vld [vmem:[#allocation10 + $0x5d0] sm:$0xff]
    %v2334 = vld [vmem:[#allocation10 + $0x5d8] sm:$0xff]
    %v2335 = vld [vmem:[#allocation10 + $0x5e0] sm:$0xff]
    %v2336 = vld [vmem:[#allocation10 + $0x5e8] sm:$0xff]
    %v2337 = vld [vmem:[#allocation10 + $0x5f0] sm:$0xff]
    %v2338 = vld [vmem:[#allocation10 + $0x5f8] sm:$0xff]
    %v2339 = vld [vmem:[#allocation10 + $0x600] sm:$0xff]
    %v2340 = vld [vmem:[#allocation10 + $0x608] sm:$0xff]
    %v2341 = vld [vmem:[#allocation10 + $0x610] sm:$0xff]
    %v2342 = vld [vmem:[#allocation10 + $0x618] sm:$0xff]
    %v2343 = vld [vmem:[#allocation10 + $0x620] sm:$0xff]
    %v2344 = vld [vmem:[#allocation10 + $0x628] sm:$0xff]
    %v2345 = vld [vmem:[#allocation10 + $0x630] sm:$0xff]
    %v2346 = vld [vmem:[#allocation10 + $0x638] sm:$0xff]
    %v2347 = vld [vmem:[#allocation10 + $0x640] sm:$0xff]
    %v2348 = vld [vmem:[#allocation10 + $0x648] sm:$0xff]
    %v2349 = vld [vmem:[#allocation10 + $0x650] sm:$0xff]
    %v2350 = vld [vmem:[#allocation10 + $0x658] sm:$0xff]
    %v2351 = vld [vmem:[#allocation10 + $0x660] sm:$0xff]
    %v2352 = vld [vmem:[#allocation10 + $0x668] sm:$0xff]
    %v2353 = vld [vmem:[#allocation10 + $0x670] sm:$0xff]
    %v2354 = vld [vmem:[#allocation10 + $0x678] sm:$0xff]
    %v2355 = vld [vmem:[#allocation10 + $0x680] sm:$0xff]
    %v2356 = vld [vmem:[#allocation10 + $0x688] sm:$0xff]
    %v2357 = vld [vmem:[#allocation10 + $0x690] sm:$0xff]
    %v2358 = vld [vmem:[#allocation10 + $0x698] sm:$0xff]
    %v2359 = vld [vmem:[#allocation10 + $0x6a0] sm:$0xff]
    %v2360 = vld [vmem:[#allocation10 + $0x6a8] sm:$0xff]
    %v2361 = vld [vmem:[#allocation10 + $0x6b0] sm:$0xff]
    %v2362 = vld [vmem:[#allocation10 + $0x6b8] sm:$0xff]
    %v2363 = vld [vmem:[#allocation10 + $0x6c0] sm:$0xff]
    %v2364 = vld [vmem:[#allocation10 + $0x6c8] sm:$0xff]
    %v2365 = vld [vmem:[#allocation10 + $0x6d0] sm:$0xff]
    %v2366 = vld [vmem:[#allocation10 + $0x6d8] sm:$0xff]
    %v2367 = vld [vmem:[#allocation10 + $0x6e0] sm:$0xff]
    %v2368 = vld [vmem:[#allocation10 + $0x6e8] sm:$0xff]
    %v2369 = vld [vmem:[#allocation10 + $0x6f0] sm:$0xff]
    %v2370 = vld [vmem:[#allocation10 + $0x6f8] sm:$0xff]
    %v2371 = vld [vmem:[#allocation10 + $0x700] sm:$0xff]
    %v2372 = vld [vmem:[#allocation10 + $0x708] sm:$0xff]
    %v2373 = vld [vmem:[#allocation10 + $0x710] sm:$0xff]
    %v2374 = vld [vmem:[#allocation10 + $0x718] sm:$0xff]
    %v2375 = vld [vmem:[#allocation10 + $0x720] sm:$0xff]
    %v2376 = vld [vmem:[#allocation10 + $0x728] sm:$0xff]
    %v2377 = vld [vmem:[#allocation10 + $0x730] sm:$0xff]
    %v2378 = vld [vmem:[#allocation10 + $0x738] sm:$0xff]
    %v2379 = vld [vmem:[#allocation10 + $0x740] sm:$0xff]
    %v2380 = vld [vmem:[#allocation10 + $0x748] sm:$0xff]
    %v2381 = vld [vmem:[#allocation10 + $0x750] sm:$0xff]
    %v2382 = vld [vmem:[#allocation10 + $0x758] sm:$0xff]
    %v2383 = vld [vmem:[#allocation10 + $0x760] sm:$0xff]
    %v2384 = vld [vmem:[#allocation10 + $0x768] sm:$0xff]
    %v2385 = vld [vmem:[#allocation10 + $0x770] sm:$0xff]
    %v2386 = vld [vmem:[#allocation10 + $0x778] sm:$0xff]
    %v2387 = vld [vmem:[#allocation10 + $0x780] sm:$0xff]
    %v2388 = vld [vmem:[#allocation10 + $0x788] sm:$0xff]
    %v2389 = vld [vmem:[#allocation10 + $0x790] sm:$0xff]
    %v2390 = vld [vmem:[#allocation10 + $0x798] sm:$0xff]
    %v2391 = vld [vmem:[#allocation10 + $0x7a0] sm:$0xff]
    %v2392 = vld [vmem:[#allocation10 + $0x7a8] sm:$0xff]
    %v2393 = vld [vmem:[#allocation10 + $0x7b0] sm:$0xff]
    %v2394 = vld [vmem:[#allocation10 + $0x7b8] sm:$0xff]
    %v2395 = vld [vmem:[#allocation10 + $0x7c0] sm:$0xff]
    %v2396 = vld [vmem:[#allocation10 + $0x7c8] sm:$0xff]
    %v2397 = vld [vmem:[#allocation10 + $0x7d0] sm:$0xff]
    %v2398 = vld [vmem:[#allocation10 + $0x7d8] sm:$0xff]
    %v2399 = vld [vmem:[#allocation10 + $0x7e0] sm:$0xff]
    %v2400 = vld [vmem:[#allocation10 + $0x7e8] sm:$0xff]
    %v2401 = vld [vmem:[#allocation10 + $0x7f0] sm:$0xff]
    %v2402 = vld [vmem:[#allocation10 + $0x7f8] sm:$0xff]
    %v2403 = vld [vmem:[#allocation10 + $0x800] sm:$0xff]
    %v2404 = vld [vmem:[#allocation10 + $0x808] sm:$0xff]
    %v2405 = vld [vmem:[#allocation10 + $0x810] sm:$0xff]
    %v2406 = vld [vmem:[#allocation10 + $0x818] sm:$0xff]
    %v2407 = vld [vmem:[#allocation10 + $0x820] sm:$0xff]
    %v2408 = vld [vmem:[#allocation10 + $0x828] sm:$0xff]
    %v2409 = vld [vmem:[#allocation10 + $0x830] sm:$0xff]
    %v2410 = vld [vmem:[#allocation10 + $0x838] sm:$0xff]
    %v2411 = vld [vmem:[#allocation10 + $0x840] sm:$0xff]
    %v2412 = vld [vmem:[#allocation10 + $0x848] sm:$0xff]
    %v2413 = vld [vmem:[#allocation10 + $0x850] sm:$0xff]
    %v2414 = vld [vmem:[#allocation10 + $0x858] sm:$0xff]
    %v2415 = vld [vmem:[#allocation10 + $0x860] sm:$0xff]
    %v2416 = vld [vmem:[#allocation10 + $0x868] sm:$0xff]
    %v2417 = vld [vmem:[#allocation10 + $0x870] sm:$0xff]
    %v2418 = vld [vmem:[#allocation10 + $0x878] sm:$0xff]
    %v2419 = vld [vmem:[#allocation10 + $0x880] sm:$0xff]
    %v2420 = vld [vmem:[#allocation10 + $0x888] sm:$0xff]
    %v2421 = vld [vmem:[#allocation10 + $0x890] sm:$0xff]
    %v2422 = vld [vmem:[#allocation10 + $0x898] sm:$0xff]
    %v2423 = vld [vmem:[#allocation10 + $0x8a0] sm:$0xff]
    %v2424 = vld [vmem:[#allocation10 + $0x8a8] sm:$0xff]
    %v2425 = vld [vmem:[#allocation10 + $0x8b0] sm:$0xff]
    %v2426 = vld [vmem:[#allocation10 + $0x8b8] sm:$0xff]
    %v2427 = vld [vmem:[#allocation10 + $0x8c0] sm:$0xff]
    %v2428 = vld [vmem:[#allocation10 + $0x8c8] sm:$0xff]
    %v2429 = vld [vmem:[#allocation10 + $0x8d0] sm:$0xff]
    %v2430 = vld [vmem:[#allocation10 + $0x8d8] sm:$0xff]
    %v2431 = vld [vmem:[#allocation10 + $0x8e0] sm:$0xff]
    %v2432 = vld [vmem:[#allocation10 + $0x8e8] sm:$0xff]
    %v2433 = vld [vmem:[#allocation10 + $0x8f0] sm:$0xff]
    %v2434 = vld [vmem:[#allocation10 + $0x8f8] sm:$0xff]
    %v2435 = vld [vmem:[#allocation10 + $0x900] sm:$0xff]
    %v2436 = vld [vmem:[#allocation10 + $0x908] sm:$0xff]
    %v2437 = vld [vmem:[#allocation10 + $0x910] sm:$0xff]
    %v2438 = vld [vmem:[#allocation10 + $0x918] sm:$0xff]
    %v2439 = vld [vmem:[#allocation10 + $0x920] sm:$0xff]
    %v2440 = vld [vmem:[#allocation10 + $0x928] sm:$0xff]
    %v2441 = vld [vmem:[#allocation10 + $0x930] sm:$0xff]
    %v2442 = vld [vmem:[#allocation10 + $0x938] sm:$0xff]
    %v2443 = vld [vmem:[#allocation10 + $0x940] sm:$0xff]
    %v2444 = vld [vmem:[#allocation10 + $0x948] sm:$0xff]
    %v2445 = vld [vmem:[#allocation10 + $0x950] sm:$0xff]
    %v2446 = vld [vmem:[#allocation10 + $0x958] sm:$0xff]
    %v2447 = vld [vmem:[#allocation10 + $0x960] sm:$0xff]
    %v2448 = vld [vmem:[#allocation10 + $0x968] sm:$0xff]
    %v2449 = vld [vmem:[#allocation10 + $0x970] sm:$0xff]
    %v2450 = vld [vmem:[#allocation10 + $0x978] sm:$0xff]
    %v2451 = vld [vmem:[#allocation10 + $0x980] sm:$0xff]
    %v2452 = vld [vmem:[#allocation10 + $0x988] sm:$0xff]
    %v2453 = vld [vmem:[#allocation10 + $0x990] sm:$0xff]
    %v2454 = vld [vmem:[#allocation10 + $0x998] sm:$0xff]
    %v2455 = vld [vmem:[#allocation10 + $0x9a0] sm:$0xff]
    %v2456 = vld [vmem:[#allocation10 + $0x9a8] sm:$0xff]
    %v2457 = vld [vmem:[#allocation10 + $0x9b0] sm:$0xff]
    %v2458 = vld [vmem:[#allocation10 + $0x9b8] sm:$0xff]
    %v2459 = vld [vmem:[#allocation10 + $0x9c0] sm:$0xff]
    %v2460 = vld [vmem:[#allocation10 + $0x9c8] sm:$0xff]
    %v2461 = vld [vmem:[#allocation10 + $0x9d0] sm:$0xff]
    %v2462 = vld [vmem:[#allocation10 + $0x9d8] sm:$0xff]
    %v2463 = vld [vmem:[#allocation10 + $0x9e0] sm:$0xff]
    %v2464 = vld [vmem:[#allocation10 + $0x9e8] sm:$0xff]
    %v2465 = vld [vmem:[#allocation10 + $0x9f0] sm:$0xff]
    %v2466 = vld [vmem:[#allocation10 + $0x9f8] sm:$0xff]
    %v2467 = vld [vmem:[#allocation10 + $0xa00] sm:$0xff]
    %v2468 = vld [vmem:[#allocation10 + $0xa08] sm:$0xff]
    %v2469 = vld [vmem:[#allocation10 + $0xa10] sm:$0xff]
    %v2470 = vld [vmem:[#allocation10 + $0xa18] sm:$0xff]
    %v2471 = vld [vmem:[#allocation10 + $0xa20] sm:$0xff]
    %v2472 = vld [vmem:[#allocation10 + $0xa28] sm:$0xff]
    %v2473 = vld [vmem:[#allocation10 + $0xa30] sm:$0xff]
    %v2474 = vld [vmem:[#allocation10 + $0xa38] sm:$0xff]
    %v2475 = vld [vmem:[#allocation10 + $0xa40] sm:$0xff]
    %v2476 = vld [vmem:[#allocation10 + $0xa48] sm:$0xff]
    %v2477 = vld [vmem:[#allocation10 + $0xa50] sm:$0xff]
    %v2478 = vld [vmem:[#allocation10 + $0xa58] sm:$0xff]
    %v2479 = vld [vmem:[#allocation10 + $0xa60] sm:$0xff]
    %v2480 = vld [vmem:[#allocation10 + $0xa68] sm:$0xff]
    %v2481 = vld [vmem:[#allocation10 + $0xa70] sm:$0xff]
    %v2482 = vld [vmem:[#allocation10 + $0xa78] sm:$0xff]
    %v2483 = vld [vmem:[#allocation10 + $0xa80] sm:$0xff]
    %v2484 = vld [vmem:[#allocation10 + $0xa88] sm:$0xff]
    %v2485 = vld [vmem:[#allocation10 + $0xa90] sm:$0xff]
    %v2486 = vld [vmem:[#allocation10 + $0xa98] sm:$0xff]
    %v2487 = vld [vmem:[#allocation10 + $0xaa0] sm:$0xff]
    %v2488 = vld [vmem:[#allocation10 + $0xaa8] sm:$0xff]
    %v2489 = vld [vmem:[#allocation10 + $0xab0] sm:$0xff]
    %v2490 = vld [vmem:[#allocation10 + $0xab8] sm:$0xff]
    %v2491 = vld [vmem:[#allocation10 + $0xac0] sm:$0xff]
    %v2492 = vld [vmem:[#allocation10 + $0xac8] sm:$0xff]
    %v2493 = vld [vmem:[#allocation10 + $0xad0] sm:$0xff]
    %v2494 = vld [vmem:[#allocation10 + $0xad8] sm:$0xff]
    %v2495 = vld [vmem:[#allocation10 + $0xae0] sm:$0xff]
    %v2496 = vld [vmem:[#allocation10 + $0xae8] sm:$0xff]
    %v2497 = vld [vmem:[#allocation10 + $0xaf0] sm:$0xff]
    %v2498 = vld [vmem:[#allocation10 + $0xaf8] sm:$0xff]
    %v2499 = vld [vmem:[#allocation10 + $0xb00] sm:$0xff]
    %v2500 = vld [vmem:[#allocation10 + $0xb08] sm:$0xff]
    %v2501 = vld [vmem:[#allocation10 + $0xb10] sm:$0xff]
    %v2502 = vld [vmem:[#allocation10 + $0xb18] sm:$0xff]
    %v2503 = vld [vmem:[#allocation10 + $0xb20] sm:$0xff]
    %v2504 = vld [vmem:[#allocation10 + $0xb28] sm:$0xff]
    %v2505 = vld [vmem:[#allocation10 + $0xb30] sm:$0xff]
    %v2506 = vld [vmem:[#allocation10 + $0xb38] sm:$0xff]
    %v2507 = vld [vmem:[#allocation10 + $0xb40] sm:$0xff]
    %v2508 = vld [vmem:[#allocation10 + $0xb48] sm:$0xff]
    %v2509 = vld [vmem:[#allocation10 + $0xb50] sm:$0xff]
    %v2510 = vld [vmem:[#allocation10 + $0xb58] sm:$0xff]
    %v2511 = vld [vmem:[#allocation10 + $0xb60] sm:$0xff]
    %v2512 = vld [vmem:[#allocation10 + $0xb68] sm:$0xff]
    %v2513 = vld [vmem:[#allocation10 + $0xb70] sm:$0xff]
    %v2514 = vld [vmem:[#allocation10 + $0xb78] sm:$0xff]
    %v2515 = vld [vmem:[#allocation10 + $0xb80] sm:$0xff]
    %v2516 = vld [vmem:[#allocation10 + $0xb88] sm:$0xff]
    %v2517 = vld [vmem:[#allocation10 + $0xb90] sm:$0xff]
    %v2518 = vld [vmem:[#allocation10 + $0xb98] sm:$0xff]
    %v2519 = vld [vmem:[#allocation10 + $0xba0] sm:$0xff]
    %v2520 = vld [vmem:[#allocation10 + $0xba8] sm:$0xff]
    %v2521 = vld [vmem:[#allocation10 + $0xbb0] sm:$0xff]
    %v2522 = vld [vmem:[#allocation10 + $0xbb8] sm:$0xff]
    %v2523 = vld [vmem:[#allocation10 + $0xbc0] sm:$0xff]
    %v2524 = vld [vmem:[#allocation10 + $0xbc8] sm:$0xff]
    %v2525 = vld [vmem:[#allocation10 + $0xbd0] sm:$0xff]
    %v2526 = vld [vmem:[#allocation10 + $0xbd8] sm:$0xff]
    %v2527 = vld [vmem:[#allocation10 + $0xbe0] sm:$0xff]
    %v2528 = vld [vmem:[#allocation10 + $0xbe8] sm:$0xff]
    %v2529 = vld [vmem:[#allocation10 + $0xbf0] sm:$0xff]
    %v2530 = vld [vmem:[#allocation10 + $0xbf8] sm:$0xff]
    %v2531 = vld [vmem:[#allocation10 + $0xc00] sm:$0xff]
    %v2532 = vld [vmem:[#allocation10 + $0xc08] sm:$0xff]
    %v2533 = vld [vmem:[#allocation10 + $0xc10] sm:$0xff]
    %v2534 = vld [vmem:[#allocation10 + $0xc18] sm:$0xff]
    %v2535 = vld [vmem:[#allocation10 + $0xc20] sm:$0xff]
    %v2536 = vld [vmem:[#allocation10 + $0xc28] sm:$0xff]
    %v2537 = vld [vmem:[#allocation10 + $0xc30] sm:$0xff]
    %v2538 = vld [vmem:[#allocation10 + $0xc38] sm:$0xff]
    %v2539 = vld [vmem:[#allocation10 + $0xc40] sm:$0xff]
    %v2540 = vld [vmem:[#allocation10 + $0xc48] sm:$0xff]
    %v2541 = vld [vmem:[#allocation10 + $0xc50] sm:$0xff]
    %v2542 = vld [vmem:[#allocation10 + $0xc58] sm:$0xff]
    %v2543 = vld [vmem:[#allocation10 + $0xc60] sm:$0xff]
    %v2544 = vld [vmem:[#allocation10 + $0xc68] sm:$0xff]
    %v2545 = vld [vmem:[#allocation10 + $0xc70] sm:$0xff]
    %v2546 = vld [vmem:[#allocation10 + $0xc78] sm:$0xff]
    %v2547 = vld [vmem:[#allocation10 + $0xc80] sm:$0xff]
    %v2548 = vld [vmem:[#allocation10 + $0xc88] sm:$0xff]
    %v2549 = vld [vmem:[#allocation10 + $0xc90] sm:$0xff]
    %v2550 = vld [vmem:[#allocation10 + $0xc98] sm:$0xff]
    %v2551 = vld [vmem:[#allocation10 + $0xca0] sm:$0xff]
    %v2552 = vld [vmem:[#allocation10 + $0xca8] sm:$0xff]
    %v2553 = vld [vmem:[#allocation10 + $0xcb0] sm:$0xff]
    %v2554 = vld [vmem:[#allocation10 + $0xcb8] sm:$0xff]
    %v2555 = vld [vmem:[#allocation10 + $0xcc0] sm:$0xff]
    %v2556 = vld [vmem:[#allocation10 + $0xcc8] sm:$0xff]
    %v2557 = vld [vmem:[#allocation10 + $0xcd0] sm:$0xff]
    %v2558 = vld [vmem:[#allocation10 + $0xcd8] sm:$0xff]
    %v2559 = vld [vmem:[#allocation10 + $0xce0] sm:$0xff]
    %v2560 = vld [vmem:[#allocation10 + $0xce8] sm:$0xff]
    %v2561 = vld [vmem:[#allocation10 + $0xcf0] sm:$0xff]
    %v2562 = vld [vmem:[#allocation10 + $0xcf8] sm:$0xff]
    %v2563 = vld [vmem:[#allocation10 + $0xd00] sm:$0xff]
    %v2564 = vld [vmem:[#allocation10 + $0xd08] sm:$0xff]
    %v2565 = vld [vmem:[#allocation10 + $0xd10] sm:$0xff]
    %v2566 = vld [vmem:[#allocation10 + $0xd18] sm:$0xff]
    %v2567 = vld [vmem:[#allocation10 + $0xd20] sm:$0xff]
    %v2568 = vld [vmem:[#allocation10 + $0xd28] sm:$0xff]
    %v2569 = vld [vmem:[#allocation10 + $0xd30] sm:$0xff]
    %v2570 = vld [vmem:[#allocation10 + $0xd38] sm:$0xff]
    %v2571 = vld [vmem:[#allocation10 + $0xd40] sm:$0xff]
    %v2572 = vld [vmem:[#allocation10 + $0xd48] sm:$0xff]
    %v2573 = vld [vmem:[#allocation10 + $0xd50] sm:$0xff]
    %v2574 = vld [vmem:[#allocation10 + $0xd58] sm:$0xff]
    %v2575 = vld [vmem:[#allocation10 + $0xd60] sm:$0xff]
    %v2576 = vld [vmem:[#allocation10 + $0xd68] sm:$0xff]
    %v2577 = vld [vmem:[#allocation10 + $0xd70] sm:$0xff]
    %v2578 = vld [vmem:[#allocation10 + $0xd78] sm:$0xff]
    %v2579 = vld [vmem:[#allocation10 + $0xd80] sm:$0xff]
    %v2580 = vld [vmem:[#allocation10 + $0xd88] sm:$0xff]
    %v2581 = vld [vmem:[#allocation10 + $0xd90] sm:$0xff]
    %v2582 = vld [vmem:[#allocation10 + $0xd98] sm:$0xff]
    %v2583 = vld [vmem:[#allocation10 + $0xda0] sm:$0xff]
    %v2584 = vld [vmem:[#allocation10 + $0xda8] sm:$0xff]
    %v2585 = vld [vmem:[#allocation10 + $0xdb0] sm:$0xff]
    %v2586 = vld [vmem:[#allocation10 + $0xdb8] sm:$0xff]
    %v2587 = vld [vmem:[#allocation10 + $0xdc0] sm:$0xff]
    %v2588 = vld [vmem:[#allocation10 + $0xdc8] sm:$0xff]
    %v2589 = vld [vmem:[#allocation10 + $0xdd0] sm:$0xff]
    %v2590 = vld [vmem:[#allocation10 + $0xdd8] sm:$0xff]
    %v2591 = vld [vmem:[#allocation10 + $0xde0] sm:$0xff]
    %v2592 = vld [vmem:[#allocation10 + $0xde8] sm:$0xff]
    %v2593 = vld [vmem:[#allocation10 + $0xdf0] sm:$0xff]
    %v2594 = vld [vmem:[#allocation10 + $0xdf8] sm:$0xff]
    %v2595 = vld [vmem:[#allocation10 + $0xe00] sm:$0xff]
    %v2596 = vld [vmem:[#allocation10 + $0xe08] sm:$0xff]
    %v2597 = vld [vmem:[#allocation10 + $0xe10] sm:$0xff]
    %v2598 = vld [vmem:[#allocation10 + $0xe18] sm:$0xff]
    %v2599 = vld [vmem:[#allocation10 + $0xe20] sm:$0xff]
    %v2600 = vld [vmem:[#allocation10 + $0xe28] sm:$0xff]
    %v2601 = vld [vmem:[#allocation10 + $0xe30] sm:$0xff]
    %v2602 = vld [vmem:[#allocation10 + $0xe38] sm:$0xff]
    %v2603 = vld [vmem:[#allocation10 + $0xe40] sm:$0xff]
    %v2604 = vld [vmem:[#allocation10 + $0xe48] sm:$0xff]
    %v2605 = vld [vmem:[#allocation10 + $0xe50] sm:$0xff]
    %v2606 = vld [vmem:[#allocation10 + $0xe58] sm:$0xff]
    %v2607 = vld [vmem:[#allocation10 + $0xe60] sm:$0xff]
    %v2608 = vld [vmem:[#allocation10 + $0xe68] sm:$0xff]
    %v2609 = vld [vmem:[#allocation10 + $0xe70] sm:$0xff]
    %v2610 = vld [vmem:[#allocation10 + $0xe78] sm:$0xff]
    %v2611 = vld [vmem:[#allocation10 + $0xe80] sm:$0xff]
    %v2612 = vld [vmem:[#allocation10 + $0xe88] sm:$0xff]
    %v2613 = vld [vmem:[#allocation10 + $0xe90] sm:$0xff]
    %v2614 = vld [vmem:[#allocation10 + $0xe98] sm:$0xff]
    %v2615 = vld [vmem:[#allocation10 + $0xea0] sm:$0xff]
    %v2616 = vld [vmem:[#allocation10 + $0xea8] sm:$0xff]
    %v2617 = vld [vmem:[#allocation10 + $0xeb0] sm:$0xff]
    %v2618 = vld [vmem:[#allocation10 + $0xeb8] sm:$0xff]
    %v2619 = vld [vmem:[#allocation10 + $0xec0] sm:$0xff]
    %v2620 = vld [vmem:[#allocation10 + $0xec8] sm:$0xff]
    %v2621 = vld [vmem:[#allocation10 + $0xed0] sm:$0xff]
    %v2622 = vld [vmem:[#allocation10 + $0xed8] sm:$0xff]
    %v2623 = vld [vmem:[#allocation10 + $0xee0] sm:$0xff]
    %v2624 = vld [vmem:[#allocation10 + $0xee8] sm:$0xff]
    %v2625 = vld [vmem:[#allocation10 + $0xef0] sm:$0xff]
    %v2626 = vld [vmem:[#allocation10 + $0xef8] sm:$0xff]
    %v2627 = vld [vmem:[#allocation10 + $0xf00] sm:$0xff]
    %v2628 = vld [vmem:[#allocation10 + $0xf08] sm:$0xff]
    %v2629 = vld [vmem:[#allocation10 + $0xf10] sm:$0xff]
    %v2630 = vld [vmem:[#allocation10 + $0xf18] sm:$0xff]
    %v2631 = vld [vmem:[#allocation10 + $0xf20] sm:$0xff]
    %v2632 = vld [vmem:[#allocation10 + $0xf28] sm:$0xff]
    %v2633 = vld [vmem:[#allocation10 + $0xf30] sm:$0xff]
    %v2634 = vld [vmem:[#allocation10 + $0xf38] sm:$0xff]
    %v2635 = vld [vmem:[#allocation10 + $0xf40] sm:$0xff]
    %v2636 = vld [vmem:[#allocation10 + $0xf48] sm:$0xff]
    %v2637 = vld [vmem:[#allocation10 + $0xf50] sm:$0xff]
    %v2638 = vld [vmem:[#allocation10 + $0xf58] sm:$0xff]
    %v2639 = vld [vmem:[#allocation10 + $0xf60] sm:$0xff]
    %v2640 = vld [vmem:[#allocation10 + $0xf68] sm:$0xff]
    %v2641 = vld [vmem:[#allocation10 + $0xf70] sm:$0xff]
    %v2642 = vld [vmem:[#allocation10 + $0xf78] sm:$0xff]
    %v2643 = vld [vmem:[#allocation10 + $0xf80] sm:$0xff]
    %v2644 = vld [vmem:[#allocation10 + $0xf88] sm:$0xff]
    %v2645 = vld [vmem:[#allocation10 + $0xf90] sm:$0xff]
    %v2646 = vld [vmem:[#allocation10 + $0xf98] sm:$0xff]
    %v2647 = vld [vmem:[#allocation10 + $0xfa0] sm:$0xff]
    %v2648 = vld [vmem:[#allocation10 + $0xfa8] sm:$0xff]
    %v2649 = vld [vmem:[#allocation10 + $0xfb0] sm:$0xff]
    %v2650 = vld [vmem:[#allocation10 + $0xfb8] sm:$0xff]
    %v2651 = vld [vmem:[#allocation10 + $0xfc0] sm:$0xff]
    %v2652 = vld [vmem:[#allocation10 + $0xfc8] sm:$0xff]
    %v2653 = vld [vmem:[#allocation10 + $0xfd0] sm:$0xff]
    %v2654 = vld [vmem:[#allocation10 + $0xfd8] sm:$0xff]
    %v2655 = vld [vmem:[#allocation10 + $0xfe0] sm:$0xff]
    %v2656 = vld [vmem:[#allocation10 + $0xfe8] sm:$0xff]
    %v2657 = vld [vmem:[#allocation10 + $0xff0] sm:$0xff]
    %v2658 = vld [vmem:[#allocation10 + $0xff8] sm:$0xff]
    %v2659 = vld [vmem:[#allocation11] sm:$0xff]
    %v2660 = vld [vmem:[#allocation11 + $0x8] sm:$0xff]
    %v2663 = vperm.slane %v2659, 0
    %v2664 = vperm.slane %v2659, 1
    %v2665 = vperm.slane %v2659, 2
    %v2666 = vperm.slane %v2659, 3
    %v2667 = vperm.slane %v2659, 4
    %v2668 = vperm.slane %v2659, 5
    %v2669 = vperm.slane %v2659, 6
    %v2670 = vperm.slane %v2659, 7
    %v2671 = vperm.slane %v2660, 0
    %v2672 = vperm.slane %v2660, 1
    %v2673 = vperm.slane %v2660, 2
    %v2674 = vperm.slane %v2660, 3
    %v2675 = vperm.slane %v2660, 4
    %v2676 = vperm.slane %v2660, 5
    %v2677 = vperm.slane %v2660, 6
    %v2678 = vperm.slane %v2660, 7
    %v3207 = vunpack.c.l.b16 %v2147
    %v3208 = vunpack.c.h.b16 %v2147
    %v3209 = vunpack.c.l.b16 %v2148
    %v3210 = vunpack.c.h.b16 %v2148
    %v3211 = vunpack.c.l.b16 %v2149
    %v3212 = vunpack.c.h.b16 %v2149
    %v3213 = vunpack.c.l.b16 %v2150
    %v3214 = vunpack.c.h.b16 %v2150
    %v3215 = vunpack.c.l.b16 %v2151
    %v3216 = vunpack.c.h.b16 %v2151
    %v3217 = vunpack.c.l.b16 %v2152
    %v3218 = vunpack.c.h.b16 %v2152
    %v3219 = vunpack.c.l.b16 %v2153
    %v3220 = vunpack.c.h.b16 %v2153
    %v3221 = vunpack.c.l.b16 %v2154
    %v3222 = vunpack.c.h.b16 %v2154
    %v3223 = vunpack.c.l.b16 %v2155
    %v3224 = vunpack.c.h.b16 %v2155
    %v3225 = vunpack.c.l.b16 %v2156
    %v3226 = vunpack.c.h.b16 %v2156
    %v3227 = vunpack.c.l.b16 %v2157
    %v3228 = vunpack.c.h.b16 %v2157
    %v3229 = vunpack.c.l.b16 %v2158
    %v3230 = vunpack.c.h.b16 %v2158
    %v3231 = vunpack.c.l.b16 %v2159
    %v3232 = vunpack.c.h.b16 %v2159
    %v3233 = vunpack.c.l.b16 %v2160
    %v3234 = vunpack.c.h.b16 %v2160
    %v3235 = vunpack.c.l.b16 %v2161
    %v3236 = vunpack.c.h.b16 %v2161
    %v3237 = vunpack.c.l.b16 %v2162
    %v3238 = vunpack.c.h.b16 %v2162
    %v3239 = vunpack.c.l.b16 %v2163
    %v3240 = vunpack.c.h.b16 %v2163
    %v3241 = vunpack.c.l.b16 %v2164
    %v3242 = vunpack.c.h.b16 %v2164
    %v3243 = vunpack.c.l.b16 %v2165
    %v3244 = vunpack.c.h.b16 %v2165
    %v3245 = vunpack.c.l.b16 %v2166
    %v3246 = vunpack.c.h.b16 %v2166
    %v3247 = vunpack.c.l.b16 %v2167
    %v3248 = vunpack.c.h.b16 %v2167
    %v3249 = vunpack.c.l.b16 %v2168
    %v3250 = vunpack.c.h.b16 %v2168
    %v3251 = vunpack.c.l.b16 %v2169
    %v3252 = vunpack.c.h.b16 %v2169
    %v3253 = vunpack.c.l.b16 %v2170
    %v3254 = vunpack.c.h.b16 %v2170
    %v3255 = vunpack.c.l.b16 %v2171
    %v3256 = vunpack.c.h.b16 %v2171
    %v3257 = vunpack.c.l.b16 %v2172
    %v3258 = vunpack.c.h.b16 %v2172
    %v3259 = vunpack.c.l.b16 %v2173
    %v3260 = vunpack.c.h.b16 %v2173
    %v3261 = vunpack.c.l.b16 %v2174
    %v3262 = vunpack.c.h.b16 %v2174
    %v3263 = vunpack.c.l.b16 %v2175
    %v3264 = vunpack.c.h.b16 %v2175
    %v3265 = vunpack.c.l.b16 %v2176
    %v3266 = vunpack.c.h.b16 %v2176
    %v3267 = vunpack.c.l.b16 %v2177
    %v3268 = vunpack.c.h.b16 %v2177
    %v3269 = vunpack.c.l.b16 %v2178
    %v3270 = vunpack.c.h.b16 %v2178
    %v3271 = vunpack.c.l.b16 %v2179
    %v3272 = vunpack.c.h.b16 %v2179
    %v3273 = vunpack.c.l.b16 %v2180
    %v3274 = vunpack.c.h.b16 %v2180
    %v3275 = vunpack.c.l.b16 %v2181
    %v3276 = vunpack.c.h.b16 %v2181
    %v3277 = vunpack.c.l.b16 %v2182
    %v3278 = vunpack.c.h.b16 %v2182
    %v3279 = vunpack.c.l.b16 %v2183
    %v3280 = vunpack.c.h.b16 %v2183
    %v3281 = vunpack.c.l.b16 %v2184
    %v3282 = vunpack.c.h.b16 %v2184
    %v3283 = vunpack.c.l.b16 %v2185
    %v3284 = vunpack.c.h.b16 %v2185
    %v3285 = vunpack.c.l.b16 %v2186
    %v3286 = vunpack.c.h.b16 %v2186
    %v3287 = vunpack.c.l.b16 %v2187
    %v3288 = vunpack.c.h.b16 %v2187
    %v3289 = vunpack.c.l.b16 %v2188
    %v3290 = vunpack.c.h.b16 %v2188
    %v3291 = vunpack.c.l.b16 %v2189
    %v3292 = vunpack.c.h.b16 %v2189
    %v3293 = vunpack.c.l.b16 %v2190
    %v3294 = vunpack.c.h.b16 %v2190
    %v3295 = vunpack.c.l.b16 %v2191
    %v3296 = vunpack.c.h.b16 %v2191
    %v3297 = vunpack.c.l.b16 %v2192
    %v3298 = vunpack.c.h.b16 %v2192
    %v3299 = vunpack.c.l.b16 %v2193
    %v3300 = vunpack.c.h.b16 %v2193
    %v3301 = vunpack.c.l.b16 %v2194
    %v3302 = vunpack.c.h.b16 %v2194
    %v3303 = vunpack.c.l.b16 %v2195
    %v3304 = vunpack.c.h.b16 %v2195
    %v3305 = vunpack.c.l.b16 %v2196
    %v3306 = vunpack.c.h.b16 %v2196
    %v3307 = vunpack.c.l.b16 %v2197
    %v3308 = vunpack.c.h.b16 %v2197
    %v3309 = vunpack.c.l.b16 %v2198
    %v3310 = vunpack.c.h.b16 %v2198
    %v3311 = vunpack.c.l.b16 %v2199
    %v3312 = vunpack.c.h.b16 %v2199
    %v3313 = vunpack.c.l.b16 %v2200
    %v3314 = vunpack.c.h.b16 %v2200
    %v3315 = vunpack.c.l.b16 %v2201
    %v3316 = vunpack.c.h.b16 %v2201
    %v3317 = vunpack.c.l.b16 %v2202
    %v3318 = vunpack.c.h.b16 %v2202
    %v3319 = vunpack.c.l.b16 %v2203
    %v3320 = vunpack.c.h.b16 %v2203
    %v3321 = vunpack.c.l.b16 %v2204
    %v3322 = vunpack.c.h.b16 %v2204
    %v3323 = vunpack.c.l.b16 %v2205
    %v3324 = vunpack.c.h.b16 %v2205
    %v3325 = vunpack.c.l.b16 %v2206
    %v3326 = vunpack.c.h.b16 %v2206
    %v3327 = vunpack.c.l.b16 %v2207
    %v3328 = vunpack.c.h.b16 %v2207
    %v3329 = vunpack.c.l.b16 %v2208
    %v3330 = vunpack.c.h.b16 %v2208
    %v3331 = vunpack.c.l.b16 %v2209
    %v3332 = vunpack.c.h.b16 %v2209
    %v3333 = vunpack.c.l.b16 %v2210
    %v3334 = vunpack.c.h.b16 %v2210
    %v3335 = vunpack.c.l.b16 %v2211
    %v3336 = vunpack.c.h.b16 %v2211
    %v3337 = vunpack.c.l.b16 %v2212
    %v3338 = vunpack.c.h.b16 %v2212
    %v3339 = vunpack.c.l.b16 %v2213
    %v3340 = vunpack.c.h.b16 %v2213
    %v3341 = vunpack.c.l.b16 %v2214
    %v3342 = vunpack.c.h.b16 %v2214
    %v3343 = vunpack.c.l.b16 %v2215
    %v3344 = vunpack.c.h.b16 %v2215
    %v3345 = vunpack.c.l.b16 %v2216
    %v3346 = vunpack.c.h.b16 %v2216
    %v3347 = vunpack.c.l.b16 %v2217
    %v3348 = vunpack.c.h.b16 %v2217
    %v3349 = vunpack.c.l.b16 %v2218
    %v3350 = vunpack.c.h.b16 %v2218
    %v3351 = vunpack.c.l.b16 %v2219
    %v3352 = vunpack.c.h.b16 %v2219
    %v3353 = vunpack.c.l.b16 %v2220
    %v3354 = vunpack.c.h.b16 %v2220
    %v3355 = vunpack.c.l.b16 %v2221
    %v3356 = vunpack.c.h.b16 %v2221
    %v3357 = vunpack.c.l.b16 %v2222
    %v3358 = vunpack.c.h.b16 %v2222
    %v3359 = vunpack.c.l.b16 %v2223
    %v3360 = vunpack.c.h.b16 %v2223
    %v3361 = vunpack.c.l.b16 %v2224
    %v3362 = vunpack.c.h.b16 %v2224
    %v3363 = vunpack.c.l.b16 %v2225
    %v3364 = vunpack.c.h.b16 %v2225
    %v3365 = vunpack.c.l.b16 %v2226
    %v3366 = vunpack.c.h.b16 %v2226
    %v3367 = vunpack.c.l.b16 %v2227
    %v3368 = vunpack.c.h.b16 %v2227
    %v3369 = vunpack.c.l.b16 %v2228
    %v3370 = vunpack.c.h.b16 %v2228
    %v3371 = vunpack.c.l.b16 %v2229
    %v3372 = vunpack.c.h.b16 %v2229
    %v3373 = vunpack.c.l.b16 %v2230
    %v3374 = vunpack.c.h.b16 %v2230
    %v3375 = vunpack.c.l.b16 %v2231
    %v3376 = vunpack.c.h.b16 %v2231
    %v3377 = vunpack.c.l.b16 %v2232
    %v3378 = vunpack.c.h.b16 %v2232
    %v3379 = vunpack.c.l.b16 %v2233
    %v3380 = vunpack.c.h.b16 %v2233
    %v3381 = vunpack.c.l.b16 %v2234
    %v3382 = vunpack.c.h.b16 %v2234
    %v3383 = vunpack.c.l.b16 %v2235
    %v3384 = vunpack.c.h.b16 %v2235
    %v3385 = vunpack.c.l.b16 %v2236
    %v3386 = vunpack.c.h.b16 %v2236
    %v3387 = vunpack.c.l.b16 %v2237
    %v3388 = vunpack.c.h.b16 %v2237
    %v3389 = vunpack.c.l.b16 %v2238
    %v3390 = vunpack.c.h.b16 %v2238
    %v3391 = vunpack.c.l.b16 %v2239
    %v3392 = vunpack.c.h.b16 %v2239
    %v3393 = vunpack.c.l.b16 %v2240
    %v3394 = vunpack.c.h.b16 %v2240
    %v3395 = vunpack.c.l.b16 %v2241
    %v3396 = vunpack.c.h.b16 %v2241
    %v3397 = vunpack.c.l.b16 %v2242
    %v3398 = vunpack.c.h.b16 %v2242
    %v3399 = vunpack.c.l.b16 %v2243
    %v3400 = vunpack.c.h.b16 %v2243
    %v3401 = vunpack.c.l.b16 %v2244
    %v3402 = vunpack.c.h.b16 %v2244
    %v3403 = vunpack.c.l.b16 %v2245
    %v3404 = vunpack.c.h.b16 %v2245
    %v3405 = vunpack.c.l.b16 %v2246
    %v3406 = vunpack.c.h.b16 %v2246
    %v3407 = vunpack.c.l.b16 %v2247
    %v3408 = vunpack.c.h.b16 %v2247
    %v3409 = vunpack.c.l.b16 %v2248
    %v3410 = vunpack.c.h.b16 %v2248
    %v3411 = vunpack.c.l.b16 %v2249
    %v3412 = vunpack.c.h.b16 %v2249
    %v3413 = vunpack.c.l.b16 %v2250
    %v3414 = vunpack.c.h.b16 %v2250
    %v3415 = vunpack.c.l.b16 %v2251
    %v3416 = vunpack.c.h.b16 %v2251
    %v3417 = vunpack.c.l.b16 %v2252
    %v3418 = vunpack.c.h.b16 %v2252
    %v3419 = vunpack.c.l.b16 %v2253
    %v3420 = vunpack.c.h.b16 %v2253
    %v3421 = vunpack.c.l.b16 %v2254
    %v3422 = vunpack.c.h.b16 %v2254
    %v3423 = vunpack.c.l.b16 %v2255
    %v3424 = vunpack.c.h.b16 %v2255
    %v3425 = vunpack.c.l.b16 %v2256
    %v3426 = vunpack.c.h.b16 %v2256
    %v3427 = vunpack.c.l.b16 %v2257
    %v3428 = vunpack.c.h.b16 %v2257
    %v3429 = vunpack.c.l.b16 %v2258
    %v3430 = vunpack.c.h.b16 %v2258
    %v3431 = vunpack.c.l.b16 %v2259
    %v3432 = vunpack.c.h.b16 %v2259
    %v3433 = vunpack.c.l.b16 %v2260
    %v3434 = vunpack.c.h.b16 %v2260
    %v3435 = vunpack.c.l.b16 %v2261
    %v3436 = vunpack.c.h.b16 %v2261
    %v3437 = vunpack.c.l.b16 %v2262
    %v3438 = vunpack.c.h.b16 %v2262
    %v3439 = vunpack.c.l.b16 %v2263
    %v3440 = vunpack.c.h.b16 %v2263
    %v3441 = vunpack.c.l.b16 %v2264
    %v3442 = vunpack.c.h.b16 %v2264
    %v3443 = vunpack.c.l.b16 %v2265
    %v3444 = vunpack.c.h.b16 %v2265
    %v3445 = vunpack.c.l.b16 %v2266
    %v3446 = vunpack.c.h.b16 %v2266
    %v3447 = vunpack.c.l.b16 %v2267
    %v3448 = vunpack.c.h.b16 %v2267
    %v3449 = vunpack.c.l.b16 %v2268
    %v3450 = vunpack.c.h.b16 %v2268
    %v3451 = vunpack.c.l.b16 %v2269
    %v3452 = vunpack.c.h.b16 %v2269
    %v3453 = vunpack.c.l.b16 %v2270
    %v3454 = vunpack.c.h.b16 %v2270
    %v3455 = vunpack.c.l.b16 %v2271
    %v3456 = vunpack.c.h.b16 %v2271
    %v3457 = vunpack.c.l.b16 %v2272
    %v3458 = vunpack.c.h.b16 %v2272
    %v3459 = vunpack.c.l.b16 %v2273
    %v3460 = vunpack.c.h.b16 %v2273
    %v3461 = vunpack.c.l.b16 %v2274
    %v3462 = vunpack.c.h.b16 %v2274
    %v3463 = vunpack.c.l.b16 %v2275
    %v3464 = vunpack.c.h.b16 %v2275
    %v3465 = vunpack.c.l.b16 %v2276
    %v3466 = vunpack.c.h.b16 %v2276
    %v3467 = vunpack.c.l.b16 %v2277
    %v3468 = vunpack.c.h.b16 %v2277
    %v3469 = vunpack.c.l.b16 %v2278
    %v3470 = vunpack.c.h.b16 %v2278
    %v3471 = vunpack.c.l.b16 %v2279
    %v3472 = vunpack.c.h.b16 %v2279
    %v3473 = vunpack.c.l.b16 %v2280
    %v3474 = vunpack.c.h.b16 %v2280
    %v3475 = vunpack.c.l.b16 %v2281
    %v3476 = vunpack.c.h.b16 %v2281
    %v3477 = vunpack.c.l.b16 %v2282
    %v3478 = vunpack.c.h.b16 %v2282
    %v3479 = vunpack.c.l.b16 %v2283
    %v3480 = vunpack.c.h.b16 %v2283
    %v3481 = vunpack.c.l.b16 %v2284
    %v3482 = vunpack.c.h.b16 %v2284
    %v3483 = vunpack.c.l.b16 %v2285
    %v3484 = vunpack.c.h.b16 %v2285
    %v3485 = vunpack.c.l.b16 %v2286
    %v3486 = vunpack.c.h.b16 %v2286
    %v3487 = vunpack.c.l.b16 %v2287
    %v3488 = vunpack.c.h.b16 %v2287
    %v3489 = vunpack.c.l.b16 %v2288
    %v3490 = vunpack.c.h.b16 %v2288
    %v3491 = vunpack.c.l.b16 %v2289
    %v3492 = vunpack.c.h.b16 %v2289
    %v3493 = vunpack.c.l.b16 %v2290
    %v3494 = vunpack.c.h.b16 %v2290
    %v3495 = vunpack.c.l.b16 %v2291
    %v3496 = vunpack.c.h.b16 %v2291
    %v3497 = vunpack.c.l.b16 %v2292
    %v3498 = vunpack.c.h.b16 %v2292
    %v3499 = vunpack.c.l.b16 %v2293
    %v3500 = vunpack.c.h.b16 %v2293
    %v3501 = vunpack.c.l.b16 %v2294
    %v3502 = vunpack.c.h.b16 %v2294
    %v3503 = vunpack.c.l.b16 %v2295
    %v3504 = vunpack.c.h.b16 %v2295
    %v3505 = vunpack.c.l.b16 %v2296
    %v3506 = vunpack.c.h.b16 %v2296
    %v3507 = vunpack.c.l.b16 %v2297
    %v3508 = vunpack.c.h.b16 %v2297
    %v3509 = vunpack.c.l.b16 %v2298
    %v3510 = vunpack.c.h.b16 %v2298
    %v3511 = vunpack.c.l.b16 %v2299
    %v3512 = vunpack.c.h.b16 %v2299
    %v3513 = vunpack.c.l.b16 %v2300
    %v3514 = vunpack.c.h.b16 %v2300
    %v3515 = vunpack.c.l.b16 %v2301
    %v3516 = vunpack.c.h.b16 %v2301
    %v3517 = vunpack.c.l.b16 %v2302
    %v3518 = vunpack.c.h.b16 %v2302
    %v3519 = vunpack.c.l.b16 %v2303
    %v3520 = vunpack.c.h.b16 %v2303
    %v3521 = vunpack.c.l.b16 %v2304
    %v3522 = vunpack.c.h.b16 %v2304
    %v3523 = vunpack.c.l.b16 %v2305
    %v3524 = vunpack.c.h.b16 %v2305
    %v3525 = vunpack.c.l.b16 %v2306
    %v3526 = vunpack.c.h.b16 %v2306
    %v3527 = vunpack.c.l.b16 %v2307
    %v3528 = vunpack.c.h.b16 %v2307
    %v3529 = vunpack.c.l.b16 %v2308
    %v3530 = vunpack.c.h.b16 %v2308
    %v3531 = vunpack.c.l.b16 %v2309
    %v3532 = vunpack.c.h.b16 %v2309
    %v3533 = vunpack.c.l.b16 %v2310
    %v3534 = vunpack.c.h.b16 %v2310
    %v3535 = vunpack.c.l.b16 %v2311
    %v3536 = vunpack.c.h.b16 %v2311
    %v3537 = vunpack.c.l.b16 %v2312
    %v3538 = vunpack.c.h.b16 %v2312
    %v3539 = vunpack.c.l.b16 %v2313
    %v3540 = vunpack.c.h.b16 %v2313
    %v3541 = vunpack.c.l.b16 %v2314
    %v3542 = vunpack.c.h.b16 %v2314
    %v3543 = vunpack.c.l.b16 %v2315
    %v3544 = vunpack.c.h.b16 %v2315
    %v3545 = vunpack.c.l.b16 %v2316
    %v3546 = vunpack.c.h.b16 %v2316
    %v3547 = vunpack.c.l.b16 %v2317
    %v3548 = vunpack.c.h.b16 %v2317
    %v3549 = vunpack.c.l.b16 %v2318
    %v3550 = vunpack.c.h.b16 %v2318
    %v3551 = vunpack.c.l.b16 %v2319
    %v3552 = vunpack.c.h.b16 %v2319
    %v3553 = vunpack.c.l.b16 %v2320
    %v3554 = vunpack.c.h.b16 %v2320
    %v3555 = vunpack.c.l.b16 %v2321
    %v3556 = vunpack.c.h.b16 %v2321
    %v3557 = vunpack.c.l.b16 %v2322
    %v3558 = vunpack.c.h.b16 %v2322
    %v3559 = vunpack.c.l.b16 %v2323
    %v3560 = vunpack.c.h.b16 %v2323
    %v3561 = vunpack.c.l.b16 %v2324
    %v3562 = vunpack.c.h.b16 %v2324
    %v3563 = vunpack.c.l.b16 %v2325
    %v3564 = vunpack.c.h.b16 %v2325
    %v3565 = vunpack.c.l.b16 %v2326
    %v3566 = vunpack.c.h.b16 %v2326
    %v3567 = vunpack.c.l.b16 %v2327
    %v3568 = vunpack.c.h.b16 %v2327
    %v3569 = vunpack.c.l.b16 %v2328
    %v3570 = vunpack.c.h.b16 %v2328
    %v3571 = vunpack.c.l.b16 %v2329
    %v3572 = vunpack.c.h.b16 %v2329
    %v3573 = vunpack.c.l.b16 %v2330
    %v3574 = vunpack.c.h.b16 %v2330
    %v3575 = vunpack.c.l.b16 %v2331
    %v3576 = vunpack.c.h.b16 %v2331
    %v3577 = vunpack.c.l.b16 %v2332
    %v3578 = vunpack.c.h.b16 %v2332
    %v3579 = vunpack.c.l.b16 %v2333
    %v3580 = vunpack.c.h.b16 %v2333
    %v3581 = vunpack.c.l.b16 %v2334
    %v3582 = vunpack.c.h.b16 %v2334
    %v3583 = vunpack.c.l.b16 %v2335
    %v3584 = vunpack.c.h.b16 %v2335
    %v3585 = vunpack.c.l.b16 %v2336
    %v3586 = vunpack.c.h.b16 %v2336
    %v3587 = vunpack.c.l.b16 %v2337
    %v3588 = vunpack.c.h.b16 %v2337
    %v3589 = vunpack.c.l.b16 %v2338
    %v3590 = vunpack.c.h.b16 %v2338
    %v3591 = vunpack.c.l.b16 %v2339
    %v3592 = vunpack.c.h.b16 %v2339
    %v3593 = vunpack.c.l.b16 %v2340
    %v3594 = vunpack.c.h.b16 %v2340
    %v3595 = vunpack.c.l.b16 %v2341
    %v3596 = vunpack.c.h.b16 %v2341
    %v3597 = vunpack.c.l.b16 %v2342
    %v3598 = vunpack.c.h.b16 %v2342
    %v3599 = vunpack.c.l.b16 %v2343
    %v3600 = vunpack.c.h.b16 %v2343
    %v3601 = vunpack.c.l.b16 %v2344
    %v3602 = vunpack.c.h.b16 %v2344
    %v3603 = vunpack.c.l.b16 %v2345
    %v3604 = vunpack.c.h.b16 %v2345
    %v3605 = vunpack.c.l.b16 %v2346
    %v3606 = vunpack.c.h.b16 %v2346
    %v3607 = vunpack.c.l.b16 %v2347
    %v3608 = vunpack.c.h.b16 %v2347
    %v3609 = vunpack.c.l.b16 %v2348
    %v3610 = vunpack.c.h.b16 %v2348
    %v3611 = vunpack.c.l.b16 %v2349
    %v3612 = vunpack.c.h.b16 %v2349
    %v3613 = vunpack.c.l.b16 %v2350
    %v3614 = vunpack.c.h.b16 %v2350
    %v3615 = vunpack.c.l.b16 %v2351
    %v3616 = vunpack.c.h.b16 %v2351
    %v3617 = vunpack.c.l.b16 %v2352
    %v3618 = vunpack.c.h.b16 %v2352
    %v3619 = vunpack.c.l.b16 %v2353
    %v3620 = vunpack.c.h.b16 %v2353
    %v3621 = vunpack.c.l.b16 %v2354
    %v3622 = vunpack.c.h.b16 %v2354
    %v3623 = vunpack.c.l.b16 %v2355
    %v3624 = vunpack.c.h.b16 %v2355
    %v3625 = vunpack.c.l.b16 %v2356
    %v3626 = vunpack.c.h.b16 %v2356
    %v3627 = vunpack.c.l.b16 %v2357
    %v3628 = vunpack.c.h.b16 %v2357
    %v3629 = vunpack.c.l.b16 %v2358
    %v3630 = vunpack.c.h.b16 %v2358
    %v3631 = vunpack.c.l.b16 %v2359
    %v3632 = vunpack.c.h.b16 %v2359
    %v3633 = vunpack.c.l.b16 %v2360
    %v3634 = vunpack.c.h.b16 %v2360
    %v3635 = vunpack.c.l.b16 %v2361
    %v3636 = vunpack.c.h.b16 %v2361
    %v3637 = vunpack.c.l.b16 %v2362
    %v3638 = vunpack.c.h.b16 %v2362
    %v3639 = vunpack.c.l.b16 %v2363
    %v3640 = vunpack.c.h.b16 %v2363
    %v3641 = vunpack.c.l.b16 %v2364
    %v3642 = vunpack.c.h.b16 %v2364
    %v3643 = vunpack.c.l.b16 %v2365
    %v3644 = vunpack.c.h.b16 %v2365
    %v3645 = vunpack.c.l.b16 %v2366
    %v3646 = vunpack.c.h.b16 %v2366
    %v3647 = vunpack.c.l.b16 %v2367
    %v3648 = vunpack.c.h.b16 %v2367
    %v3649 = vunpack.c.l.b16 %v2368
    %v3650 = vunpack.c.h.b16 %v2368
    %v3651 = vunpack.c.l.b16 %v2369
    %v3652 = vunpack.c.h.b16 %v2369
    %v3653 = vunpack.c.l.b16 %v2370
    %v3654 = vunpack.c.h.b16 %v2370
    %v3655 = vunpack.c.l.b16 %v2371
    %v3656 = vunpack.c.h.b16 %v2371
    %v3657 = vunpack.c.l.b16 %v2372
    %v3658 = vunpack.c.h.b16 %v2372
    %v3659 = vunpack.c.l.b16 %v2373
    %v3660 = vunpack.c.h.b16 %v2373
    %v3661 = vunpack.c.l.b16 %v2374
    %v3662 = vunpack.c.h.b16 %v2374
    %v3663 = vunpack.c.l.b16 %v2375
    %v3664 = vunpack.c.h.b16 %v2375
    %v3665 = vunpack.c.l.b16 %v2376
    %v3666 = vunpack.c.h.b16 %v2376
    %v3667 = vunpack.c.l.b16 %v2377
    %v3668 = vunpack.c.h.b16 %v2377
    %v3669 = vunpack.c.l.b16 %v2378
    %v3670 = vunpack.c.h.b16 %v2378
    %v3671 = vunpack.c.l.b16 %v2379
    %v3672 = vunpack.c.h.b16 %v2379
    %v3673 = vunpack.c.l.b16 %v2380
    %v3674 = vunpack.c.h.b16 %v2380
    %v3675 = vunpack.c.l.b16 %v2381
    %v3676 = vunpack.c.h.b16 %v2381
    %v3677 = vunpack.c.l.b16 %v2382
    %v3678 = vunpack.c.h.b16 %v2382
    %v3679 = vunpack.c.l.b16 %v2383
    %v3680 = vunpack.c.h.b16 %v2383
    %v3681 = vunpack.c.l.b16 %v2384
    %v3682 = vunpack.c.h.b16 %v2384
    %v3683 = vunpack.c.l.b16 %v2385
    %v3684 = vunpack.c.h.b16 %v2385
    %v3685 = vunpack.c.l.b16 %v2386
    %v3686 = vunpack.c.h.b16 %v2386
    %v3687 = vunpack.c.l.b16 %v2387
    %v3688 = vunpack.c.h.b16 %v2387
    %v3689 = vunpack.c.l.b16 %v2388
    %v3690 = vunpack.c.h.b16 %v2388
    %v3691 = vunpack.c.l.b16 %v2389
    %v3692 = vunpack.c.h.b16 %v2389
    %v3693 = vunpack.c.l.b16 %v2390
    %v3694 = vunpack.c.h.b16 %v2390
    %v3695 = vunpack.c.l.b16 %v2391
    %v3696 = vunpack.c.h.b16 %v2391
    %v3697 = vunpack.c.l.b16 %v2392
    %v3698 = vunpack.c.h.b16 %v2392
    %v3699 = vunpack.c.l.b16 %v2393
    %v3700 = vunpack.c.h.b16 %v2393
    %v3701 = vunpack.c.l.b16 %v2394
    %v3702 = vunpack.c.h.b16 %v2394
    %v3703 = vunpack.c.l.b16 %v2395
    %v3704 = vunpack.c.h.b16 %v2395
    %v3705 = vunpack.c.l.b16 %v2396
    %v3706 = vunpack.c.h.b16 %v2396
    %v3707 = vunpack.c.l.b16 %v2397
    %v3708 = vunpack.c.h.b16 %v2397
    %v3709 = vunpack.c.l.b16 %v2398
    %v3710 = vunpack.c.h.b16 %v2398
    %v3711 = vunpack.c.l.b16 %v2399
    %v3712 = vunpack.c.h.b16 %v2399
    %v3713 = vunpack.c.l.b16 %v2400
    %v3714 = vunpack.c.h.b16 %v2400
    %v3715 = vunpack.c.l.b16 %v2401
    %v3716 = vunpack.c.h.b16 %v2401
    %v3717 = vunpack.c.l.b16 %v2402
    %v3718 = vunpack.c.h.b16 %v2402
    %v3719 = vunpack.c.l.b16 %v2403
    %v3720 = vunpack.c.h.b16 %v2403
    %v3721 = vunpack.c.l.b16 %v2404
    %v3722 = vunpack.c.h.b16 %v2404
    %v3723 = vunpack.c.l.b16 %v2405
    %v3724 = vunpack.c.h.b16 %v2405
    %v3725 = vunpack.c.l.b16 %v2406
    %v3726 = vunpack.c.h.b16 %v2406
    %v3727 = vunpack.c.l.b16 %v2407
    %v3728 = vunpack.c.h.b16 %v2407
    %v3729 = vunpack.c.l.b16 %v2408
    %v3730 = vunpack.c.h.b16 %v2408
    %v3731 = vunpack.c.l.b16 %v2409
    %v3732 = vunpack.c.h.b16 %v2409
    %v3733 = vunpack.c.l.b16 %v2410
    %v3734 = vunpack.c.h.b16 %v2410
    %v3735 = vunpack.c.l.b16 %v2411
    %v3736 = vunpack.c.h.b16 %v2411
    %v3737 = vunpack.c.l.b16 %v2412
    %v3738 = vunpack.c.h.b16 %v2412
    %v3739 = vunpack.c.l.b16 %v2413
    %v3740 = vunpack.c.h.b16 %v2413
    %v3741 = vunpack.c.l.b16 %v2414
    %v3742 = vunpack.c.h.b16 %v2414
    %v3743 = vunpack.c.l.b16 %v2415
    %v3744 = vunpack.c.h.b16 %v2415
    %v3745 = vunpack.c.l.b16 %v2416
    %v3746 = vunpack.c.h.b16 %v2416
    %v3747 = vunpack.c.l.b16 %v2417
    %v3748 = vunpack.c.h.b16 %v2417
    %v3749 = vunpack.c.l.b16 %v2418
    %v3750 = vunpack.c.h.b16 %v2418
    %v3751 = vunpack.c.l.b16 %v2419
    %v3752 = vunpack.c.h.b16 %v2419
    %v3753 = vunpack.c.l.b16 %v2420
    %v3754 = vunpack.c.h.b16 %v2420
    %v3755 = vunpack.c.l.b16 %v2421
    %v3756 = vunpack.c.h.b16 %v2421
    %v3757 = vunpack.c.l.b16 %v2422
    %v3758 = vunpack.c.h.b16 %v2422
    %v3759 = vunpack.c.l.b16 %v2423
    %v3760 = vunpack.c.h.b16 %v2423
    %v3761 = vunpack.c.l.b16 %v2424
    %v3762 = vunpack.c.h.b16 %v2424
    %v3763 = vunpack.c.l.b16 %v2425
    %v3764 = vunpack.c.h.b16 %v2425
    %v3765 = vunpack.c.l.b16 %v2426
    %v3766 = vunpack.c.h.b16 %v2426
    %v3767 = vunpack.c.l.b16 %v2427
    %v3768 = vunpack.c.h.b16 %v2427
    %v3769 = vunpack.c.l.b16 %v2428
    %v3770 = vunpack.c.h.b16 %v2428
    %v3771 = vunpack.c.l.b16 %v2429
    %v3772 = vunpack.c.h.b16 %v2429
    %v3773 = vunpack.c.l.b16 %v2430
    %v3774 = vunpack.c.h.b16 %v2430
    %v3775 = vunpack.c.l.b16 %v2431
    %v3776 = vunpack.c.h.b16 %v2431
    %v3777 = vunpack.c.l.b16 %v2432
    %v3778 = vunpack.c.h.b16 %v2432
    %v3779 = vunpack.c.l.b16 %v2433
    %v3780 = vunpack.c.h.b16 %v2433
    %v3781 = vunpack.c.l.b16 %v2434
    %v3782 = vunpack.c.h.b16 %v2434
    %v3783 = vunpack.c.l.b16 %v2435
    %v3784 = vunpack.c.h.b16 %v2435
    %v3785 = vunpack.c.l.b16 %v2436
    %v3786 = vunpack.c.h.b16 %v2436
    %v3787 = vunpack.c.l.b16 %v2437
    %v3788 = vunpack.c.h.b16 %v2437
    %v3789 = vunpack.c.l.b16 %v2438
    %v3790 = vunpack.c.h.b16 %v2438
    %v3791 = vunpack.c.l.b16 %v2439
    %v3792 = vunpack.c.h.b16 %v2439
    %v3793 = vunpack.c.l.b16 %v2440
    %v3794 = vunpack.c.h.b16 %v2440
    %v3795 = vunpack.c.l.b16 %v2441
    %v3796 = vunpack.c.h.b16 %v2441
    %v3797 = vunpack.c.l.b16 %v2442
    %v3798 = vunpack.c.h.b16 %v2442
    %v3799 = vunpack.c.l.b16 %v2443
    %v3800 = vunpack.c.h.b16 %v2443
    %v3801 = vunpack.c.l.b16 %v2444
    %v3802 = vunpack.c.h.b16 %v2444
    %v3803 = vunpack.c.l.b16 %v2445
    %v3804 = vunpack.c.h.b16 %v2445
    %v3805 = vunpack.c.l.b16 %v2446
    %v3806 = vunpack.c.h.b16 %v2446
    %v3807 = vunpack.c.l.b16 %v2447
    %v3808 = vunpack.c.h.b16 %v2447
    %v3809 = vunpack.c.l.b16 %v2448
    %v3810 = vunpack.c.h.b16 %v2448
    %v3811 = vunpack.c.l.b16 %v2449
    %v3812 = vunpack.c.h.b16 %v2449
    %v3813 = vunpack.c.l.b16 %v2450
    %v3814 = vunpack.c.h.b16 %v2450
    %v3815 = vunpack.c.l.b16 %v2451
    %v3816 = vunpack.c.h.b16 %v2451
    %v3817 = vunpack.c.l.b16 %v2452
    %v3818 = vunpack.c.h.b16 %v2452
    %v3819 = vunpack.c.l.b16 %v2453
    %v3820 = vunpack.c.h.b16 %v2453
    %v3821 = vunpack.c.l.b16 %v2454
    %v3822 = vunpack.c.h.b16 %v2454
    %v3823 = vunpack.c.l.b16 %v2455
    %v3824 = vunpack.c.h.b16 %v2455
    %v3825 = vunpack.c.l.b16 %v2456
    %v3826 = vunpack.c.h.b16 %v2456
    %v3827 = vunpack.c.l.b16 %v2457
    %v3828 = vunpack.c.h.b16 %v2457
    %v3829 = vunpack.c.l.b16 %v2458
    %v3830 = vunpack.c.h.b16 %v2458
    %v3831 = vunpack.c.l.b16 %v2459
    %v3832 = vunpack.c.h.b16 %v2459
    %v3833 = vunpack.c.l.b16 %v2460
    %v3834 = vunpack.c.h.b16 %v2460
    %v3835 = vunpack.c.l.b16 %v2461
    %v3836 = vunpack.c.h.b16 %v2461
    %v3837 = vunpack.c.l.b16 %v2462
    %v3838 = vunpack.c.h.b16 %v2462
    %v3839 = vunpack.c.l.b16 %v2463
    %v3840 = vunpack.c.h.b16 %v2463
    %v3841 = vunpack.c.l.b16 %v2464
    %v3842 = vunpack.c.h.b16 %v2464
    %v3843 = vunpack.c.l.b16 %v2465
    %v3844 = vunpack.c.h.b16 %v2465
    %v3845 = vunpack.c.l.b16 %v2466
    %v3846 = vunpack.c.h.b16 %v2466
    %v3847 = vunpack.c.l.b16 %v2467
    %v3848 = vunpack.c.h.b16 %v2467
    %v3849 = vunpack.c.l.b16 %v2468
    %v3850 = vunpack.c.h.b16 %v2468
    %v3851 = vunpack.c.l.b16 %v2469
    %v3852 = vunpack.c.h.b16 %v2469
    %v3853 = vunpack.c.l.b16 %v2470
    %v3854 = vunpack.c.h.b16 %v2470
    %v3855 = vunpack.c.l.b16 %v2471
    %v3856 = vunpack.c.h.b16 %v2471
    %v3857 = vunpack.c.l.b16 %v2472
    %v3858 = vunpack.c.h.b16 %v2472
    %v3859 = vunpack.c.l.b16 %v2473
    %v3860 = vunpack.c.h.b16 %v2473
    %v3861 = vunpack.c.l.b16 %v2474
    %v3862 = vunpack.c.h.b16 %v2474
    %v3863 = vunpack.c.l.b16 %v2475
    %v3864 = vunpack.c.h.b16 %v2475
    %v3865 = vunpack.c.l.b16 %v2476
    %v3866 = vunpack.c.h.b16 %v2476
    %v3867 = vunpack.c.l.b16 %v2477
    %v3868 = vunpack.c.h.b16 %v2477
    %v3869 = vunpack.c.l.b16 %v2478
    %v3870 = vunpack.c.h.b16 %v2478
    %v3871 = vunpack.c.l.b16 %v2479
    %v3872 = vunpack.c.h.b16 %v2479
    %v3873 = vunpack.c.l.b16 %v2480
    %v3874 = vunpack.c.h.b16 %v2480
    %v3875 = vunpack.c.l.b16 %v2481
    %v3876 = vunpack.c.h.b16 %v2481
    %v3877 = vunpack.c.l.b16 %v2482
    %v3878 = vunpack.c.h.b16 %v2482
    %v3879 = vunpack.c.l.b16 %v2483
    %v3880 = vunpack.c.h.b16 %v2483
    %v3881 = vunpack.c.l.b16 %v2484
    %v3882 = vunpack.c.h.b16 %v2484
    %v3883 = vunpack.c.l.b16 %v2485
    %v3884 = vunpack.c.h.b16 %v2485
    %v3885 = vunpack.c.l.b16 %v2486
    %v3886 = vunpack.c.h.b16 %v2486
    %v3887 = vunpack.c.l.b16 %v2487
    %v3888 = vunpack.c.h.b16 %v2487
    %v3889 = vunpack.c.l.b16 %v2488
    %v3890 = vunpack.c.h.b16 %v2488
    %v3891 = vunpack.c.l.b16 %v2489
    %v3892 = vunpack.c.h.b16 %v2489
    %v3893 = vunpack.c.l.b16 %v2490
    %v3894 = vunpack.c.h.b16 %v2490
    %v3895 = vunpack.c.l.b16 %v2491
    %v3896 = vunpack.c.h.b16 %v2491
    %v3897 = vunpack.c.l.b16 %v2492
    %v3898 = vunpack.c.h.b16 %v2492
    %v3899 = vunpack.c.l.b16 %v2493
    %v3900 = vunpack.c.h.b16 %v2493
    %v3901 = vunpack.c.l.b16 %v2494
    %v3902 = vunpack.c.h.b16 %v2494
    %v3903 = vunpack.c.l.b16 %v2495
    %v3904 = vunpack.c.h.b16 %v2495
    %v3905 = vunpack.c.l.b16 %v2496
    %v3906 = vunpack.c.h.b16 %v2496
    %v3907 = vunpack.c.l.b16 %v2497
    %v3908 = vunpack.c.h.b16 %v2497
    %v3909 = vunpack.c.l.b16 %v2498
    %v3910 = vunpack.c.h.b16 %v2498
    %v3911 = vunpack.c.l.b16 %v2499
    %v3912 = vunpack.c.h.b16 %v2499
    %v3913 = vunpack.c.l.b16 %v2500
    %v3914 = vunpack.c.h.b16 %v2500
    %v3915 = vunpack.c.l.b16 %v2501
    %v3916 = vunpack.c.h.b16 %v2501
    %v3917 = vunpack.c.l.b16 %v2502
    %v3918 = vunpack.c.h.b16 %v2502
    %v3919 = vunpack.c.l.b16 %v2503
    %v3920 = vunpack.c.h.b16 %v2503
    %v3921 = vunpack.c.l.b16 %v2504
    %v3922 = vunpack.c.h.b16 %v2504
    %v3923 = vunpack.c.l.b16 %v2505
    %v3924 = vunpack.c.h.b16 %v2505
    %v3925 = vunpack.c.l.b16 %v2506
    %v3926 = vunpack.c.h.b16 %v2506
    %v3927 = vunpack.c.l.b16 %v2507
    %v3928 = vunpack.c.h.b16 %v2507
    %v3929 = vunpack.c.l.b16 %v2508
    %v3930 = vunpack.c.h.b16 %v2508
    %v3931 = vunpack.c.l.b16 %v2509
    %v3932 = vunpack.c.h.b16 %v2509
    %v3933 = vunpack.c.l.b16 %v2510
    %v3934 = vunpack.c.h.b16 %v2510
    %v3935 = vunpack.c.l.b16 %v2511
    %v3936 = vunpack.c.h.b16 %v2511
    %v3937 = vunpack.c.l.b16 %v2512
    %v3938 = vunpack.c.h.b16 %v2512
    %v3939 = vunpack.c.l.b16 %v2513
    %v3940 = vunpack.c.h.b16 %v2513
    %v3941 = vunpack.c.l.b16 %v2514
    %v3942 = vunpack.c.h.b16 %v2514
    %v3943 = vunpack.c.l.b16 %v2515
    %v3944 = vunpack.c.h.b16 %v2515
    %v3945 = vunpack.c.l.b16 %v2516
    %v3946 = vunpack.c.h.b16 %v2516
    %v3947 = vunpack.c.l.b16 %v2517
    %v3948 = vunpack.c.h.b16 %v2517
    %v3949 = vunpack.c.l.b16 %v2518
    %v3950 = vunpack.c.h.b16 %v2518
    %v3951 = vunpack.c.l.b16 %v2519
    %v3952 = vunpack.c.h.b16 %v2519
    %v3953 = vunpack.c.l.b16 %v2520
    %v3954 = vunpack.c.h.b16 %v2520
    %v3955 = vunpack.c.l.b16 %v2521
    %v3956 = vunpack.c.h.b16 %v2521
    %v3957 = vunpack.c.l.b16 %v2522
    %v3958 = vunpack.c.h.b16 %v2522
    %v3959 = vunpack.c.l.b16 %v2523
    %v3960 = vunpack.c.h.b16 %v2523
    %v3961 = vunpack.c.l.b16 %v2524
    %v3962 = vunpack.c.h.b16 %v2524
    %v3963 = vunpack.c.l.b16 %v2525
    %v3964 = vunpack.c.h.b16 %v2525
    %v3965 = vunpack.c.l.b16 %v2526
    %v3966 = vunpack.c.h.b16 %v2526
    %v3967 = vunpack.c.l.b16 %v2527
    %v3968 = vunpack.c.h.b16 %v2527
    %v3969 = vunpack.c.l.b16 %v2528
    %v3970 = vunpack.c.h.b16 %v2528
    %v3971 = vunpack.c.l.b16 %v2529
    %v3972 = vunpack.c.h.b16 %v2529
    %v3973 = vunpack.c.l.b16 %v2530
    %v3974 = vunpack.c.h.b16 %v2530
    %v3975 = vunpack.c.l.b16 %v2531
    %v3976 = vunpack.c.h.b16 %v2531
    %v3977 = vunpack.c.l.b16 %v2532
    %v3978 = vunpack.c.h.b16 %v2532
    %v3979 = vunpack.c.l.b16 %v2533
    %v3980 = vunpack.c.h.b16 %v2533
    %v3981 = vunpack.c.l.b16 %v2534
    %v3982 = vunpack.c.h.b16 %v2534
    %v3983 = vunpack.c.l.b16 %v2535
    %v3984 = vunpack.c.h.b16 %v2535
    %v3985 = vunpack.c.l.b16 %v2536
    %v3986 = vunpack.c.h.b16 %v2536
    %v3987 = vunpack.c.l.b16 %v2537
    %v3988 = vunpack.c.h.b16 %v2537
    %v3989 = vunpack.c.l.b16 %v2538
    %v3990 = vunpack.c.h.b16 %v2538
    %v3991 = vunpack.c.l.b16 %v2539
    %v3992 = vunpack.c.h.b16 %v2539
    %v3993 = vunpack.c.l.b16 %v2540
    %v3994 = vunpack.c.h.b16 %v2540
    %v3995 = vunpack.c.l.b16 %v2541
    %v3996 = vunpack.c.h.b16 %v2541
    %v3997 = vunpack.c.l.b16 %v2542
    %v3998 = vunpack.c.h.b16 %v2542
    %v3999 = vunpack.c.l.b16 %v2543
    %v4000 = vunpack.c.h.b16 %v2543
    %v4001 = vunpack.c.l.b16 %v2544
    %v4002 = vunpack.c.h.b16 %v2544
    %v4003 = vunpack.c.l.b16 %v2545
    %v4004 = vunpack.c.h.b16 %v2545
    %v4005 = vunpack.c.l.b16 %v2546
    %v4006 = vunpack.c.h.b16 %v2546
    %v4007 = vunpack.c.l.b16 %v2547
    %v4008 = vunpack.c.h.b16 %v2547
    %v4009 = vunpack.c.l.b16 %v2548
    %v4010 = vunpack.c.h.b16 %v2548
    %v4011 = vunpack.c.l.b16 %v2549
    %v4012 = vunpack.c.h.b16 %v2549
    %v4013 = vunpack.c.l.b16 %v2550
    %v4014 = vunpack.c.h.b16 %v2550
    %v4015 = vunpack.c.l.b16 %v2551
    %v4016 = vunpack.c.h.b16 %v2551
    %v4017 = vunpack.c.l.b16 %v2552
    %v4018 = vunpack.c.h.b16 %v2552
    %v4019 = vunpack.c.l.b16 %v2553
    %v4020 = vunpack.c.h.b16 %v2553
    %v4021 = vunpack.c.l.b16 %v2554
    %v4022 = vunpack.c.h.b16 %v2554
    %v4023 = vunpack.c.l.b16 %v2555
    %v4024 = vunpack.c.h.b16 %v2555
    %v4025 = vunpack.c.l.b16 %v2556
    %v4026 = vunpack.c.h.b16 %v2556
    %v4027 = vunpack.c.l.b16 %v2557
    %v4028 = vunpack.c.h.b16 %v2557
    %v4029 = vunpack.c.l.b16 %v2558
    %v4030 = vunpack.c.h.b16 %v2558
    %v4031 = vunpack.c.l.b16 %v2559
    %v4032 = vunpack.c.h.b16 %v2559
    %v4033 = vunpack.c.l.b16 %v2560
    %v4034 = vunpack.c.h.b16 %v2560
    %v4035 = vunpack.c.l.b16 %v2561
    %v4036 = vunpack.c.h.b16 %v2561
    %v4037 = vunpack.c.l.b16 %v2562
    %v4038 = vunpack.c.h.b16 %v2562
    %v4039 = vunpack.c.l.b16 %v2563
    %v4040 = vunpack.c.h.b16 %v2563
    %v4041 = vunpack.c.l.b16 %v2564
    %v4042 = vunpack.c.h.b16 %v2564
    %v4043 = vunpack.c.l.b16 %v2565
    %v4044 = vunpack.c.h.b16 %v2565
    %v4045 = vunpack.c.l.b16 %v2566
    %v4046 = vunpack.c.h.b16 %v2566
    %v4047 = vunpack.c.l.b16 %v2567
    %v4048 = vunpack.c.h.b16 %v2567
    %v4049 = vunpack.c.l.b16 %v2568
    %v4050 = vunpack.c.h.b16 %v2568
    %v4051 = vunpack.c.l.b16 %v2569
    %v4052 = vunpack.c.h.b16 %v2569
    %v4053 = vunpack.c.l.b16 %v2570
    %v4054 = vunpack.c.h.b16 %v2570
    %v4055 = vunpack.c.l.b16 %v2571
    %v4056 = vunpack.c.h.b16 %v2571
    %v4057 = vunpack.c.l.b16 %v2572
    %v4058 = vunpack.c.h.b16 %v2572
    %v4059 = vunpack.c.l.b16 %v2573
    %v4060 = vunpack.c.h.b16 %v2573
    %v4061 = vunpack.c.l.b16 %v2574
    %v4062 = vunpack.c.h.b16 %v2574
    %v4063 = vunpack.c.l.b16 %v2575
    %v4064 = vunpack.c.h.b16 %v2575
    %v4065 = vunpack.c.l.b16 %v2576
    %v4066 = vunpack.c.h.b16 %v2576
    %v4067 = vunpack.c.l.b16 %v2577
    %v4068 = vunpack.c.h.b16 %v2577
    %v4069 = vunpack.c.l.b16 %v2578
    %v4070 = vunpack.c.h.b16 %v2578
    %v4071 = vunpack.c.l.b16 %v2579
    %v4072 = vunpack.c.h.b16 %v2579
    %v4073 = vunpack.c.l.b16 %v2580
    %v4074 = vunpack.c.h.b16 %v2580
    %v4075 = vunpack.c.l.b16 %v2581
    %v4076 = vunpack.c.h.b16 %v2581
    %v4077 = vunpack.c.l.b16 %v2582
    %v4078 = vunpack.c.h.b16 %v2582
    %v4079 = vunpack.c.l.b16 %v2583
    %v4080 = vunpack.c.h.b16 %v2583
    %v4081 = vunpack.c.l.b16 %v2584
    %v4082 = vunpack.c.h.b16 %v2584
    %v4083 = vunpack.c.l.b16 %v2585
    %v4084 = vunpack.c.h.b16 %v2585
    %v4085 = vunpack.c.l.b16 %v2586
    %v4086 = vunpack.c.h.b16 %v2586
    %v4087 = vunpack.c.l.b16 %v2587
    %v4088 = vunpack.c.h.b16 %v2587
    %v4089 = vunpack.c.l.b16 %v2588
    %v4090 = vunpack.c.h.b16 %v2588
    %v4091 = vunpack.c.l.b16 %v2589
    %v4092 = vunpack.c.h.b16 %v2589
    %v4093 = vunpack.c.l.b16 %v2590
    %v4094 = vunpack.c.h.b16 %v2590
    %v4095 = vunpack.c.l.b16 %v2591
    %v4096 = vunpack.c.h.b16 %v2591
    %v4097 = vunpack.c.l.b16 %v2592
    %v4098 = vunpack.c.h.b16 %v2592
    %v4099 = vunpack.c.l.b16 %v2593
    %v4100 = vunpack.c.h.b16 %v2593
    %v4101 = vunpack.c.l.b16 %v2594
    %v4102 = vunpack.c.h.b16 %v2594
    %v4103 = vunpack.c.l.b16 %v2595
    %v4104 = vunpack.c.h.b16 %v2595
    %v4105 = vunpack.c.l.b16 %v2596
    %v4106 = vunpack.c.h.b16 %v2596
    %v4107 = vunpack.c.l.b16 %v2597
    %v4108 = vunpack.c.h.b16 %v2597
    %v4109 = vunpack.c.l.b16 %v2598
    %v4110 = vunpack.c.h.b16 %v2598
    %v4111 = vunpack.c.l.b16 %v2599
    %v4112 = vunpack.c.h.b16 %v2599
    %v4113 = vunpack.c.l.b16 %v2600
    %v4114 = vunpack.c.h.b16 %v2600
    %v4115 = vunpack.c.l.b16 %v2601
    %v4116 = vunpack.c.h.b16 %v2601
    %v4117 = vunpack.c.l.b16 %v2602
    %v4118 = vunpack.c.h.b16 %v2602
    %v4119 = vunpack.c.l.b16 %v2603
    %v4120 = vunpack.c.h.b16 %v2603
    %v4121 = vunpack.c.l.b16 %v2604
    %v4122 = vunpack.c.h.b16 %v2604
    %v4123 = vunpack.c.l.b16 %v2605
    %v4124 = vunpack.c.h.b16 %v2605
    %v4125 = vunpack.c.l.b16 %v2606
    %v4126 = vunpack.c.h.b16 %v2606
    %v4127 = vunpack.c.l.b16 %v2607
    %v4128 = vunpack.c.h.b16 %v2607
    %v4129 = vunpack.c.l.b16 %v2608
    %v4130 = vunpack.c.h.b16 %v2608
    %v4131 = vunpack.c.l.b16 %v2609
    %v4132 = vunpack.c.h.b16 %v2609
    %v4133 = vunpack.c.l.b16 %v2610
    %v4134 = vunpack.c.h.b16 %v2610
    %v4135 = vunpack.c.l.b16 %v2611
    %v4136 = vunpack.c.h.b16 %v2611
    %v4137 = vunpack.c.l.b16 %v2612
    %v4138 = vunpack.c.h.b16 %v2612
    %v4139 = vunpack.c.l.b16 %v2613
    %v4140 = vunpack.c.h.b16 %v2613
    %v4141 = vunpack.c.l.b16 %v2614
    %v4142 = vunpack.c.h.b16 %v2614
    %v4143 = vunpack.c.l.b16 %v2615
    %v4144 = vunpack.c.h.b16 %v2615
    %v4145 = vunpack.c.l.b16 %v2616
    %v4146 = vunpack.c.h.b16 %v2616
    %v4147 = vunpack.c.l.b16 %v2617
    %v4148 = vunpack.c.h.b16 %v2617
    %v4149 = vunpack.c.l.b16 %v2618
    %v4150 = vunpack.c.h.b16 %v2618
    %v4151 = vunpack.c.l.b16 %v2619
    %v4152 = vunpack.c.h.b16 %v2619
    %v4153 = vunpack.c.l.b16 %v2620
    %v4154 = vunpack.c.h.b16 %v2620
    %v4155 = vunpack.c.l.b16 %v2621
    %v4156 = vunpack.c.h.b16 %v2621
    %v4157 = vunpack.c.l.b16 %v2622
    %v4158 = vunpack.c.h.b16 %v2622
    %v4159 = vunpack.c.l.b16 %v2623
    %v4160 = vunpack.c.h.b16 %v2623
    %v4161 = vunpack.c.l.b16 %v2624
    %v4162 = vunpack.c.h.b16 %v2624
    %v4163 = vunpack.c.l.b16 %v2625
    %v4164 = vunpack.c.h.b16 %v2625
    %v4165 = vunpack.c.l.b16 %v2626
    %v4166 = vunpack.c.h.b16 %v2626
    %v4167 = vunpack.c.l.b16 %v2627
    %v4168 = vunpack.c.h.b16 %v2627
    %v4169 = vunpack.c.l.b16 %v2628
    %v4170 = vunpack.c.h.b16 %v2628
    %v4171 = vunpack.c.l.b16 %v2629
    %v4172 = vunpack.c.h.b16 %v2629
    %v4173 = vunpack.c.l.b16 %v2630
    %v4174 = vunpack.c.h.b16 %v2630
    %v4175 = vunpack.c.l.b16 %v2631
    %v4176 = vunpack.c.h.b16 %v2631
    %v4177 = vunpack.c.l.b16 %v2632
    %v4178 = vunpack.c.h.b16 %v2632
    %v4179 = vunpack.c.l.b16 %v2633
    %v4180 = vunpack.c.h.b16 %v2633
    %v4181 = vunpack.c.l.b16 %v2634
    %v4182 = vunpack.c.h.b16 %v2634
    %v4183 = vunpack.c.l.b16 %v2635
    %v4184 = vunpack.c.h.b16 %v2635
    %v4185 = vunpack.c.l.b16 %v2636
    %v4186 = vunpack.c.h.b16 %v2636
    %v4187 = vunpack.c.l.b16 %v2637
    %v4188 = vunpack.c.h.b16 %v2637
    %v4189 = vunpack.c.l.b16 %v2638
    %v4190 = vunpack.c.h.b16 %v2638
    %v4191 = vunpack.c.l.b16 %v2639
    %v4192 = vunpack.c.h.b16 %v2639
    %v4193 = vunpack.c.l.b16 %v2640
    %v4194 = vunpack.c.h.b16 %v2640
    %v4195 = vunpack.c.l.b16 %v2641
    %v4196 = vunpack.c.h.b16 %v2641
    %v4197 = vunpack.c.l.b16 %v2642
    %v4198 = vunpack.c.h.b16 %v2642
    %v4199 = vunpack.c.l.b16 %v2643
    %v4200 = vunpack.c.h.b16 %v2643
    %v4201 = vunpack.c.l.b16 %v2644
    %v4202 = vunpack.c.h.b16 %v2644
    %v4203 = vunpack.c.l.b16 %v2645
    %v4204 = vunpack.c.h.b16 %v2645
    %v4205 = vunpack.c.l.b16 %v2646
    %v4206 = vunpack.c.h.b16 %v2646
    %v4207 = vunpack.c.l.b16 %v2647
    %v4208 = vunpack.c.h.b16 %v2647
    %v4209 = vunpack.c.l.b16 %v2648
    %v4210 = vunpack.c.h.b16 %v2648
    %v4211 = vunpack.c.l.b16 %v2649
    %v4212 = vunpack.c.h.b16 %v2649
    %v4213 = vunpack.c.l.b16 %v2650
    %v4214 = vunpack.c.h.b16 %v2650
    %v4215 = vunpack.c.l.b16 %v2651
    %v4216 = vunpack.c.h.b16 %v2651
    %v4217 = vunpack.c.l.b16 %v2652
    %v4218 = vunpack.c.h.b16 %v2652
    %v4219 = vunpack.c.l.b16 %v2653
    %v4220 = vunpack.c.h.b16 %v2653
    %v4221 = vunpack.c.l.b16 %v2654
    %v4222 = vunpack.c.h.b16 %v2654
    %v4223 = vunpack.c.l.b16 %v2655
    %v4224 = vunpack.c.h.b16 %v2655
    %v4225 = vunpack.c.l.b16 %v2656
    %v4226 = vunpack.c.h.b16 %v2656
    %v4227 = vunpack.c.l.b16 %v2657
    %v4228 = vunpack.c.h.b16 %v2657
    %v4229 = vunpack.c.l.b16 %v2658
    %v4230 = vunpack.c.h.b16 %v2658
    %v4231 = vpack.c.b16 %v3223, %v3207
    %v4232 = vpack.c.b16 %v3224, %v3208
    %v4233 = vpack.c.b16 %v3225, %v3209
    %v4234 = vpack.c.b16 %v3226, %v3210
    %v4235 = vpack.c.b16 %v3227, %v3211
    %v4236 = vpack.c.b16 %v3228, %v3212
    %v4237 = vpack.c.b16 %v3229, %v3213
    %v4238 = vpack.c.b16 %v3230, %v3214
    %v4239 = vpack.c.b16 %v3231, %v3215
    %v4240 = vpack.c.b16 %v3232, %v3216
    %v4241 = vpack.c.b16 %v3233, %v3217
    %v4242 = vpack.c.b16 %v3234, %v3218
    %v4243 = vpack.c.b16 %v3235, %v3219
    %v4244 = vpack.c.b16 %v3236, %v3220
    %v4245 = vpack.c.b16 %v3237, %v3221
    %v4246 = vpack.c.b16 %v3238, %v3222
    %v4247 = vpack.c.b16 %v3255, %v3239
    %v4248 = vpack.c.b16 %v3256, %v3240
    %v4249 = vpack.c.b16 %v3257, %v3241
    %v4250 = vpack.c.b16 %v3258, %v3242
    %v4251 = vpack.c.b16 %v3259, %v3243
    %v4252 = vpack.c.b16 %v3260, %v3244
    %v4253 = vpack.c.b16 %v3261, %v3245
    %v4254 = vpack.c.b16 %v3262, %v3246
    %v4255 = vpack.c.b16 %v3263, %v3247
    %v4256 = vpack.c.b16 %v3264, %v3248
    %v4257 = vpack.c.b16 %v3265, %v3249
    %v4258 = vpack.c.b16 %v3266, %v3250
    %v4259 = vpack.c.b16 %v3267, %v3251
    %v4260 = vpack.c.b16 %v3268, %v3252
    %v4261 = vpack.c.b16 %v3269, %v3253
    %v4262 = vpack.c.b16 %v3270, %v3254
    %v4263 = vpack.c.b16 %v3287, %v3271
    %v4264 = vpack.c.b16 %v3288, %v3272
    %v4265 = vpack.c.b16 %v3289, %v3273
    %v4266 = vpack.c.b16 %v3290, %v3274
    %v4267 = vpack.c.b16 %v3291, %v3275
    %v4268 = vpack.c.b16 %v3292, %v3276
    %v4269 = vpack.c.b16 %v3293, %v3277
    %v4270 = vpack.c.b16 %v3294, %v3278
    %v4271 = vpack.c.b16 %v3295, %v3279
    %v4272 = vpack.c.b16 %v3296, %v3280
    %v4273 = vpack.c.b16 %v3297, %v3281
    %v4274 = vpack.c.b16 %v3298, %v3282
    %v4275 = vpack.c.b16 %v3299, %v3283
    %v4276 = vpack.c.b16 %v3300, %v3284
    %v4277 = vpack.c.b16 %v3301, %v3285
    %v4278 = vpack.c.b16 %v3302, %v3286
    %v4279 = vpack.c.b16 %v3319, %v3303
    %v4280 = vpack.c.b16 %v3320, %v3304
    %v4281 = vpack.c.b16 %v3321, %v3305
    %v4282 = vpack.c.b16 %v3322, %v3306
    %v4283 = vpack.c.b16 %v3323, %v3307
    %v4284 = vpack.c.b16 %v3324, %v3308
    %v4285 = vpack.c.b16 %v3325, %v3309
    %v4286 = vpack.c.b16 %v3326, %v3310
    %v4287 = vpack.c.b16 %v3327, %v3311
    %v4288 = vpack.c.b16 %v3328, %v3312
    %v4289 = vpack.c.b16 %v3329, %v3313
    %v4290 = vpack.c.b16 %v3330, %v3314
    %v4291 = vpack.c.b16 %v3331, %v3315
    %v4292 = vpack.c.b16 %v3332, %v3316
    %v4293 = vpack.c.b16 %v3333, %v3317
    %v4294 = vpack.c.b16 %v3334, %v3318
    %v4295 = vpack.c.b16 %v3351, %v3335
    %v4296 = vpack.c.b16 %v3352, %v3336
    %v4297 = vpack.c.b16 %v3353, %v3337
    %v4298 = vpack.c.b16 %v3354, %v3338
    %v4299 = vpack.c.b16 %v3355, %v3339
    %v4300 = vpack.c.b16 %v3356, %v3340
    %v4301 = vpack.c.b16 %v3357, %v3341
    %v4302 = vpack.c.b16 %v3358, %v3342
    %v4303 = vpack.c.b16 %v3359, %v3343
    %v4304 = vpack.c.b16 %v3360, %v3344
    %v4305 = vpack.c.b16 %v3361, %v3345
    %v4306 = vpack.c.b16 %v3362, %v3346
    %v4307 = vpack.c.b16 %v3363, %v3347
    %v4308 = vpack.c.b16 %v3364, %v3348
    %v4309 = vpack.c.b16 %v3365, %v3349
    %v4310 = vpack.c.b16 %v3366, %v3350
    %v4311 = vpack.c.b16 %v3383, %v3367
    %v4312 = vpack.c.b16 %v3384, %v3368
    %v4313 = vpack.c.b16 %v3385, %v3369
    %v4314 = vpack.c.b16 %v3386, %v3370
    %v4315 = vpack.c.b16 %v3387, %v3371
    %v4316 = vpack.c.b16 %v3388, %v3372
    %v4317 = vpack.c.b16 %v3389, %v3373
    %v4318 = vpack.c.b16 %v3390, %v3374
    %v4319 = vpack.c.b16 %v3391, %v3375
    %v4320 = vpack.c.b16 %v3392, %v3376
    %v4321 = vpack.c.b16 %v3393, %v3377
    %v4322 = vpack.c.b16 %v3394, %v3378
    %v4323 = vpack.c.b16 %v3395, %v3379
    %v4324 = vpack.c.b16 %v3396, %v3380
    %v4325 = vpack.c.b16 %v3397, %v3381
    %v4326 = vpack.c.b16 %v3398, %v3382
    %v4327 = vpack.c.b16 %v3415, %v3399
    %v4328 = vpack.c.b16 %v3416, %v3400
    %v4329 = vpack.c.b16 %v3417, %v3401
    %v4330 = vpack.c.b16 %v3418, %v3402
    %v4331 = vpack.c.b16 %v3419, %v3403
    %v4332 = vpack.c.b16 %v3420, %v3404
    %v4333 = vpack.c.b16 %v3421, %v3405
    %v4334 = vpack.c.b16 %v3422, %v3406
    %v4335 = vpack.c.b16 %v3423, %v3407
    %v4336 = vpack.c.b16 %v3424, %v3408
    %v4337 = vpack.c.b16 %v3425, %v3409
    %v4338 = vpack.c.b16 %v3426, %v3410
    %v4339 = vpack.c.b16 %v3427, %v3411
    %v4340 = vpack.c.b16 %v3428, %v3412
    %v4341 = vpack.c.b16 %v3429, %v3413
    %v4342 = vpack.c.b16 %v3430, %v3414
    %v4343 = vpack.c.b16 %v3447, %v3431
    %v4344 = vpack.c.b16 %v3448, %v3432
    %v4345 = vpack.c.b16 %v3449, %v3433
    %v4346 = vpack.c.b16 %v3450, %v3434
    %v4347 = vpack.c.b16 %v3451, %v3435
    %v4348 = vpack.c.b16 %v3452, %v3436
    %v4349 = vpack.c.b16 %v3453, %v3437
    %v4350 = vpack.c.b16 %v3454, %v3438
    %v4351 = vpack.c.b16 %v3455, %v3439
    %v4352 = vpack.c.b16 %v3456, %v3440
    %v4353 = vpack.c.b16 %v3457, %v3441
    %v4354 = vpack.c.b16 %v3458, %v3442
    %v4355 = vpack.c.b16 %v3459, %v3443
    %v4356 = vpack.c.b16 %v3460, %v3444
    %v4357 = vpack.c.b16 %v3461, %v3445
    %v4358 = vpack.c.b16 %v3462, %v3446
    %v4359 = vpack.c.b16 %v3479, %v3463
    %v4360 = vpack.c.b16 %v3480, %v3464
    %v4361 = vpack.c.b16 %v3481, %v3465
    %v4362 = vpack.c.b16 %v3482, %v3466
    %v4363 = vpack.c.b16 %v3483, %v3467
    %v4364 = vpack.c.b16 %v3484, %v3468
    %v4365 = vpack.c.b16 %v3485, %v3469
    %v4366 = vpack.c.b16 %v3486, %v3470
    %v4367 = vpack.c.b16 %v3487, %v3471
    %v4368 = vpack.c.b16 %v3488, %v3472
    %v4369 = vpack.c.b16 %v3489, %v3473
    %v4370 = vpack.c.b16 %v3490, %v3474
    %v4371 = vpack.c.b16 %v3491, %v3475
    %v4372 = vpack.c.b16 %v3492, %v3476
    %v4373 = vpack.c.b16 %v3493, %v3477
    %v4374 = vpack.c.b16 %v3494, %v3478
    %v4375 = vpack.c.b16 %v3511, %v3495
    %v4376 = vpack.c.b16 %v3512, %v3496
    %v4377 = vpack.c.b16 %v3513, %v3497
    %v4378 = vpack.c.b16 %v3514, %v3498
    %v4379 = vpack.c.b16 %v3515, %v3499
    %v4380 = vpack.c.b16 %v3516, %v3500
    %v4381 = vpack.c.b16 %v3517, %v3501
    %v4382 = vpack.c.b16 %v3518, %v3502
    %v4383 = vpack.c.b16 %v3519, %v3503
    %v4384 = vpack.c.b16 %v3520, %v3504
    %v4385 = vpack.c.b16 %v3521, %v3505
    %v4386 = vpack.c.b16 %v3522, %v3506
    %v4387 = vpack.c.b16 %v3523, %v3507
    %v4388 = vpack.c.b16 %v3524, %v3508
    %v4389 = vpack.c.b16 %v3525, %v3509
    %v4390 = vpack.c.b16 %v3526, %v3510
    %v4391 = vpack.c.b16 %v3543, %v3527
    %v4392 = vpack.c.b16 %v3544, %v3528
    %v4393 = vpack.c.b16 %v3545, %v3529
    %v4394 = vpack.c.b16 %v3546, %v3530
    %v4395 = vpack.c.b16 %v3547, %v3531
    %v4396 = vpack.c.b16 %v3548, %v3532
    %v4397 = vpack.c.b16 %v3549, %v3533
    %v4398 = vpack.c.b16 %v3550, %v3534
    %v4399 = vpack.c.b16 %v3551, %v3535
    %v4400 = vpack.c.b16 %v3552, %v3536
    %v4401 = vpack.c.b16 %v3553, %v3537
    %v4402 = vpack.c.b16 %v3554, %v3538
    %v4403 = vpack.c.b16 %v3555, %v3539
    %v4404 = vpack.c.b16 %v3556, %v3540
    %v4405 = vpack.c.b16 %v3557, %v3541
    %v4406 = vpack.c.b16 %v3558, %v3542
    %v4407 = vpack.c.b16 %v3575, %v3559
    %v4408 = vpack.c.b16 %v3576, %v3560
    %v4409 = vpack.c.b16 %v3577, %v3561
    %v4410 = vpack.c.b16 %v3578, %v3562
    %v4411 = vpack.c.b16 %v3579, %v3563
    %v4412 = vpack.c.b16 %v3580, %v3564
    %v4413 = vpack.c.b16 %v3581, %v3565
    %v4414 = vpack.c.b16 %v3582, %v3566
    %v4415 = vpack.c.b16 %v3583, %v3567
    %v4416 = vpack.c.b16 %v3584, %v3568
    %v4417 = vpack.c.b16 %v3585, %v3569
    %v4418 = vpack.c.b16 %v3586, %v3570
    %v4419 = vpack.c.b16 %v3587, %v3571
    %v4420 = vpack.c.b16 %v3588, %v3572
    %v4421 = vpack.c.b16 %v3589, %v3573
    %v4422 = vpack.c.b16 %v3590, %v3574
    %v4423 = vpack.c.b16 %v3607, %v3591
    %v4424 = vpack.c.b16 %v3608, %v3592
    %v4425 = vpack.c.b16 %v3609, %v3593
    %v4426 = vpack.c.b16 %v3610, %v3594
    %v4427 = vpack.c.b16 %v3611, %v3595
    %v4428 = vpack.c.b16 %v3612, %v3596
    %v4429 = vpack.c.b16 %v3613, %v3597
    %v4430 = vpack.c.b16 %v3614, %v3598
    %v4431 = vpack.c.b16 %v3615, %v3599
    %v4432 = vpack.c.b16 %v3616, %v3600
    %v4433 = vpack.c.b16 %v3617, %v3601
    %v4434 = vpack.c.b16 %v3618, %v3602
    %v4435 = vpack.c.b16 %v3619, %v3603
    %v4436 = vpack.c.b16 %v3620, %v3604
    %v4437 = vpack.c.b16 %v3621, %v3605
    %v4438 = vpack.c.b16 %v3622, %v3606
    %v4439 = vpack.c.b16 %v3639, %v3623
    %v4440 = vpack.c.b16 %v3640, %v3624
    %v4441 = vpack.c.b16 %v3641, %v3625
    %v4442 = vpack.c.b16 %v3642, %v3626
    %v4443 = vpack.c.b16 %v3643, %v3627
    %v4444 = vpack.c.b16 %v3644, %v3628
    %v4445 = vpack.c.b16 %v3645, %v3629
    %v4446 = vpack.c.b16 %v3646, %v3630
    %v4447 = vpack.c.b16 %v3647, %v3631
    %v4448 = vpack.c.b16 %v3648, %v3632
    %v4449 = vpack.c.b16 %v3649, %v3633
    %v4450 = vpack.c.b16 %v3650, %v3634
    %v4451 = vpack.c.b16 %v3651, %v3635
    %v4452 = vpack.c.b16 %v3652, %v3636
    %v4453 = vpack.c.b16 %v3653, %v3637
    %v4454 = vpack.c.b16 %v3654, %v3638
    %v4455 = vpack.c.b16 %v3671, %v3655
    %v4456 = vpack.c.b16 %v3672, %v3656
    %v4457 = vpack.c.b16 %v3673, %v3657
    %v4458 = vpack.c.b16 %v3674, %v3658
    %v4459 = vpack.c.b16 %v3675, %v3659
    %v4460 = vpack.c.b16 %v3676, %v3660
    %v4461 = vpack.c.b16 %v3677, %v3661
    %v4462 = vpack.c.b16 %v3678, %v3662
    %v4463 = vpack.c.b16 %v3679, %v3663
    %v4464 = vpack.c.b16 %v3680, %v3664
    %v4465 = vpack.c.b16 %v3681, %v3665
    %v4466 = vpack.c.b16 %v3682, %v3666
    %v4467 = vpack.c.b16 %v3683, %v3667
    %v4468 = vpack.c.b16 %v3684, %v3668
    %v4469 = vpack.c.b16 %v3685, %v3669
    %v4470 = vpack.c.b16 %v3686, %v3670
    %v4471 = vpack.c.b16 %v3703, %v3687
    %v4472 = vpack.c.b16 %v3704, %v3688
    %v4473 = vpack.c.b16 %v3705, %v3689
    %v4474 = vpack.c.b16 %v3706, %v3690
    %v4475 = vpack.c.b16 %v3707, %v3691
    %v4476 = vpack.c.b16 %v3708, %v3692
    %v4477 = vpack.c.b16 %v3709, %v3693
    %v4478 = vpack.c.b16 %v3710, %v3694
    %v4479 = vpack.c.b16 %v3711, %v3695
    %v4480 = vpack.c.b16 %v3712, %v3696
    %v4481 = vpack.c.b16 %v3713, %v3697
    %v4482 = vpack.c.b16 %v3714, %v3698
    %v4483 = vpack.c.b16 %v3715, %v3699
    %v4484 = vpack.c.b16 %v3716, %v3700
    %v4485 = vpack.c.b16 %v3717, %v3701
    %v4486 = vpack.c.b16 %v3718, %v3702
    %v4487 = vpack.c.b16 %v3735, %v3719
    %v4488 = vpack.c.b16 %v3736, %v3720
    %v4489 = vpack.c.b16 %v3737, %v3721
    %v4490 = vpack.c.b16 %v3738, %v3722
    %v4491 = vpack.c.b16 %v3739, %v3723
    %v4492 = vpack.c.b16 %v3740, %v3724
    %v4493 = vpack.c.b16 %v3741, %v3725
    %v4494 = vpack.c.b16 %v3742, %v3726
    %v4495 = vpack.c.b16 %v3743, %v3727
    %v4496 = vpack.c.b16 %v3744, %v3728
    %v4497 = vpack.c.b16 %v3745, %v3729
    %v4498 = vpack.c.b16 %v3746, %v3730
    %v4499 = vpack.c.b16 %v3747, %v3731
    %v4500 = vpack.c.b16 %v3748, %v3732
    %v4501 = vpack.c.b16 %v3749, %v3733
    %v4502 = vpack.c.b16 %v3750, %v3734
    %v4503 = vpack.c.b16 %v3767, %v3751
    %v4504 = vpack.c.b16 %v3768, %v3752
    %v4505 = vpack.c.b16 %v3769, %v3753
    %v4506 = vpack.c.b16 %v3770, %v3754
    %v4507 = vpack.c.b16 %v3771, %v3755
    %v4508 = vpack.c.b16 %v3772, %v3756
    %v4509 = vpack.c.b16 %v3773, %v3757
    %v4510 = vpack.c.b16 %v3774, %v3758
    %v4511 = vpack.c.b16 %v3775, %v3759
    %v4512 = vpack.c.b16 %v3776, %v3760
    %v4513 = vpack.c.b16 %v3777, %v3761
    %v4514 = vpack.c.b16 %v3778, %v3762
    %v4515 = vpack.c.b16 %v3779, %v3763
    %v4516 = vpack.c.b16 %v3780, %v3764
    %v4517 = vpack.c.b16 %v3781, %v3765
    %v4518 = vpack.c.b16 %v3782, %v3766
    %v4519 = vpack.c.b16 %v3799, %v3783
    %v4520 = vpack.c.b16 %v3800, %v3784
    %v4521 = vpack.c.b16 %v3801, %v3785
    %v4522 = vpack.c.b16 %v3802, %v3786
    %v4523 = vpack.c.b16 %v3803, %v3787
    %v4524 = vpack.c.b16 %v3804, %v3788
    %v4525 = vpack.c.b16 %v3805, %v3789
    %v4526 = vpack.c.b16 %v3806, %v3790
    %v4527 = vpack.c.b16 %v3807, %v3791
    %v4528 = vpack.c.b16 %v3808, %v3792
    %v4529 = vpack.c.b16 %v3809, %v3793
    %v4530 = vpack.c.b16 %v3810, %v3794
    %v4531 = vpack.c.b16 %v3811, %v3795
    %v4532 = vpack.c.b16 %v3812, %v3796
    %v4533 = vpack.c.b16 %v3813, %v3797
    %v4534 = vpack.c.b16 %v3814, %v3798
    %v4535 = vpack.c.b16 %v3831, %v3815
    %v4536 = vpack.c.b16 %v3832, %v3816
    %v4537 = vpack.c.b16 %v3833, %v3817
    %v4538 = vpack.c.b16 %v3834, %v3818
    %v4539 = vpack.c.b16 %v3835, %v3819
    %v4540 = vpack.c.b16 %v3836, %v3820
    %v4541 = vpack.c.b16 %v3837, %v3821
    %v4542 = vpack.c.b16 %v3838, %v3822
    %v4543 = vpack.c.b16 %v3839, %v3823
    %v4544 = vpack.c.b16 %v3840, %v3824
    %v4545 = vpack.c.b16 %v3841, %v3825
    %v4546 = vpack.c.b16 %v3842, %v3826
    %v4547 = vpack.c.b16 %v3843, %v3827
    %v4548 = vpack.c.b16 %v3844, %v3828
    %v4549 = vpack.c.b16 %v3845, %v3829
    %v4550 = vpack.c.b16 %v3846, %v3830
    %v4551 = vpack.c.b16 %v3863, %v3847
    %v4552 = vpack.c.b16 %v3864, %v3848
    %v4553 = vpack.c.b16 %v3865, %v3849
    %v4554 = vpack.c.b16 %v3866, %v3850
    %v4555 = vpack.c.b16 %v3867, %v3851
    %v4556 = vpack.c.b16 %v3868, %v3852
    %v4557 = vpack.c.b16 %v3869, %v3853
    %v4558 = vpack.c.b16 %v3870, %v3854
    %v4559 = vpack.c.b16 %v3871, %v3855
    %v4560 = vpack.c.b16 %v3872, %v3856
    %v4561 = vpack.c.b16 %v3873, %v3857
    %v4562 = vpack.c.b16 %v3874, %v3858
    %v4563 = vpack.c.b16 %v3875, %v3859
    %v4564 = vpack.c.b16 %v3876, %v3860
    %v4565 = vpack.c.b16 %v3877, %v3861
    %v4566 = vpack.c.b16 %v3878, %v3862
    %v4567 = vpack.c.b16 %v3895, %v3879
    %v4568 = vpack.c.b16 %v3896, %v3880
    %v4569 = vpack.c.b16 %v3897, %v3881
    %v4570 = vpack.c.b16 %v3898, %v3882
    %v4571 = vpack.c.b16 %v3899, %v3883
    %v4572 = vpack.c.b16 %v3900, %v3884
    %v4573 = vpack.c.b16 %v3901, %v3885
    %v4574 = vpack.c.b16 %v3902, %v3886
    %v4575 = vpack.c.b16 %v3903, %v3887
    %v4576 = vpack.c.b16 %v3904, %v3888
    %v4577 = vpack.c.b16 %v3905, %v3889
    %v4578 = vpack.c.b16 %v3906, %v3890
    %v4579 = vpack.c.b16 %v3907, %v3891
    %v4580 = vpack.c.b16 %v3908, %v3892
    %v4581 = vpack.c.b16 %v3909, %v3893
    %v4582 = vpack.c.b16 %v3910, %v3894
    %v4583 = vpack.c.b16 %v3927, %v3911
    %v4584 = vpack.c.b16 %v3928, %v3912
    %v4585 = vpack.c.b16 %v3929, %v3913
    %v4586 = vpack.c.b16 %v3930, %v3914
    %v4587 = vpack.c.b16 %v3931, %v3915
    %v4588 = vpack.c.b16 %v3932, %v3916
    %v4589 = vpack.c.b16 %v3933, %v3917
    %v4590 = vpack.c.b16 %v3934, %v3918
    %v4591 = vpack.c.b16 %v3935, %v3919
    %v4592 = vpack.c.b16 %v3936, %v3920
    %v4593 = vpack.c.b16 %v3937, %v3921
    %v4594 = vpack.c.b16 %v3938, %v3922
    %v4595 = vpack.c.b16 %v3939, %v3923
    %v4596 = vpack.c.b16 %v3940, %v3924
    %v4597 = vpack.c.b16 %v3941, %v3925
    %v4598 = vpack.c.b16 %v3942, %v3926
    %v4599 = vpack.c.b16 %v3959, %v3943
    %v4600 = vpack.c.b16 %v3960, %v3944
    %v4601 = vpack.c.b16 %v3961, %v3945
    %v4602 = vpack.c.b16 %v3962, %v3946
    %v4603 = vpack.c.b16 %v3963, %v3947
    %v4604 = vpack.c.b16 %v3964, %v3948
    %v4605 = vpack.c.b16 %v3965, %v3949
    %v4606 = vpack.c.b16 %v3966, %v3950
    %v4607 = vpack.c.b16 %v3967, %v3951
    %v4608 = vpack.c.b16 %v3968, %v3952
    %v4609 = vpack.c.b16 %v3969, %v3953
    %v4610 = vpack.c.b16 %v3970, %v3954
    %v4611 = vpack.c.b16 %v3971, %v3955
    %v4612 = vpack.c.b16 %v3972, %v3956
    %v4613 = vpack.c.b16 %v3973, %v3957
    %v4614 = vpack.c.b16 %v3974, %v3958
    %v4615 = vpack.c.b16 %v3991, %v3975
    %v4616 = vpack.c.b16 %v3992, %v3976
    %v4617 = vpack.c.b16 %v3993, %v3977
    %v4618 = vpack.c.b16 %v3994, %v3978
    %v4619 = vpack.c.b16 %v3995, %v3979
    %v4620 = vpack.c.b16 %v3996, %v3980
    %v4621 = vpack.c.b16 %v3997, %v3981
    %v4622 = vpack.c.b16 %v3998, %v3982
    %v4623 = vpack.c.b16 %v3999, %v3983
    %v4624 = vpack.c.b16 %v4000, %v3984
    %v4625 = vpack.c.b16 %v4001, %v3985
    %v4626 = vpack.c.b16 %v4002, %v3986
    %v4627 = vpack.c.b16 %v4003, %v3987
    %v4628 = vpack.c.b16 %v4004, %v3988
    %v4629 = vpack.c.b16 %v4005, %v3989
    %v4630 = vpack.c.b16 %v4006, %v3990
    %v4631 = vpack.c.b16 %v4023, %v4007
    %v4632 = vpack.c.b16 %v4024, %v4008
    %v4633 = vpack.c.b16 %v4025, %v4009
    %v4634 = vpack.c.b16 %v4026, %v4010
    %v4635 = vpack.c.b16 %v4027, %v4011
    %v4636 = vpack.c.b16 %v4028, %v4012
    %v4637 = vpack.c.b16 %v4029, %v4013
    %v4638 = vpack.c.b16 %v4030, %v4014
    %v4639 = vpack.c.b16 %v4031, %v4015
    %v4640 = vpack.c.b16 %v4032, %v4016
    %v4641 = vpack.c.b16 %v4033, %v4017
    %v4642 = vpack.c.b16 %v4034, %v4018
    %v4643 = vpack.c.b16 %v4035, %v4019
    %v4644 = vpack.c.b16 %v4036, %v4020
    %v4645 = vpack.c.b16 %v4037, %v4021
    %v4646 = vpack.c.b16 %v4038, %v4022
    %v4647 = vpack.c.b16 %v4055, %v4039
    %v4648 = vpack.c.b16 %v4056, %v4040
    %v4649 = vpack.c.b16 %v4057, %v4041
    %v4650 = vpack.c.b16 %v4058, %v4042
    %v4651 = vpack.c.b16 %v4059, %v4043
    %v4652 = vpack.c.b16 %v4060, %v4044
    %v4653 = vpack.c.b16 %v4061, %v4045
    %v4654 = vpack.c.b16 %v4062, %v4046
    %v4655 = vpack.c.b16 %v4063, %v4047
    %v4656 = vpack.c.b16 %v4064, %v4048
    %v4657 = vpack.c.b16 %v4065, %v4049
    %v4658 = vpack.c.b16 %v4066, %v4050
    %v4659 = vpack.c.b16 %v4067, %v4051
    %v4660 = vpack.c.b16 %v4068, %v4052
    %v4661 = vpack.c.b16 %v4069, %v4053
    %v4662 = vpack.c.b16 %v4070, %v4054
    %v4663 = vpack.c.b16 %v4087, %v4071
    %v4664 = vpack.c.b16 %v4088, %v4072
    %v4665 = vpack.c.b16 %v4089, %v4073
    %v4666 = vpack.c.b16 %v4090, %v4074
    %v4667 = vpack.c.b16 %v4091, %v4075
    %v4668 = vpack.c.b16 %v4092, %v4076
    %v4669 = vpack.c.b16 %v4093, %v4077
    %v4670 = vpack.c.b16 %v4094, %v4078
    %v4671 = vpack.c.b16 %v4095, %v4079
    %v4672 = vpack.c.b16 %v4096, %v4080
    %v4673 = vpack.c.b16 %v4097, %v4081
    %v4674 = vpack.c.b16 %v4098, %v4082
    %v4675 = vpack.c.b16 %v4099, %v4083
    %v4676 = vpack.c.b16 %v4100, %v4084
    %v4677 = vpack.c.b16 %v4101, %v4085
    %v4678 = vpack.c.b16 %v4102, %v4086
    %v4679 = vpack.c.b16 %v4119, %v4103
    %v4680 = vpack.c.b16 %v4120, %v4104
    %v4681 = vpack.c.b16 %v4121, %v4105
    %v4682 = vpack.c.b16 %v4122, %v4106
    %v4683 = vpack.c.b16 %v4123, %v4107
    %v4684 = vpack.c.b16 %v4124, %v4108
    %v4685 = vpack.c.b16 %v4125, %v4109
    %v4686 = vpack.c.b16 %v4126, %v4110
    %v4687 = vpack.c.b16 %v4127, %v4111
    %v4688 = vpack.c.b16 %v4128, %v4112
    %v4689 = vpack.c.b16 %v4129, %v4113
    %v4690 = vpack.c.b16 %v4130, %v4114
    %v4691 = vpack.c.b16 %v4131, %v4115
    %v4692 = vpack.c.b16 %v4132, %v4116
    %v4693 = vpack.c.b16 %v4133, %v4117
    %v4694 = vpack.c.b16 %v4134, %v4118
    %v4695 = vpack.c.b16 %v4151, %v4135
    %v4696 = vpack.c.b16 %v4152, %v4136
    %v4697 = vpack.c.b16 %v4153, %v4137
    %v4698 = vpack.c.b16 %v4154, %v4138
    %v4699 = vpack.c.b16 %v4155, %v4139
    %v4700 = vpack.c.b16 %v4156, %v4140
    %v4701 = vpack.c.b16 %v4157, %v4141
    %v4702 = vpack.c.b16 %v4158, %v4142
    %v4703 = vpack.c.b16 %v4159, %v4143
    %v4704 = vpack.c.b16 %v4160, %v4144
    %v4705 = vpack.c.b16 %v4161, %v4145
    %v4706 = vpack.c.b16 %v4162, %v4146
    %v4707 = vpack.c.b16 %v4163, %v4147
    %v4708 = vpack.c.b16 %v4164, %v4148
    %v4709 = vpack.c.b16 %v4165, %v4149
    %v4710 = vpack.c.b16 %v4166, %v4150
    %v4711 = vpack.c.b16 %v4183, %v4167
    %v4712 = vpack.c.b16 %v4184, %v4168
    %v4713 = vpack.c.b16 %v4185, %v4169
    %v4714 = vpack.c.b16 %v4186, %v4170
    %v4715 = vpack.c.b16 %v4187, %v4171
    %v4716 = vpack.c.b16 %v4188, %v4172
    %v4717 = vpack.c.b16 %v4189, %v4173
    %v4718 = vpack.c.b16 %v4190, %v4174
    %v4719 = vpack.c.b16 %v4191, %v4175
    %v4720 = vpack.c.b16 %v4192, %v4176
    %v4721 = vpack.c.b16 %v4193, %v4177
    %v4722 = vpack.c.b16 %v4194, %v4178
    %v4723 = vpack.c.b16 %v4195, %v4179
    %v4724 = vpack.c.b16 %v4196, %v4180
    %v4725 = vpack.c.b16 %v4197, %v4181
    %v4726 = vpack.c.b16 %v4198, %v4182
    %v4727 = vpack.c.b16 %v4215, %v4199
    %v4728 = vpack.c.b16 %v4216, %v4200
    %v4729 = vpack.c.b16 %v4217, %v4201
    %v4730 = vpack.c.b16 %v4218, %v4202
    %v4731 = vpack.c.b16 %v4219, %v4203
    %v4732 = vpack.c.b16 %v4220, %v4204
    %v4733 = vpack.c.b16 %v4221, %v4205
    %v4734 = vpack.c.b16 %v4222, %v4206
    %v4735 = vpack.c.b16 %v4223, %v4207
    %v4736 = vpack.c.b16 %v4224, %v4208
    %v4737 = vpack.c.b16 %v4225, %v4209
    %v4738 = vpack.c.b16 %v4226, %v4210
    %v4739 = vpack.c.b16 %v4227, %v4211
    %v4740 = vpack.c.b16 %v4228, %v4212
    %v4741 = vpack.c.b16 %v4229, %v4213
    %v4742 = vpack.c.b16 %v4230, %v4214
    %5255 = vmatpush.bf16.msra.mxu0 %v4343
    %5256 = vmatpush.bf16.msra.mxu0 %v4327
    %5257 = vmatpush.bf16.msra.mxu0 %v4311
    %5258 = vmatpush.bf16.msra.mxu0 %v4295
    %5259 = vmatpush.bf16.msra.mxu0 %v4279
    %5260 = vmatpush.bf16.msra.mxu0 %v4263
    %5261 = vmatpush.bf16.msra.mxu0 %v4247
    %5262 = vmatpush.bf16.msra.mxu0 %v4231
    %5263 = vmatmul.bf16.gmra.mxu0 %v2143
    %v5264 = vpop.f32.mrf.mxu0
    %v5265 = vadd.f32 %v2663, %v5264
    %v5266 = vpop.f32.mrf.mxu0
    %5267 = vdwg.mxu0
    %5268 = vmatpush.bf16.msra.mxu0 %v4471
    %5269 = vmatpush.bf16.msra.mxu0 %v4455
    %5270 = vmatpush.bf16.msra.mxu0 %v4439
    %5271 = vmatpush.bf16.msra.mxu0 %v4423
    %5272 = vmatpush.bf16.msra.mxu0 %v4407
    %5273 = vmatpush.bf16.msra.mxu0 %v4391
    %5274 = vmatpush.bf16.msra.mxu0 %v4375
    %5275 = vmatpush.bf16.msra.mxu0 %v4359
    %5276 = vmatmul.bf16.gmra.mxu0 %v2144
    %v5277 = vpop.f32.mrf.mxu0
    %v5278 = vadd.f32 %v5265, %v5277
    %v5279 = vpop.f32.mrf.mxu0
    %5280 = vdwg.mxu0
    %5281 = vmatpush.bf16.msra.mxu0 %v4599
    %5282 = vmatpush.bf16.msra.mxu0 %v4583
    %5283 = vmatpush.bf16.msra.mxu0 %v4567
    %5284 = vmatpush.bf16.msra.mxu0 %v4551
    %5285 = vmatpush.bf16.msra.mxu0 %v4535
    %5286 = vmatpush.bf16.msra.mxu0 %v4519
    %5287 = vmatpush.bf16.msra.mxu0 %v4503
    %5288 = vmatpush.bf16.msra.mxu0 %v4487
    %5289 = vmatmul.bf16.gmra.mxu0 %v2145
    %v5290 = vpop.f32.mrf.mxu0
    %v5291 = vadd.f32 %v5278, %v5290
    %v5292 = vpop.f32.mrf.mxu0
    %5293 = vdwg.mxu0
    %5294 = vmatpush.bf16.msra.mxu0 %v4727
    %5295 = vmatpush.bf16.msra.mxu0 %v4711
    %5296 = vmatpush.bf16.msra.mxu0 %v4695
    %5297 = vmatpush.bf16.msra.mxu0 %v4679
    %5298 = vmatpush.bf16.msra.mxu0 %v4663
    %5299 = vmatpush.bf16.msra.mxu0 %v4647
    %5300 = vmatpush.bf16.msra.mxu0 %v4631
    %5301 = vmatpush.bf16.msra.mxu0 %v4615
    %5302 = vmatmul.bf16.gmra.mxu0 %v2146
    %v5303 = vpop.f32.mrf.mxu0
    %v5304 = vadd.f32 %v5291, %v5303
    %v5305 = vpop.f32.mrf.mxu0
    %5306 = vdwg.mxu0
    %5307 = vmatpush.bf16.msra.mxu0 %v4344
    %5308 = vmatpush.bf16.msra.mxu0 %v4328
    %5309 = vmatpush.bf16.msra.mxu0 %v4312
    %5310 = vmatpush.bf16.msra.mxu0 %v4296
    %5311 = vmatpush.bf16.msra.mxu0 %v4280
    %5312 = vmatpush.bf16.msra.mxu0 %v4264
    %5313 = vmatpush.bf16.msra.mxu0 %v4248
    %5314 = vmatpush.bf16.msra.mxu0 %v4232
    %5315 = vmatmul.bf16.gmra.mxu0 %v2143
    %v5316 = vpop.f32.mrf.mxu0
    %v5317 = vadd.f32 %v2664, %v5316
    %v5318 = vpop.f32.mrf.mxu0
    %5319 = vdwg.mxu0
    %5320 = vmatpush.bf16.msra.mxu0 %v4472
    %5321 = vmatpush.bf16.msra.mxu0 %v4456
    %5322 = vmatpush.bf16.msra.mxu0 %v4440
    %5323 = vmatpush.bf16.msra.mxu0 %v4424
    %5324 = vmatpush.bf16.msra.mxu0 %v4408
    %5325 = vmatpush.bf16.msra.mxu0 %v4392
    %5326 = vmatpush.bf16.msra.mxu0 %v4376
    %5327 = vmatpush.bf16.msra.mxu0 %v4360
    %5328 = vmatmul.bf16.gmra.mxu0 %v2144
    %v5329 = vpop.f32.mrf.mxu0
    %v5330 = vadd.f32 %v5317, %v5329
    %v5331 = vpop.f32.mrf.mxu0
    %5332 = vdwg.mxu0
    %5333 = vmatpush.bf16.msra.mxu0 %v4600
    %5334 = vmatpush.bf16.msra.mxu0 %v4584
    %5335 = vmatpush.bf16.msra.mxu0 %v4568
    %5336 = vmatpush.bf16.msra.mxu0 %v4552
    %5337 = vmatpush.bf16.msra.mxu0 %v4536
    %5338 = vmatpush.bf16.msra.mxu0 %v4520
    %5339 = vmatpush.bf16.msra.mxu0 %v4504
    %5340 = vmatpush.bf16.msra.mxu0 %v4488
    %5341 = vmatmul.bf16.gmra.mxu0 %v2145
    %v5342 = vpop.f32.mrf.mxu0
    %v5343 = vadd.f32 %v5330, %v5342
    %v5344 = vpop.f32.mrf.mxu0
    %5345 = vdwg.mxu0
    %5346 = vmatpush.bf16.msra.mxu0 %v4728
    %5347 = vmatpush.bf16.msra.mxu0 %v4712
    %5348 = vmatpush.bf16.msra.mxu0 %v4696
    %5349 = vmatpush.bf16.msra.mxu0 %v4680
    %5350 = vmatpush.bf16.msra.mxu0 %v4664
    %5351 = vmatpush.bf16.msra.mxu0 %v4648
    %5352 = vmatpush.bf16.msra.mxu0 %v4632
    %5353 = vmatpush.bf16.msra.mxu0 %v4616
    %5354 = vmatmul.bf16.gmra.mxu0 %v2146
    %v5355 = vpop.f32.mrf.mxu0
    %v5356 = vadd.f32 %v5343, %v5355
    %v5357 = vpop.f32.mrf.mxu0
    %5358 = vdwg.mxu0
    %5359 = vmatpush.bf16.msra.mxu0 %v4345
    %5360 = vmatpush.bf16.msra.mxu0 %v4329
    %5361 = vmatpush.bf16.msra.mxu0 %v4313
    %5362 = vmatpush.bf16.msra.mxu0 %v4297
    %5363 = vmatpush.bf16.msra.mxu0 %v4281
    %5364 = vmatpush.bf16.msra.mxu0 %v4265
    %5365 = vmatpush.bf16.msra.mxu0 %v4249
    %5366 = vmatpush.bf16.msra.mxu0 %v4233
    %5367 = vmatmul.bf16.gmra.mxu0 %v2143
    %v5368 = vpop.f32.mrf.mxu0
    %v5369 = vadd.f32 %v2665, %v5368
    %v5370 = vpop.f32.mrf.mxu0
    %5371 = vdwg.mxu0
    %5372 = vmatpush.bf16.msra.mxu0 %v4473
    %5373 = vmatpush.bf16.msra.mxu0 %v4457
    %5374 = vmatpush.bf16.msra.mxu0 %v4441
    %5375 = vmatpush.bf16.msra.mxu0 %v4425
    %5376 = vmatpush.bf16.msra.mxu0 %v4409
    %5377 = vmatpush.bf16.msra.mxu0 %v4393
    %5378 = vmatpush.bf16.msra.mxu0 %v4377
    %5379 = vmatpush.bf16.msra.mxu0 %v4361
    %5380 = vmatmul.bf16.gmra.mxu0 %v2144
    %v5381 = vpop.f32.mrf.mxu0
    %v5382 = vadd.f32 %v5369, %v5381
    %v5383 = vpop.f32.mrf.mxu0
    %5384 = vdwg.mxu0
    %5385 = vmatpush.bf16.msra.mxu0 %v4601
    %5386 = vmatpush.bf16.msra.mxu0 %v4585
    %5387 = vmatpush.bf16.msra.mxu0 %v4569
    %5388 = vmatpush.bf16.msra.mxu0 %v4553
    %5389 = vmatpush.bf16.msra.mxu0 %v4537
    %5390 = vmatpush.bf16.msra.mxu0 %v4521
    %5391 = vmatpush.bf16.msra.mxu0 %v4505
    %5392 = vmatpush.bf16.msra.mxu0 %v4489
    %5393 = vmatmul.bf16.gmra.mxu0 %v2145
    %v5394 = vpop.f32.mrf.mxu0
    %v5395 = vadd.f32 %v5382, %v5394
    %v5396 = vpop.f32.mrf.mxu0
    %5397 = vdwg.mxu0
    %5398 = vmatpush.bf16.msra.mxu0 %v4729
    %5399 = vmatpush.bf16.msra.mxu0 %v4713
    %5400 = vmatpush.bf16.msra.mxu0 %v4697
    %5401 = vmatpush.bf16.msra.mxu0 %v4681
    %5402 = vmatpush.bf16.msra.mxu0 %v4665
    %5403 = vmatpush.bf16.msra.mxu0 %v4649
    %5404 = vmatpush.bf16.msra.mxu0 %v4633
    %5405 = vmatpush.bf16.msra.mxu0 %v4617
    %5406 = vmatmul.bf16.gmra.mxu0 %v2146
    %v5407 = vpop.f32.mrf.mxu0
    %v5408 = vadd.f32 %v5395, %v5407
    %v5409 = vpop.f32.mrf.mxu0
    %5410 = vdwg.mxu0
    %5411 = vmatpush.bf16.msra.mxu0 %v4346
    %5412 = vmatpush.bf16.msra.mxu0 %v4330
    %5413 = vmatpush.bf16.msra.mxu0 %v4314
    %5414 = vmatpush.bf16.msra.mxu0 %v4298
    %5415 = vmatpush.bf16.msra.mxu0 %v4282
    %5416 = vmatpush.bf16.msra.mxu0 %v4266
    %5417 = vmatpush.bf16.msra.mxu0 %v4250
    %5418 = vmatpush.bf16.msra.mxu0 %v4234
    %5419 = vmatmul.bf16.gmra.mxu0 %v2143
    %v5420 = vpop.f32.mrf.mxu0
    %v5421 = vadd.f32 %v2666, %v5420
    %v5422 = vpop.f32.mrf.mxu0
    %5423 = vdwg.mxu0
    %5424 = vmatpush.bf16.msra.mxu0 %v4474
    %5425 = vmatpush.bf16.msra.mxu0 %v4458
    %5426 = vmatpush.bf16.msra.mxu0 %v4442
    %5427 = vmatpush.bf16.msra.mxu0 %v4426
    %5428 = vmatpush.bf16.msra.mxu0 %v4410
    %5429 = vmatpush.bf16.msra.mxu0 %v4394
    %5430 = vmatpush.bf16.msra.mxu0 %v4378
    %5431 = vmatpush.bf16.msra.mxu0 %v4362
    %5432 = vmatmul.bf16.gmra.mxu0 %v2144
    %v5433 = vpop.f32.mrf.mxu0
    %v5434 = vadd.f32 %v5421, %v5433
    %v5435 = vpop.f32.mrf.mxu0
    %5436 = vdwg.mxu0
    %5437 = vmatpush.bf16.msra.mxu0 %v4602
    %5438 = vmatpush.bf16.msra.mxu0 %v4586
    %5439 = vmatpush.bf16.msra.mxu0 %v4570
    %5440 = vmatpush.bf16.msra.mxu0 %v4554
    %5441 = vmatpush.bf16.msra.mxu0 %v4538
    %5442 = vmatpush.bf16.msra.mxu0 %v4522
    %5443 = vmatpush.bf16.msra.mxu0 %v4506
    %5444 = vmatpush.bf16.msra.mxu0 %v4490
    %5445 = vmatmul.bf16.gmra.mxu0 %v2145
    %v5446 = vpop.f32.mrf.mxu0
    %v5447 = vadd.f32 %v5434, %v5446
    %v5448 = vpop.f32.mrf.mxu0
    %5449 = vdwg.mxu0
    %5450 = vmatpush.bf16.msra.mxu0 %v4730
    %5451 = vmatpush.bf16.msra.mxu0 %v4714
    %5452 = vmatpush.bf16.msra.mxu0 %v4698
    %5453 = vmatpush.bf16.msra.mxu0 %v4682
    %5454 = vmatpush.bf16.msra.mxu0 %v4666
    %5455 = vmatpush.bf16.msra.mxu0 %v4650
    %5456 = vmatpush.bf16.msra.mxu0 %v4634
    %5457 = vmatpush.bf16.msra.mxu0 %v4618
    %5458 = vmatmul.bf16.gmra.mxu0 %v2146
    %v5459 = vpop.f32.mrf.mxu0
    %v5460 = vadd.f32 %v5447, %v5459
    %v5461 = vpop.f32.mrf.mxu0
    %5462 = vdwg.mxu0
    %5463 = vmatpush.bf16.msra.mxu0 %v4347
    %5464 = vmatpush.bf16.msra.mxu0 %v4331
    %5465 = vmatpush.bf16.msra.mxu0 %v4315
    %5466 = vmatpush.bf16.msra.mxu0 %v4299
    %5467 = vmatpush.bf16.msra.mxu0 %v4283
    %5468 = vmatpush.bf16.msra.mxu0 %v4267
    %5469 = vmatpush.bf16.msra.mxu0 %v4251
    %5470 = vmatpush.bf16.msra.mxu0 %v4235
    %5471 = vmatmul.bf16.gmra.mxu0 %v2143
    %v5472 = vpop.f32.mrf.mxu0
    %v5473 = vadd.f32 %v2667, %v5472
    %v5474 = vpop.f32.mrf.mxu0
    %5475 = vdwg.mxu0
    %5476 = vmatpush.bf16.msra.mxu0 %v4475
    %5477 = vmatpush.bf16.msra.mxu0 %v4459
    %5478 = vmatpush.bf16.msra.mxu0 %v4443
    %5479 = vmatpush.bf16.msra.mxu0 %v4427
    %5480 = vmatpush.bf16.msra.mxu0 %v4411
    %5481 = vmatpush.bf16.msra.mxu0 %v4395
    %5482 = vmatpush.bf16.msra.mxu0 %v4379
    %5483 = vmatpush.bf16.msra.mxu0 %v4363
    %5484 = vmatmul.bf16.gmra.mxu0 %v2144
    %v5485 = vpop.f32.mrf.mxu0
    %v5486 = vadd.f32 %v5473, %v5485
    %v5487 = vpop.f32.mrf.mxu0
    %5488 = vdwg.mxu0
    %5489 = vmatpush.bf16.msra.mxu0 %v4603
    %5490 = vmatpush.bf16.msra.mxu0 %v4587
    %5491 = vmatpush.bf16.msra.mxu0 %v4571
    %5492 = vmatpush.bf16.msra.mxu0 %v4555
    %5493 = vmatpush.bf16.msra.mxu0 %v4539
    %5494 = vmatpush.bf16.msra.mxu0 %v4523
    %5495 = vmatpush.bf16.msra.mxu0 %v4507
    %5496 = vmatpush.bf16.msra.mxu0 %v4491
    %5497 = vmatmul.bf16.gmra.mxu0 %v2145
    %v5498 = vpop.f32.mrf.mxu0
    %v5499 = vadd.f32 %v5486, %v5498
    %v5500 = vpop.f32.mrf.mxu0
    %5501 = vdwg.mxu0
    %5502 = vmatpush.bf16.msra.mxu0 %v4731
    %5503 = vmatpush.bf16.msra.mxu0 %v4715
    %5504 = vmatpush.bf16.msra.mxu0 %v4699
    %5505 = vmatpush.bf16.msra.mxu0 %v4683
    %5506 = vmatpush.bf16.msra.mxu0 %v4667
    %5507 = vmatpush.bf16.msra.mxu0 %v4651
    %5508 = vmatpush.bf16.msra.mxu0 %v4635
    %5509 = vmatpush.bf16.msra.mxu0 %v4619
    %5510 = vmatmul.bf16.gmra.mxu0 %v2146
    %v5511 = vpop.f32.mrf.mxu0
    %v5512 = vadd.f32 %v5499, %v5511
    %v5513 = vpop.f32.mrf.mxu0
    %5514 = vdwg.mxu0
    %5515 = vmatpush.bf16.msra.mxu0 %v4348
    %5516 = vmatpush.bf16.msra.mxu0 %v4332
    %5517 = vmatpush.bf16.msra.mxu0 %v4316
    %5518 = vmatpush.bf16.msra.mxu0 %v4300
    %5519 = vmatpush.bf16.msra.mxu0 %v4284
    %5520 = vmatpush.bf16.msra.mxu0 %v4268
    %5521 = vmatpush.bf16.msra.mxu0 %v4252
    %5522 = vmatpush.bf16.msra.mxu0 %v4236
    %5523 = vmatmul.bf16.gmra.mxu0 %v2143
    %v5524 = vpop.f32.mrf.mxu0
    %v5525 = vadd.f32 %v2668, %v5524
    %v5526 = vpop.f32.mrf.mxu0
    %5527 = vdwg.mxu0
    %5528 = vmatpush.bf16.msra.mxu0 %v4476
    %5529 = vmatpush.bf16.msra.mxu0 %v4460
    %5530 = vmatpush.bf16.msra.mxu0 %v4444
    %5531 = vmatpush.bf16.msra.mxu0 %v4428
    %5532 = vmatpush.bf16.msra.mxu0 %v4412
    %5533 = vmatpush.bf16.msra.mxu0 %v4396
    %5534 = vmatpush.bf16.msra.mxu0 %v4380
    %5535 = vmatpush.bf16.msra.mxu0 %v4364
    %5536 = vmatmul.bf16.gmra.mxu0 %v2144
    %v5537 = vpop.f32.mrf.mxu0
    %v5538 = vadd.f32 %v5525, %v5537
    %v5539 = vpop.f32.mrf.mxu0
    %5540 = vdwg.mxu0
    %5541 = vmatpush.bf16.msra.mxu0 %v4604
    %5542 = vmatpush.bf16.msra.mxu0 %v4588
    %5543 = vmatpush.bf16.msra.mxu0 %v4572
    %5544 = vmatpush.bf16.msra.mxu0 %v4556
    %5545 = vmatpush.bf16.msra.mxu0 %v4540
    %5546 = vmatpush.bf16.msra.mxu0 %v4524
    %5547 = vmatpush.bf16.msra.mxu0 %v4508
    %5548 = vmatpush.bf16.msra.mxu0 %v4492
    %5549 = vmatmul.bf16.gmra.mxu0 %v2145
    %v5550 = vpop.f32.mrf.mxu0
    %v5551 = vadd.f32 %v5538, %v5550
    %v5552 = vpop.f32.mrf.mxu0
    %5553 = vdwg.mxu0
    %5554 = vmatpush.bf16.msra.mxu0 %v4732
    %5555 = vmatpush.bf16.msra.mxu0 %v4716
    %5556 = vmatpush.bf16.msra.mxu0 %v4700
    %5557 = vmatpush.bf16.msra.mxu0 %v4684
    %5558 = vmatpush.bf16.msra.mxu0 %v4668
    %5559 = vmatpush.bf16.msra.mxu0 %v4652
    %5560 = vmatpush.bf16.msra.mxu0 %v4636
    %5561 = vmatpush.bf16.msra.mxu0 %v4620
    %5562 = vmatmul.bf16.gmra.mxu0 %v2146
    %v5563 = vpop.f32.mrf.mxu0
    %v5564 = vadd.f32 %v5551, %v5563
    %v5565 = vpop.f32.mrf.mxu0
    %5566 = vdwg.mxu0
    %5567 = vmatpush.bf16.msra.mxu0 %v4349
    %5568 = vmatpush.bf16.msra.mxu0 %v4333
    %5569 = vmatpush.bf16.msra.mxu0 %v4317
    %5570 = vmatpush.bf16.msra.mxu0 %v4301
    %5571 = vmatpush.bf16.msra.mxu0 %v4285
    %5572 = vmatpush.bf16.msra.mxu0 %v4269
    %5573 = vmatpush.bf16.msra.mxu0 %v4253
    %5574 = vmatpush.bf16.msra.mxu0 %v4237
    %5575 = vmatmul.bf16.gmra.mxu0 %v2143
    %v5576 = vpop.f32.mrf.mxu0
    %v5577 = vadd.f32 %v2669, %v5576
    %v5578 = vpop.f32.mrf.mxu0
    %5579 = vdwg.mxu0
    %5580 = vmatpush.bf16.msra.mxu0 %v4477
    %5581 = vmatpush.bf16.msra.mxu0 %v4461
    %5582 = vmatpush.bf16.msra.mxu0 %v4445
    %5583 = vmatpush.bf16.msra.mxu0 %v4429
    %5584 = vmatpush.bf16.msra.mxu0 %v4413
    %5585 = vmatpush.bf16.msra.mxu0 %v4397
    %5586 = vmatpush.bf16.msra.mxu0 %v4381
    %5587 = vmatpush.bf16.msra.mxu0 %v4365
    %5588 = vmatmul.bf16.gmra.mxu0 %v2144
    %v5589 = vpop.f32.mrf.mxu0
    %v5590 = vadd.f32 %v5577, %v5589
    %v5591 = vpop.f32.mrf.mxu0
    %5592 = vdwg.mxu0
    %5593 = vmatpush.bf16.msra.mxu0 %v4605
    %5594 = vmatpush.bf16.msra.mxu0 %v4589
    %5595 = vmatpush.bf16.msra.mxu0 %v4573
    %5596 = vmatpush.bf16.msra.mxu0 %v4557
    %5597 = vmatpush.bf16.msra.mxu0 %v4541
    %5598 = vmatpush.bf16.msra.mxu0 %v4525
    %5599 = vmatpush.bf16.msra.mxu0 %v4509
    %5600 = vmatpush.bf16.msra.mxu0 %v4493
    %5601 = vmatmul.bf16.gmra.mxu0 %v2145
    %v5602 = vpop.f32.mrf.mxu0
    %v5603 = vadd.f32 %v5590, %v5602
    %v5604 = vpop.f32.mrf.mxu0
    %5605 = vdwg.mxu0
    %5606 = vmatpush.bf16.msra.mxu0 %v4733
    %5607 = vmatpush.bf16.msra.mxu0 %v4717
    %5608 = vmatpush.bf16.msra.mxu0 %v4701
    %5609 = vmatpush.bf16.msra.mxu0 %v4685
    %5610 = vmatpush.bf16.msra.mxu0 %v4669
    %5611 = vmatpush.bf16.msra.mxu0 %v4653
    %5612 = vmatpush.bf16.msra.mxu0 %v4637
    %5613 = vmatpush.bf16.msra.mxu0 %v4621
    %5614 = vmatmul.bf16.gmra.mxu0 %v2146
    %v5615 = vpop.f32.mrf.mxu0
    %v5616 = vadd.f32 %v5603, %v5615
    %v5617 = vpop.f32.mrf.mxu0
    %5618 = vdwg.mxu0
    %5619 = vmatpush.bf16.msra.mxu0 %v4350
    %5620 = vmatpush.bf16.msra.mxu0 %v4334
    %5621 = vmatpush.bf16.msra.mxu0 %v4318
    %5622 = vmatpush.bf16.msra.mxu0 %v4302
    %5623 = vmatpush.bf16.msra.mxu0 %v4286
    %5624 = vmatpush.bf16.msra.mxu0 %v4270
    %5625 = vmatpush.bf16.msra.mxu0 %v4254
    %5626 = vmatpush.bf16.msra.mxu0 %v4238
    %5627 = vmatmul.bf16.gmra.mxu0 %v2143
    %v5628 = vpop.f32.mrf.mxu0
    %v5629 = vadd.f32 %v2670, %v5628
    %v5630 = vpop.f32.mrf.mxu0
    %5631 = vdwg.mxu0
    %5632 = vmatpush.bf16.msra.mxu0 %v4478
    %5633 = vmatpush.bf16.msra.mxu0 %v4462
    %5634 = vmatpush.bf16.msra.mxu0 %v4446
    %5635 = vmatpush.bf16.msra.mxu0 %v4430
    %5636 = vmatpush.bf16.msra.mxu0 %v4414
    %5637 = vmatpush.bf16.msra.mxu0 %v4398
    %5638 = vmatpush.bf16.msra.mxu0 %v4382
    %5639 = vmatpush.bf16.msra.mxu0 %v4366
    %5640 = vmatmul.bf16.gmra.mxu0 %v2144
    %v5641 = vpop.f32.mrf.mxu0
    %v5642 = vadd.f32 %v5629, %v5641
    %v5643 = vpop.f32.mrf.mxu0
    %5644 = vdwg.mxu0
    %5645 = vmatpush.bf16.msra.mxu0 %v4606
    %5646 = vmatpush.bf16.msra.mxu0 %v4590
    %5647 = vmatpush.bf16.msra.mxu0 %v4574
    %5648 = vmatpush.bf16.msra.mxu0 %v4558
    %5649 = vmatpush.bf16.msra.mxu0 %v4542
    %5650 = vmatpush.bf16.msra.mxu0 %v4526
    %5651 = vmatpush.bf16.msra.mxu0 %v4510
    %5652 = vmatpush.bf16.msra.mxu0 %v4494
    %5653 = vmatmul.bf16.gmra.mxu0 %v2145
    %v5654 = vpop.f32.mrf.mxu0
    %v5655 = vadd.f32 %v5642, %v5654
    %v5656 = vpop.f32.mrf.mxu0
    %5657 = vdwg.mxu0
    %5658 = vmatpush.bf16.msra.mxu0 %v4734
    %5659 = vmatpush.bf16.msra.mxu0 %v4718
    %5660 = vmatpush.bf16.msra.mxu0 %v4702
    %5661 = vmatpush.bf16.msra.mxu0 %v4686
    %5662 = vmatpush.bf16.msra.mxu0 %v4670
    %5663 = vmatpush.bf16.msra.mxu0 %v4654
    %5664 = vmatpush.bf16.msra.mxu0 %v4638
    %5665 = vmatpush.bf16.msra.mxu0 %v4622
    %5666 = vmatmul.bf16.gmra.mxu0 %v2146
    %v5667 = vpop.f32.mrf.mxu0
    %v5668 = vadd.f32 %v5655, %v5667
    %v5669 = vpop.f32.mrf.mxu0
    %5670 = vdwg.mxu0
    %5671 = vmatpush.bf16.msra.mxu0 %v4351
    %5672 = vmatpush.bf16.msra.mxu0 %v4335
    %5673 = vmatpush.bf16.msra.mxu0 %v4319
    %5674 = vmatpush.bf16.msra.mxu0 %v4303
    %5675 = vmatpush.bf16.msra.mxu0 %v4287
    %5676 = vmatpush.bf16.msra.mxu0 %v4271
    %5677 = vmatpush.bf16.msra.mxu0 %v4255
    %5678 = vmatpush.bf16.msra.mxu0 %v4239
    %5679 = vmatmul.bf16.gmra.mxu0 %v2143
    %v5680 = vpop.f32.mrf.mxu0
    %v5681 = vadd.f32 %v2671, %v5680
    %v5682 = vpop.f32.mrf.mxu0
    %5683 = vdwg.mxu0
    %5684 = vmatpush.bf16.msra.mxu0 %v4479
    %5685 = vmatpush.bf16.msra.mxu0 %v4463
    %5686 = vmatpush.bf16.msra.mxu0 %v4447
    %5687 = vmatpush.bf16.msra.mxu0 %v4431
    %5688 = vmatpush.bf16.msra.mxu0 %v4415
    %5689 = vmatpush.bf16.msra.mxu0 %v4399
    %5690 = vmatpush.bf16.msra.mxu0 %v4383
    %5691 = vmatpush.bf16.msra.mxu0 %v4367
    %5692 = vmatmul.bf16.gmra.mxu0 %v2144
    %v5693 = vpop.f32.mrf.mxu0
    %v5694 = vadd.f32 %v5681, %v5693
    %v5695 = vpop.f32.mrf.mxu0
    %5696 = vdwg.mxu0
    %5697 = vmatpush.bf16.msra.mxu0 %v4607
    %5698 = vmatpush.bf16.msra.mxu0 %v4591
    %5699 = vmatpush.bf16.msra.mxu0 %v4575
    %5700 = vmatpush.bf16.msra.mxu0 %v4559
    %5701 = vmatpush.bf16.msra.mxu0 %v4543
    %5702 = vmatpush.bf16.msra.mxu0 %v4527
    %5703 = vmatpush.bf16.msra.mxu0 %v4511
    %5704 = vmatpush.bf16.msra.mxu0 %v4495
    %5705 = vmatmul.bf16.gmra.mxu0 %v2145
    %v5706 = vpop.f32.mrf.mxu0
    %v5707 = vadd.f32 %v5694, %v5706
    %v5708 = vpop.f32.mrf.mxu0
    %5709 = vdwg.mxu0
    %5710 = vmatpush.bf16.msra.mxu0 %v4735
    %5711 = vmatpush.bf16.msra.mxu0 %v4719
    %5712 = vmatpush.bf16.msra.mxu0 %v4703
    %5713 = vmatpush.bf16.msra.mxu0 %v4687
    %5714 = vmatpush.bf16.msra.mxu0 %v4671
    %5715 = vmatpush.bf16.msra.mxu0 %v4655
    %5716 = vmatpush.bf16.msra.mxu0 %v4639
    %5717 = vmatpush.bf16.msra.mxu0 %v4623
    %5718 = vmatmul.bf16.gmra.mxu0 %v2146
    %v5719 = vpop.f32.mrf.mxu0
    %v5720 = vadd.f32 %v5707, %v5719
    %v5721 = vpop.f32.mrf.mxu0
    %5722 = vdwg.mxu0
    %5723 = vmatpush.bf16.msra.mxu0 %v4352
    %5724 = vmatpush.bf16.msra.mxu0 %v4336
    %5725 = vmatpush.bf16.msra.mxu0 %v4320
    %5726 = vmatpush.bf16.msra.mxu0 %v4304
    %5727 = vmatpush.bf16.msra.mxu0 %v4288
    %5728 = vmatpush.bf16.msra.mxu0 %v4272
    %5729 = vmatpush.bf16.msra.mxu0 %v4256
    %5730 = vmatpush.bf16.msra.mxu0 %v4240
    %5731 = vmatmul.bf16.gmra.mxu0 %v2143
    %v5732 = vpop.f32.mrf.mxu0
    %v5733 = vadd.f32 %v2672, %v5732
    %v5734 = vpop.f32.mrf.mxu0
    %5735 = vdwg.mxu0
    %5736 = vmatpush.bf16.msra.mxu0 %v4480
    %5737 = vmatpush.bf16.msra.mxu0 %v4464
    %5738 = vmatpush.bf16.msra.mxu0 %v4448
    %5739 = vmatpush.bf16.msra.mxu0 %v4432
    %5740 = vmatpush.bf16.msra.mxu0 %v4416
    %5741 = vmatpush.bf16.msra.mxu0 %v4400
    %5742 = vmatpush.bf16.msra.mxu0 %v4384
    %5743 = vmatpush.bf16.msra.mxu0 %v4368
    %5744 = vmatmul.bf16.gmra.mxu0 %v2144
    %v5745 = vpop.f32.mrf.mxu0
    %v5746 = vadd.f32 %v5733, %v5745
    %v5747 = vpop.f32.mrf.mxu0
    %5748 = vdwg.mxu0
    %5749 = vmatpush.bf16.msra.mxu0 %v4608
    %5750 = vmatpush.bf16.msra.mxu0 %v4592
    %5751 = vmatpush.bf16.msra.mxu0 %v4576
    %5752 = vmatpush.bf16.msra.mxu0 %v4560
    %5753 = vmatpush.bf16.msra.mxu0 %v4544
    %5754 = vmatpush.bf16.msra.mxu0 %v4528
    %5755 = vmatpush.bf16.msra.mxu0 %v4512
    %5756 = vmatpush.bf16.msra.mxu0 %v4496
    %5757 = vmatmul.bf16.gmra.mxu0 %v2145
    %v5758 = vpop.f32.mrf.mxu0
    %v5759 = vadd.f32 %v5746, %v5758
    %v5760 = vpop.f32.mrf.mxu0
    %5761 = vdwg.mxu0
    %5762 = vmatpush.bf16.msra.mxu0 %v4736
    %5763 = vmatpush.bf16.msra.mxu0 %v4720
    %5764 = vmatpush.bf16.msra.mxu0 %v4704
    %5765 = vmatpush.bf16.msra.mxu0 %v4688
    %5766 = vmatpush.bf16.msra.mxu0 %v4672
    %5767 = vmatpush.bf16.msra.mxu0 %v4656
    %5768 = vmatpush.bf16.msra.mxu0 %v4640
    %5769 = vmatpush.bf16.msra.mxu0 %v4624
    %5770 = vmatmul.bf16.gmra.mxu0 %v2146
    %v5771 = vpop.f32.mrf.mxu0
    %v5772 = vadd.f32 %v5759, %v5771
    %v5773 = vpop.f32.mrf.mxu0
    %5774 = vdwg.mxu0
    %5775 = vmatpush.bf16.msra.mxu0 %v4353
    %5776 = vmatpush.bf16.msra.mxu0 %v4337
    %5777 = vmatpush.bf16.msra.mxu0 %v4321
    %5778 = vmatpush.bf16.msra.mxu0 %v4305
    %5779 = vmatpush.bf16.msra.mxu0 %v4289
    %5780 = vmatpush.bf16.msra.mxu0 %v4273
    %5781 = vmatpush.bf16.msra.mxu0 %v4257
    %5782 = vmatpush.bf16.msra.mxu0 %v4241
    %5783 = vmatmul.bf16.gmra.mxu0 %v2143
    %v5784 = vpop.f32.mrf.mxu0
    %v5785 = vadd.f32 %v2673, %v5784
    %v5786 = vpop.f32.mrf.mxu0
    %5787 = vdwg.mxu0
    %5788 = vmatpush.bf16.msra.mxu0 %v4481
    %5789 = vmatpush.bf16.msra.mxu0 %v4465
    %5790 = vmatpush.bf16.msra.mxu0 %v4449
    %5791 = vmatpush.bf16.msra.mxu0 %v4433
    %5792 = vmatpush.bf16.msra.mxu0 %v4417
    %5793 = vmatpush.bf16.msra.mxu0 %v4401
    %5794 = vmatpush.bf16.msra.mxu0 %v4385
    %5795 = vmatpush.bf16.msra.mxu0 %v4369
    %5796 = vmatmul.bf16.gmra.mxu0 %v2144
    %v5797 = vpop.f32.mrf.mxu0
    %v5798 = vadd.f32 %v5785, %v5797
    %v5799 = vpop.f32.mrf.mxu0
    %5800 = vdwg.mxu0
    %5801 = vmatpush.bf16.msra.mxu0 %v4609
    %5802 = vmatpush.bf16.msra.mxu0 %v4593
    %5803 = vmatpush.bf16.msra.mxu0 %v4577
    %5804 = vmatpush.bf16.msra.mxu0 %v4561
    %5805 = vmatpush.bf16.msra.mxu0 %v4545
    %5806 = vmatpush.bf16.msra.mxu0 %v4529
    %5807 = vmatpush.bf16.msra.mxu0 %v4513
    %5808 = vmatpush.bf16.msra.mxu0 %v4497
    %5809 = vmatmul.bf16.gmra.mxu0 %v2145
    %v5810 = vpop.f32.mrf.mxu0
    %v5811 = vadd.f32 %v5798, %v5810
    %v5812 = vpop.f32.mrf.mxu0
    %5813 = vdwg.mxu0
    %5814 = vmatpush.bf16.msra.mxu0 %v4737
    %5815 = vmatpush.bf16.msra.mxu0 %v4721
    %5816 = vmatpush.bf16.msra.mxu0 %v4705
    %5817 = vmatpush.bf16.msra.mxu0 %v4689
    %5818 = vmatpush.bf16.msra.mxu0 %v4673
    %5819 = vmatpush.bf16.msra.mxu0 %v4657
    %5820 = vmatpush.bf16.msra.mxu0 %v4641
    %5821 = vmatpush.bf16.msra.mxu0 %v4625
    %5822 = vmatmul.bf16.gmra.mxu0 %v2146
    %v5823 = vpop.f32.mrf.mxu0
    %v5824 = vadd.f32 %v5811, %v5823
    %v5825 = vpop.f32.mrf.mxu0
    %5826 = vdwg.mxu0
    %5827 = vmatpush.bf16.msra.mxu0 %v4354
    %5828 = vmatpush.bf16.msra.mxu0 %v4338
    %5829 = vmatpush.bf16.msra.mxu0 %v4322
    %5830 = vmatpush.bf16.msra.mxu0 %v4306
    %5831 = vmatpush.bf16.msra.mxu0 %v4290
    %5832 = vmatpush.bf16.msra.mxu0 %v4274
    %5833 = vmatpush.bf16.msra.mxu0 %v4258
    %5834 = vmatpush.bf16.msra.mxu0 %v4242
    %5835 = vmatmul.bf16.gmra.mxu0 %v2143
    %v5836 = vpop.f32.mrf.mxu0
    %v5837 = vadd.f32 %v2674, %v5836
    %v5838 = vpop.f32.mrf.mxu0
    %5839 = vdwg.mxu0
    %5840 = vmatpush.bf16.msra.mxu0 %v4482
    %5841 = vmatpush.bf16.msra.mxu0 %v4466
    %5842 = vmatpush.bf16.msra.mxu0 %v4450
    %5843 = vmatpush.bf16.msra.mxu0 %v4434
    %5844 = vmatpush.bf16.msra.mxu0 %v4418
    %5845 = vmatpush.bf16.msra.mxu0 %v4402
    %5846 = vmatpush.bf16.msra.mxu0 %v4386
    %5847 = vmatpush.bf16.msra.mxu0 %v4370
    %5848 = vmatmul.bf16.gmra.mxu0 %v2144
    %v5849 = vpop.f32.mrf.mxu0
    %v5850 = vadd.f32 %v5837, %v5849
    %v5851 = vpop.f32.mrf.mxu0
    %5852 = vdwg.mxu0
    %5853 = vmatpush.bf16.msra.mxu0 %v4610
    %5854 = vmatpush.bf16.msra.mxu0 %v4594
    %5855 = vmatpush.bf16.msra.mxu0 %v4578
    %5856 = vmatpush.bf16.msra.mxu0 %v4562
    %5857 = vmatpush.bf16.msra.mxu0 %v4546
    %5858 = vmatpush.bf16.msra.mxu0 %v4530
    %5859 = vmatpush.bf16.msra.mxu0 %v4514
    %5860 = vmatpush.bf16.msra.mxu0 %v4498
    %5861 = vmatmul.bf16.gmra.mxu0 %v2145
    %v5862 = vpop.f32.mrf.mxu0
    %v5863 = vadd.f32 %v5850, %v5862
    %v5864 = vpop.f32.mrf.mxu0
    %5865 = vdwg.mxu0
    %5866 = vmatpush.bf16.msra.mxu0 %v4738
    %5867 = vmatpush.bf16.msra.mxu0 %v4722
    %5868 = vmatpush.bf16.msra.mxu0 %v4706
    %5869 = vmatpush.bf16.msra.mxu0 %v4690
    %5870 = vmatpush.bf16.msra.mxu0 %v4674
    %5871 = vmatpush.bf16.msra.mxu0 %v4658
    %5872 = vmatpush.bf16.msra.mxu0 %v4642
    %5873 = vmatpush.bf16.msra.mxu0 %v4626
    %5874 = vmatmul.bf16.gmra.mxu0 %v2146
    %v5875 = vpop.f32.mrf.mxu0
    %v5876 = vadd.f32 %v5863, %v5875
    %v5877 = vpop.f32.mrf.mxu0
    %5878 = vdwg.mxu0
    %5879 = vmatpush.bf16.msra.mxu0 %v4355
    %5880 = vmatpush.bf16.msra.mxu0 %v4339
    %5881 = vmatpush.bf16.msra.mxu0 %v4323
    %5882 = vmatpush.bf16.msra.mxu0 %v4307
    %5883 = vmatpush.bf16.msra.mxu0 %v4291
    %5884 = vmatpush.bf16.msra.mxu0 %v4275
    %5885 = vmatpush.bf16.msra.mxu0 %v4259
    %5886 = vmatpush.bf16.msra.mxu0 %v4243
    %5887 = vmatmul.bf16.gmra.mxu0 %v2143
    %v5888 = vpop.f32.mrf.mxu0
    %v5889 = vadd.f32 %v2675, %v5888
    %v5890 = vpop.f32.mrf.mxu0
    %5891 = vdwg.mxu0
    %5892 = vmatpush.bf16.msra.mxu0 %v4483
    %5893 = vmatpush.bf16.msra.mxu0 %v4467
    %5894 = vmatpush.bf16.msra.mxu0 %v4451
    %5895 = vmatpush.bf16.msra.mxu0 %v4435
    %5896 = vmatpush.bf16.msra.mxu0 %v4419
    %5897 = vmatpush.bf16.msra.mxu0 %v4403
    %5898 = vmatpush.bf16.msra.mxu0 %v4387
    %5899 = vmatpush.bf16.msra.mxu0 %v4371
    %5900 = vmatmul.bf16.gmra.mxu0 %v2144
    %v5901 = vpop.f32.mrf.mxu0
    %v5902 = vadd.f32 %v5889, %v5901
    %v5903 = vpop.f32.mrf.mxu0
    %5904 = vdwg.mxu0
    %5905 = vmatpush.bf16.msra.mxu0 %v4611
    %5906 = vmatpush.bf16.msra.mxu0 %v4595
    %5907 = vmatpush.bf16.msra.mxu0 %v4579
    %5908 = vmatpush.bf16.msra.mxu0 %v4563
    %5909 = vmatpush.bf16.msra.mxu0 %v4547
    %5910 = vmatpush.bf16.msra.mxu0 %v4531
    %5911 = vmatpush.bf16.msra.mxu0 %v4515
    %5912 = vmatpush.bf16.msra.mxu0 %v4499
    %5913 = vmatmul.bf16.gmra.mxu0 %v2145
    %v5914 = vpop.f32.mrf.mxu0
    %v5915 = vadd.f32 %v5902, %v5914
    %v5916 = vpop.f32.mrf.mxu0
    %5917 = vdwg.mxu0
    %5918 = vmatpush.bf16.msra.mxu0 %v4739
    %5919 = vmatpush.bf16.msra.mxu0 %v4723
    %5920 = vmatpush.bf16.msra.mxu0 %v4707
    %5921 = vmatpush.bf16.msra.mxu0 %v4691
    %5922 = vmatpush.bf16.msra.mxu0 %v4675
    %5923 = vmatpush.bf16.msra.mxu0 %v4659
    %5924 = vmatpush.bf16.msra.mxu0 %v4643
    %5925 = vmatpush.bf16.msra.mxu0 %v4627
    %5926 = vmatmul.bf16.gmra.mxu0 %v2146
    %v5927 = vpop.f32.mrf.mxu0
    %v5928 = vadd.f32 %v5915, %v5927
    %v5929 = vpop.f32.mrf.mxu0
    %5930 = vdwg.mxu0
    %5931 = vmatpush.bf16.msra.mxu0 %v4356
    %5932 = vmatpush.bf16.msra.mxu0 %v4340
    %5933 = vmatpush.bf16.msra.mxu0 %v4324
    %5934 = vmatpush.bf16.msra.mxu0 %v4308
    %5935 = vmatpush.bf16.msra.mxu0 %v4292
    %5936 = vmatpush.bf16.msra.mxu0 %v4276
    %5937 = vmatpush.bf16.msra.mxu0 %v4260
    %5938 = vmatpush.bf16.msra.mxu0 %v4244
    %5939 = vmatmul.bf16.gmra.mxu0 %v2143
    %v5940 = vpop.f32.mrf.mxu0
    %v5941 = vadd.f32 %v2676, %v5940
    %v5942 = vpop.f32.mrf.mxu0
    %5943 = vdwg.mxu0
    %5944 = vmatpush.bf16.msra.mxu0 %v4484
    %5945 = vmatpush.bf16.msra.mxu0 %v4468
    %5946 = vmatpush.bf16.msra.mxu0 %v4452
    %5947 = vmatpush.bf16.msra.mxu0 %v4436
    %5948 = vmatpush.bf16.msra.mxu0 %v4420
    %5949 = vmatpush.bf16.msra.mxu0 %v4404
    %5950 = vmatpush.bf16.msra.mxu0 %v4388
    %5951 = vmatpush.bf16.msra.mxu0 %v4372
    %5952 = vmatmul.bf16.gmra.mxu0 %v2144
    %v5953 = vpop.f32.mrf.mxu0
    %v5954 = vadd.f32 %v5941, %v5953
    %v5955 = vpop.f32.mrf.mxu0
    %5956 = vdwg.mxu0
    %5957 = vmatpush.bf16.msra.mxu0 %v4612
    %5958 = vmatpush.bf16.msra.mxu0 %v4596
    %5959 = vmatpush.bf16.msra.mxu0 %v4580
    %5960 = vmatpush.bf16.msra.mxu0 %v4564
    %5961 = vmatpush.bf16.msra.mxu0 %v4548
    %5962 = vmatpush.bf16.msra.mxu0 %v4532
    %5963 = vmatpush.bf16.msra.mxu0 %v4516
    %5964 = vmatpush.bf16.msra.mxu0 %v4500
    %5965 = vmatmul.bf16.gmra.mxu0 %v2145
    %v5966 = vpop.f32.mrf.mxu0
    %v5967 = vadd.f32 %v5954, %v5966
    %v5968 = vpop.f32.mrf.mxu0
    %5969 = vdwg.mxu0
    %5970 = vmatpush.bf16.msra.mxu0 %v4740
    %5971 = vmatpush.bf16.msra.mxu0 %v4724
    %5972 = vmatpush.bf16.msra.mxu0 %v4708
    %5973 = vmatpush.bf16.msra.mxu0 %v4692
    %5974 = vmatpush.bf16.msra.mxu0 %v4676
    %5975 = vmatpush.bf16.msra.mxu0 %v4660
    %5976 = vmatpush.bf16.msra.mxu0 %v4644
    %5977 = vmatpush.bf16.msra.mxu0 %v4628
    %5978 = vmatmul.bf16.gmra.mxu0 %v2146
    %v5979 = vpop.f32.mrf.mxu0
    %v5980 = vadd.f32 %v5967, %v5979
    %v5981 = vpop.f32.mrf.mxu0
    %5982 = vdwg.mxu0
    %5983 = vmatpush.bf16.msra.mxu0 %v4357
    %5984 = vmatpush.bf16.msra.mxu0 %v4341
    %5985 = vmatpush.bf16.msra.mxu0 %v4325
    %5986 = vmatpush.bf16.msra.mxu0 %v4309
    %5987 = vmatpush.bf16.msra.mxu0 %v4293
    %5988 = vmatpush.bf16.msra.mxu0 %v4277
    %5989 = vmatpush.bf16.msra.mxu0 %v4261
    %5990 = vmatpush.bf16.msra.mxu0 %v4245
    %5991 = vmatmul.bf16.gmra.mxu0 %v2143
    %v5992 = vpop.f32.mrf.mxu0
    %v5993 = vadd.f32 %v2677, %v5992
    %v5994 = vpop.f32.mrf.mxu0
    %5995 = vdwg.mxu0
    %5996 = vmatpush.bf16.msra.mxu0 %v4485
    %5997 = vmatpush.bf16.msra.mxu0 %v4469
    %5998 = vmatpush.bf16.msra.mxu0 %v4453
    %5999 = vmatpush.bf16.msra.mxu0 %v4437
    %6000 = vmatpush.bf16.msra.mxu0 %v4421
    %6001 = vmatpush.bf16.msra.mxu0 %v4405
    %6002 = vmatpush.bf16.msra.mxu0 %v4389
    %6003 = vmatpush.bf16.msra.mxu0 %v4373
    %6004 = vmatmul.bf16.gmra.mxu0 %v2144
    %v6005 = vpop.f32.mrf.mxu0
    %v6006 = vadd.f32 %v5993, %v6005
    %v6007 = vpop.f32.mrf.mxu0
    %6008 = vdwg.mxu0
    %6009 = vmatpush.bf16.msra.mxu0 %v4613
    %6010 = vmatpush.bf16.msra.mxu0 %v4597
    %6011 = vmatpush.bf16.msra.mxu0 %v4581
    %6012 = vmatpush.bf16.msra.mxu0 %v4565
    %6013 = vmatpush.bf16.msra.mxu0 %v4549
    %6014 = vmatpush.bf16.msra.mxu0 %v4533
    %6015 = vmatpush.bf16.msra.mxu0 %v4517
    %6016 = vmatpush.bf16.msra.mxu0 %v4501
    %6017 = vmatmul.bf16.gmra.mxu0 %v2145
    %v6018 = vpop.f32.mrf.mxu0
    %v6019 = vadd.f32 %v6006, %v6018
    %v6020 = vpop.f32.mrf.mxu0
    %6021 = vdwg.mxu0
    %6022 = vmatpush.bf16.msra.mxu0 %v4741
    %6023 = vmatpush.bf16.msra.mxu0 %v4725
    %6024 = vmatpush.bf16.msra.mxu0 %v4709
    %6025 = vmatpush.bf16.msra.mxu0 %v4693
    %6026 = vmatpush.bf16.msra.mxu0 %v4677
    %6027 = vmatpush.bf16.msra.mxu0 %v4661
    %6028 = vmatpush.bf16.msra.mxu0 %v4645
    %6029 = vmatpush.bf16.msra.mxu0 %v4629
    %6030 = vmatmul.bf16.gmra.mxu0 %v2146
    %v6031 = vpop.f32.mrf.mxu0
    %v6032 = vadd.f32 %v6019, %v6031
    %v6033 = vpop.f32.mrf.mxu0
    %6034 = vdwg.mxu0
    %6035 = vmatpush.bf16.msra.mxu0 %v4358
    %6036 = vmatpush.bf16.msra.mxu0 %v4342
    %6037 = vmatpush.bf16.msra.mxu0 %v4326
    %6038 = vmatpush.bf16.msra.mxu0 %v4310
    %6039 = vmatpush.bf16.msra.mxu0 %v4294
    %6040 = vmatpush.bf16.msra.mxu0 %v4278
    %6041 = vmatpush.bf16.msra.mxu0 %v4262
    %6042 = vmatpush.bf16.msra.mxu0 %v4246
    %6043 = vmatmul.bf16.gmra.mxu0 %v2143
    %v6044 = vpop.f32.mrf.mxu0
    %v6045 = vadd.f32 %v2678, %v6044
    %v6046 = vpop.f32.mrf.mxu0
    %6047 = vdwg.mxu0
    %6048 = vmatpush.bf16.msra.mxu0 %v4486
    %6049 = vmatpush.bf16.msra.mxu0 %v4470
    %6050 = vmatpush.bf16.msra.mxu0 %v4454
    %6051 = vmatpush.bf16.msra.mxu0 %v4438
    %6052 = vmatpush.bf16.msra.mxu0 %v4422
    %6053 = vmatpush.bf16.msra.mxu0 %v4406
    %6054 = vmatpush.bf16.msra.mxu0 %v4390
    %6055 = vmatpush.bf16.msra.mxu0 %v4374
    %6056 = vmatmul.bf16.gmra.mxu0 %v2144
    %v6057 = vpop.f32.mrf.mxu0
    %v6058 = vadd.f32 %v6045, %v6057
    %v6059 = vpop.f32.mrf.mxu0
    %6060 = vdwg.mxu0
    %6061 = vmatpush.bf16.msra.mxu0 %v4614
    %6062 = vmatpush.bf16.msra.mxu0 %v4598
    %6063 = vmatpush.bf16.msra.mxu0 %v4582
    %6064 = vmatpush.bf16.msra.mxu0 %v4566
    %6065 = vmatpush.bf16.msra.mxu0 %v4550
    %6066 = vmatpush.bf16.msra.mxu0 %v4534
    %6067 = vmatpush.bf16.msra.mxu0 %v4518
    %6068 = vmatpush.bf16.msra.mxu0 %v4502
    %6069 = vmatmul.bf16.gmra.mxu0 %v2145
    %v6070 = vpop.f32.mrf.mxu0
    %v6071 = vadd.f32 %v6058, %v6070
    %v6072 = vpop.f32.mrf.mxu0
    %6073 = vdwg.mxu0
    %6074 = vmatpush.bf16.msra.mxu0 %v4742
    %6075 = vmatpush.bf16.msra.mxu0 %v4726
    %6076 = vmatpush.bf16.msra.mxu0 %v4710
    %6077 = vmatpush.bf16.msra.mxu0 %v4694
    %6078 = vmatpush.bf16.msra.mxu0 %v4678
    %6079 = vmatpush.bf16.msra.mxu0 %v4662
    %6080 = vmatpush.bf16.msra.mxu0 %v4646
    %6081 = vmatpush.bf16.msra.mxu0 %v4630
    %6082 = vmatmul.bf16.gmra.mxu0 %v2146
    %v6083 = vpop.f32.mrf.mxu0
    %v6084 = vadd.f32 %v6071, %v6083
    %v6085 = vpop.f32.mrf.mxu0
    %6086 = vdwg.mxu0
    %vm6087 = vcmp.gt.f32.partialorder %v5304, 0.0
    %vm6088 = vcmp.gt.f32.partialorder %v5356, 0.0
    %vm6089 = vcmp.gt.f32.partialorder %v5408, 0.0
    %vm6090 = vcmp.gt.f32.partialorder %v5460, 0.0
    %vm6091 = vcmp.gt.f32.partialorder %v5512, 0.0
    %vm6092 = vcmp.gt.f32.partialorder %v5564, 0.0
    %vm6093 = vcmp.gt.f32.partialorder %v5616, 0.0
    %vm6094 = vcmp.gt.f32.partialorder %v5668, 0.0
    %vm6095 = vcmp.gt.f32.partialorder %v5720, 0.0
    %vm6096 = vcmp.gt.f32.partialorder %v5772, 0.0
    %vm6097 = vcmp.gt.f32.partialorder %v5824, 0.0
    %vm6098 = vcmp.gt.f32.partialorder %v5876, 0.0
    %vm6099 = vcmp.gt.f32.partialorder %v5928, 0.0
    %vm6100 = vcmp.gt.f32.partialorder %v5980, 0.0
    %vm6101 = vcmp.gt.f32.partialorder %v6032, 0.0
    %vm6102 = vcmp.gt.f32.partialorder %v6084, 0.0
    %v6103 = vmul.f32 %v5304, 0.2
    %v6104 = vmul.f32 %v5356, 0.2
    %v6105 = vmul.f32 %v5408, 0.2
    %v6106 = vmul.f32 %v5460, 0.2
    %v6107 = vmul.f32 %v5512, 0.2
    %v6108 = vmul.f32 %v5564, 0.2
    %v6109 = vmul.f32 %v5616, 0.2
    %v6110 = vmul.f32 %v5668, 0.2
    %v6111 = vmul.f32 %v5720, 0.2
    %v6112 = vmul.f32 %v5772, 0.2
    %v6113 = vmul.f32 %v5824, 0.2
    %v6114 = vmul.f32 %v5876, 0.2
    %v6115 = vmul.f32 %v5928, 0.2
    %v6116 = vmul.f32 %v5980, 0.2
    %v6117 = vmul.f32 %v6032, 0.2
    %v6118 = vmul.f32 %v6084, 0.2
    %v6119 = vsel %vm6087, %v5304, %v6103
    %v6120 = vsel %vm6088, %v5356, %v6104
    %v6121 = vsel %vm6089, %v5408, %v6105
    %v6122 = vsel %vm6090, %v5460, %v6106
    %v6123 = vsel %vm6091, %v5512, %v6107
    %v6124 = vsel %vm6092, %v5564, %v6108
    %v6125 = vsel %vm6093, %v5616, %v6109
    %v6126 = vsel %vm6094, %v5668, %v6110
    %v6127 = vsel %vm6095, %v5720, %v6111
    %v6128 = vsel %vm6096, %v5772, %v6112
    %v6129 = vsel %vm6097, %v5824, %v6113
    %v6130 = vsel %vm6098, %v5876, %v6114
    %v6131 = vsel %vm6099, %v5928, %v6115
    %v6132 = vsel %vm6100, %v5980, %v6116
    %v6133 = vsel %vm6101, %v6032, %v6117
    %v6134 = vsel %vm6102, %v6084, %v6118
    %v6135 = vld [vmem:[#allocation13] sm:$0xff]
    %v6136 = vld [vmem:[#allocation13 + $0x8] sm:$0xff]
    %v6137 = vunpack.c.l.bf16 %v6135
    %v6138 = vunpack.c.h.bf16 %v6135
    %v6139 = vunpack.c.l.bf16 %v6136
    %v6140 = vunpack.c.h.bf16 %v6136
    %v6145 = vperm.slane %v6137, 0
    %v6146 = vperm.slane %v6137, 2
    %v6147 = vperm.slane %v6137, 4
    %v6148 = vperm.slane %v6137, 6
    %v6149 = vperm.slane %v6138, 0
    %v6150 = vperm.slane %v6138, 2
    %v6151 = vperm.slane %v6138, 4
    %v6152 = vperm.slane %v6138, 6
    %v6153 = vperm.slane %v6139, 0
    %v6154 = vperm.slane %v6139, 2
    %v6155 = vperm.slane %v6139, 4
    %v6156 = vperm.slane %v6139, 6
    %v6157 = vperm.slane %v6140, 0
    %v6158 = vperm.slane %v6140, 2
    %v6159 = vperm.slane %v6140, 4
    %v6160 = vperm.slane %v6140, 6
    %v6177 = vperm.slane %v6145, 0
    %v6178 = vperm.slane %v6146, 0
    %v6179 = vperm.slane %v6147, 0
    %v6180 = vperm.slane %v6148, 0
    %v6181 = vperm.slane %v6149, 0
    %v6182 = vperm.slane %v6150, 0
    %v6183 = vperm.slane %v6151, 0
    %v6184 = vperm.slane %v6152, 0
    %v6185 = vperm.slane %v6153, 0
    %v6186 = vperm.slane %v6154, 0
    %v6187 = vperm.slane %v6155, 0
    %v6188 = vperm.slane %v6156, 0
    %v6189 = vperm.slane %v6157, 0
    %v6190 = vperm.slane %v6158, 0
    %v6191 = vperm.slane %v6159, 0
    %v6192 = vperm.slane %v6160, 0
    %v6193 = vmul.f32 %v6119, %v6177
    %v6194 = vmul.f32 %v6120, %v6178
    %v6195 = vmul.f32 %v6121, %v6179
    %v6196 = vmul.f32 %v6122, %v6180
    %v6197 = vmul.f32 %v6123, %v6181
    %v6198 = vmul.f32 %v6124, %v6182
    %v6199 = vmul.f32 %v6125, %v6183
    %v6200 = vmul.f32 %v6126, %v6184
    %v6201 = vmul.f32 %v6127, %v6185
    %v6202 = vmul.f32 %v6128, %v6186
    %v6203 = vmul.f32 %v6129, %v6187
    %v6204 = vmul.f32 %v6130, %v6188
    %v6205 = vmul.f32 %v6131, %v6189
    %v6206 = vmul.f32 %v6132, %v6190
    %v6207 = vmul.f32 %v6133, %v6191
    %v6208 = vmul.f32 %v6134, %v6192
    %v6209 = vadd.f32 %v6193, %v6194
    %v6210 = vadd.f32 %v6209, %v6195
    %v6211 = vadd.f32 %v6210, %v6196
    %v6212 = vadd.f32 %v6211, %v6197
    %v6213 = vadd.f32 %v6212, %v6198
    %v6214 = vadd.f32 %v6213, %v6199
    %v6215 = vadd.f32 %v6214, %v6200
    %v6216 = vadd.f32 %v6215, %v6201
    %v6217 = vadd.f32 %v6216, %v6202
    %v6218 = vadd.f32 %v6217, %v6203
    %v6219 = vadd.f32 %v6218, %v6204
    %v6220 = vadd.f32 %v6219, %v6205
    %v6221 = vadd.f32 %v6220, %v6206
    %v6222 = vadd.f32 %v6221, %v6207
    %v6223 = vadd.f32 %v6222, %v6208
    %6224 = vadd.xlane.f32.xlu0 %v6223
    %v6225 = vpop.xlane.xlu0 %6224
    %v6226 = vld [vmem:[#allocation2] sm:$0x1]
    %v6228 = vperm.slane %v6226, 0
    %v6230 = vadd.f32 %v6225, %v6228
    %v6231 = vxor.u32 %v6230, 2147483648
    %v6232 = vmul.f32 %v6231, 1.442695
    %v6233 = vpow.pop %v6232
    %v6234 = vadd.f32 %v6233, 1.0
    %v6235 = vrcp.pop %v6234
    %v6236 = vmul.f32 %v6234, %v6235
    %v6237 = vsub.f32 1.0, %v6236
    %v6238 = vmul.f32 %v6235, %v6237
    %v6239 = vadd.f32 %v6235, %v6238
    %vm6240 = vweird.f32 %v6234
    %vm6241 = vweird.f32 %v6235
    %vm6242 = vmor %vm6240, %vm6241
    %v6243 = vsel %vm6242, %v6235, %v6239
    %v6244 = vand.u32 2147483647, %v6234
    %vm6245 = vcmp.eq.f32.partialorder %v6244, 8.507059e+37
    %v6246 = vand.u32 %v6234, 2147483648
    %v6247 = vor.u32 1.1754944e-38, %v6246
    %v6248 = vsel %vm6245, %v6247, %v6243
    %v6249 = vmul.f32 1.0, %v6248
    %vm6250 = vcmask 7168
    %6251 = vst.msk [vmem:[%s9] sm:$0xff] %vm6250, %v6249
    // Predicated region
    $region66: #{discrim_net_forward.1} parent=1 // pred_check
      _
    $region67: #{discrim_net_forward.1} parent=1 // pred_check_branch
      %6253 = sbr.rel (0) target = $region69
    $region68: #{discrim_net_forward.1} parent=1 // pred_region
      _
    $region69: #{discrim_net_forward.1} parent=1 // pred_fallthru
      _
    // Predicated region
    $region70: #{discrim_net_forward.1} parent=1 // pred_check
      _
    $region71: #{discrim_net_forward.1} parent=1 // pred_check_branch
      %6255 = sbr.rel (0) target = $region73
    $region72: #{discrim_net_forward.1} parent=1 // pred_region
      _
    $region73: #{discrim_net_forward.1} parent=1 // pred_fallthru
      _
    %6256 = vsyncpa [#allocation4], 1
    %6257 = vsyncpa [#allocation6], 1
    %6258 = vsyncpa [#allocation9], 1
    %6259 = vsyncpa [#allocation12], 1

</llo_original>
